<compile_context>
chip_gen: v7x
topology: tpu7x:2x2x1
jax: 0.10.0
libtpu: 0.0.40
codegen_flags: <defaults>
</compile_context>

<pallas_src>
import jax
import jax.numpy as jnp
from jax import lax
from jax.experimental import pallas as pl
from jax.experimental.pallas import tpu as pltpu


# ---------------------------------------------------------------------------
# Pallas kernel: fused MACBlock (pool + SE attention + 3x3 conv + BN + ReLU)
# ---------------------------------------------------------------------------

def _macblock_kernel(x_ref, w1_ref, b1_ref, w2_ref, b2_ref, wc_ref, shift_ref,
                     o_ref, xs_ref):
    """One batch element per grid step.

    x_ref     : (1, H+2, W+2, C) bf16  -- spatially zero-padded NHWC activations
    w1_ref    : (2C, 2Cr) f32          -- block-diag [cSE1 | cSE2] squeeze weight
    b1_ref    : (1, 2Cr)  f32
    w2_ref    : (2Cr, 2C) f32          -- block-diag [cSE1 | cSE2] excite weight
    b2_ref    : (1, 2C)   f32
    wc_ref    : (9, C, Npad) bf16      -- 3x3 conv weight, BN folded, N zero-padded
    shift_ref : (1, Npad) f32          -- conv_bias*scale + (beta - mean*scale)
    o_ref     : (1, H*W, Npad) f32     -- lane-dense output slab
    xs_ref    : (H+2, W+2, C) f32      -- VMEM scratch (padded block, then scaled)
    """
    C = x_ref.shape[3]
    H = x_ref.shape[1] - 2
    W = x_ref.shape[2] - 2

    # Widen the bf16 block to f32 ONCE into the scratch; all later slicing is
    # plain offset loads on an f32 ref (robust, cheap).
    xs_ref[...] = x_ref[0].astype(jnp.float32)

    # ---- global average / max pool over the (unpadded) interior -------------
    interior = xs_ref[1:H + 1, 1:W + 1, :]                       # (H, W, C)
    avg = jnp.sum(jnp.sum(interior, axis=0), axis=0,
                  keepdims=True) * (1.0 / (H * W))               # (1, C)
    mx = jnp.max(jnp.max(interior, axis=0), axis=0,
                 keepdims=True)                                  # (1, C)

    # ---- cSE1 + cSE2 fused: block-diagonal squeeze/excite, one dot each ------
    pooled = jnp.concatenate([avg, mx], axis=-1)                 # (1, 2C)
    h = jnp.dot(pooled, w1_ref[...],
                preferred_element_type=jnp.float32) + b1_ref[...]
    h = jnp.maximum(h, 0.0)                                      # (1, 2Cr)
    z = jnp.dot(h, w2_ref[...],
                preferred_element_type=jnp.float32) + b2_ref[...]
    s = 1.0 / (1.0 + jnp.exp(-z))                                # sigmoid (EUP exp)
    attn = s[:, :C] + s[:, C:]                                   # (1, C)

    # ---- channel re-scale hoisted out of the tap loop ------------------------
    xs_ref[...] = xs_ref[...] * attn.reshape(1, 1, C)

    # ---- 3x3 conv as 9 tap GEMMs (bf16 MXU operands, f32 accumulation) -------
    # N is padded to a 128-multiple so weight tiles and output stores are
    # lane-dense; accumulation lives in the resident output block.
    for k in range(9):
        di, dj = k // 3, k % 3
        patch = xs_ref[di:di + H, dj:dj + W, :].astype(
            jnp.bfloat16).reshape(H * W, C)
        contrib = jnp.dot(patch, wc_ref[k],
                          preferred_element_type=jnp.float32)
        if k == 0:
            o_ref[0] = contrib
        else:
            o_ref[0] = o_ref[0] + contrib

    # Folded conv-bias + BatchNorm (eval), then ReLU.
    # TODO(synk): train-mode Dropout2d(0.1) omitted (identity in eval mode).
    o_ref[0] = jnp.maximum(o_ref[0] + shift_ref[...], 0.0)


def macblock_forward(x_nchw, params):
    """MACBlock.forward in eval mode. Input/output are NCHW like PyTorch."""
    B, C, H, W = x_nchw.shape
    N = params["wc_hwio"].shape[-1]           # true out_channels
    Npad = params["wc"].shape[-1]             # lane-padded out_channels
    two_c, two_cr = params["w1"].shape

    # NCHW -> NHWC, bf16 cast (halves DMA bytes) and 'SAME' zero padding.
    # TODO(synk): if the surrounding model keeps NHWC activations, the two
    # transposes + host-side pad could be dropped (pad inside the kernel).
    x = jnp.transpose(x_nchw, (0, 2, 3, 1)).astype(jnp.bfloat16)
    x_pad = jnp.pad(x, ((0, 0), (1, 1), (1, 1), (0, 0)))

    const2 = lambda b: (0, 0)
    out = pl.pallas_call(
        _macblock_kernel,
        out_shape=jax.ShapeDtypeStruct((B, H * W, Npad), jnp.float32),
        grid_spec=pltpu.PrefetchScalarGridSpec(
            num_scalar_prefetch=0,
            grid=(B,),
            in_specs=[
                pl.BlockSpec((1, H + 2, W + 2, C), lambda b: (b, 0, 0, 0)),
                pl.BlockSpec((two_c, two_cr), const2),     # fused SE squeeze W
                pl.BlockSpec((1, two_cr), const2),
                pl.BlockSpec((two_cr, two_c), const2),     # fused SE excite W
                pl.BlockSpec((1, two_c), const2),
                pl.BlockSpec((9, C, Npad), lambda b: (0, 0, 0)),  # folded conv w
                pl.BlockSpec((1, Npad), const2),                  # folded shift
            ],
            out_specs=pl.BlockSpec((1, H * W, Npad), lambda b: (b, 0, 0)),
            scratch_shapes=[pltpu.VMEM((H + 2, W + 2, C), jnp.float32)],
        ),
        compiler_params=pltpu.CompilerParams(
            dimension_semantics=("parallel",),
            vmem_limit_bytes=32 * 1024 * 1024),
    )(x_pad,
      params["w1"], params["b1"], params["w2"], params["b2"],
      params["wc"], params["shift"])

    out = out[:, :, :N].reshape(B, H, W, N)                      # drop lane pad
    return jnp.transpose(out, (0, 3, 1, 2))                      # NHWC -> NCHW


# ---------------------------------------------------------------------------
# Deterministic parameter init (BatchNorm eval-mode stats folded on the host)
# ---------------------------------------------------------------------------

class _KeyGen:
    def __init__(self, seed):
        self.key = jax.random.PRNGKey(seed)

    def __call__(self):
        self.key, sub = jax.random.split(self.key)
        return sub


def init_macblock(seed, in_channels, out_channels, reduction=16, eps=1e-5):
    kg = _KeyGen(seed)
    C, N = in_channels, out_channels
    Cr = max(in_channels // reduction, 1)
    Npad = ((N + 127) // 128) * 128

    def dense(cin, cout):
        w = jax.random.normal(kg(), (cin, cout), jnp.float32) / jnp.sqrt(float(cin))
        b = 0.01 * jax.random.normal(kg(), (cout,), jnp.float32)
        return w, b.reshape(1, cout)

    w1a, b1a = dense(C, Cr)     # cSE1: C -> C//r -> C
    w2a, b2a = dense(Cr, C)
    w1m, b1m = dense(C, Cr)     # cSE2
    w2m, b2m = dense(Cr, C)
    # TODO(synk): self.sSE (spatial gate) is built in __init__ but never used in
    # forward(); its parameters are omitted.

    wconv = jax.random.normal(kg(), (3, 3, C, N), jnp.float32) / jnp.sqrt(9.0 * C)
    bconv = 0.01 * jax.random.normal(kg(), (N,), jnp.float32)
    gamma = 1.0 + 0.1 * jax.random.normal(kg(), (N,), jnp.float32)
    beta = 0.05 * jax.random.normal(kg(), (N,), jnp.float32)
    running_mean = jnp.zeros((N,), jnp.float32)
    running_var = jnp.ones((N,), jnp.float32)

    bn_scale = gamma / jnp.sqrt(running_var + eps)
    wc_hwio = wconv * bn_scale[None, None, None, :]              # BN folded (f32)
    shift = bconv * bn_scale + beta - running_mean * bn_scale    # bias+BN folded

    # --- kernel-form parameters ------------------------------------------------
    # Block-diagonal fused SE weights: pooled = [avg | max] (1, 2C).
    zcr = jnp.zeros((C, Cr), jnp.float32)
    zrc = jnp.zeros((Cr, C), jnp.float32)
    w1 = jnp.concatenate(
        [jnp.concatenate([w1a, zcr], axis=1),
         jnp.concatenate([zcr, w1m], axis=1)], axis=0)           # (2C, 2Cr)
    b1 = jnp.concatenate([b1a, b1m], axis=-1)                    # (1, 2Cr)
    w2 = jnp.concatenate(
        [jnp.concatenate([w2a, zrc], axis=1),
         jnp.concatenate([zrc, w2m], axis=1)], axis=0)           # (2Cr, 2C)
    b2 = jnp.concatenate([b2a, b2m], axis=-1)                    # (1, 2C)

    # Conv weight / shift with out-channels zero-padded to a 128-multiple.
    wc = jnp.pad(wc_hwio.reshape(9, C, N),
                 ((0, 0), (0, 0), (0, Npad - N))).astype(jnp.bfloat16)
    shift_pad = jnp.pad(shift.reshape(1, N), ((0, 0), (0, Npad - N)))

    return {
        # reference-form (per-branch) params
        "w1a": w1a, "b1a": b1a, "w2a": w2a, "b2a": b2a,
        "w1m": w1m, "b1m": b1m, "w2m": w2m, "b2m": b2m,
        "wc_hwio": wc_hwio,
        # kernel-form params
        "w1": w1, "b1": b1, "w2": w2, "b2": b2,
        "wc": wc, "shift": shift_pad,
    }


# ---------------------------------------------------------------------------
# Pure-JAX reference, mirroring the kernel's quantization points so the
# correctness tolerance can be tight (addresses prior review concern).
# ---------------------------------------------------------------------------

def macblock_reference(x_nchw, p):
    N = p["wc_hwio"].shape[-1]
    # Kernel receives bf16 activations over HBM.
    xq = x_nchw.astype(jnp.bfloat16).astype(jnp.float32)

    avg = jnp.mean(xq, axis=(2, 3))                              # (B, C)
    mx = jnp.max(xq, axis=(2, 3))                                # (B, C)

    def se(v, w1, b1, w2, b2):
        h = jnp.maximum(v @ w1 + b1, 0.0)
        z = h @ w2 + b2
        return 1.0 / (1.0 + jnp.exp(-z))

    attn = (se(avg, p["w1a"], p["b1a"], p["w2a"], p["b2a"])
            + se(mx, p["w1m"], p["b1m"], p["w2m"], p["b2m"]))    # (B, C)

    xs = jnp.transpose(xq * attn[:, :, None, None], (0, 2, 3, 1))
    # Kernel feeds bf16 patches and bf16 weights to the MXU (f32 accumulation).
    xs = xs.astype(jnp.bfloat16).astype(jnp.float32)
    w = p["wc_hwio"].astype(jnp.bfloat16).astype(jnp.float32)
    y = lax.conv_general_dilated(
        xs, w, window_strides=(1, 1), padding="SAME",
        dimension_numbers=("NHWC", "HWIO", "NHWC"),
        precision=lax.Precision.HIGHEST)
    y = jnp.maximum(y + p["shift"][:, :N].reshape(1, 1, 1, N), 0.0)
    return jnp.transpose(y, (0, 3, 1, 2))


# ---------------------------------------------------------------------------

if __name__ == "__main__":
    # B=4 so a 2-TensorCore part (v7x) still has >= 2 grid steps per core.
    B, C, H, W = 4, 64, 16, 16
    out_channels, reduction = 32, 16

    params = init_macblock(42, C, out_channels, reduction)
    x = jax.random.normal(jax.random.PRNGKey(0), (B, C, H, W), jnp.float32)

    out = jax.jit(macblock_forward)(x, params)
    jax.block_until_ready(out)

    assert out.shape == (B, out_channels, H, W), out.shape

    ref = macblock_reference(x, params)
    err = float(jnp.max(jnp.abs(out - ref)))
    assert err < 2e-2, f"max abs error vs reference: {err}"

    print("KERNEL_OK")
</pallas_src>

<mosaic_0001>
module attributes {stable_mosaic.version = 11 : i64} {
  func.func @_macblock_kernel(%arg0: i32, %arg1: memref<1x18x18x64xbf16, #tpu.memory_space<vmem>>, %arg2: memref<128x8xf32, #tpu.memory_space<vmem>>, %arg3: memref<1x8xf32, #tpu.memory_space<vmem>>, %arg4: memref<8x128xf32, #tpu.memory_space<vmem>>, %arg5: memref<1x128xf32, #tpu.memory_space<vmem>>, %arg6: memref<9x64x128xbf16, #tpu.memory_space<vmem>>, %arg7: memref<1x128xf32, #tpu.memory_space<vmem>>, %arg8: memref<1x256x128xf32, #tpu.memory_space<vmem>>, %arg9: memref<18x18x64xf32, #tpu.memory_space<vmem>>) attributes {dimension_semantics = [#tpu.dimension_semantics<parallel>], iteration_bounds = array<i64: 4>, scalar_prefetch = 0 : i64, scratch_operands = 1 : i64, tpu.core_type = #tpu.core_type<tc>, window_params = [{transform_indices = @transform_0, window_bounds = array<i64: 1, 18, 18, 64>}, {pipeline_mode = #tpu.pipeline_mode<synchronous>, transform_indices = @transform_1, window_bounds = array<i64: 128, 8>}, {pipeline_mode = #tpu.pipeline_mode<synchronous>, transform_indices = @transform_2, window_bounds = array<i64: 1, 8>}, {pipeline_mode = #tpu.pipeline_mode<synchronous>, transform_indices = @transform_3, window_bounds = array<i64: 8, 128>}, {pipeline_mode = #tpu.pipeline_mode<synchronous>, transform_indices = @transform_4, window_bounds = array<i64: 1, 128>}, {pipeline_mode = #tpu.pipeline_mode<synchronous>, transform_indices = @transform_5, window_bounds = array<i64: 9, 64, 128>}, {pipeline_mode = #tpu.pipeline_mode<synchronous>, transform_indices = @transform_6, window_bounds = array<i64: 1, 128>}, {transform_indices = @transform_7, window_bounds = array<i64: 1, 256, 128>}]} {
    %c0 = arith.constant 0 : index
    %c0_0 = arith.constant 0 : index
    %c0_1 = arith.constant 0 : index
    %c0_2 = arith.constant 0 : index
    %0 = vector.load %arg1[%c0, %c0_0, %c0_1, %c0_2] : memref<1x18x18x64xbf16, #tpu.memory_space<vmem>>, vector<1x18x18x64xbf16>
    %1 = vector.shape_cast %0 : vector<1x18x18x64xbf16> to vector<18x18x64xbf16>
    %2 = arith.extf %1 : vector<18x18x64xbf16> to vector<18x18x64xf32>
    %c0_3 = arith.constant 0 : index
    %c0_4 = arith.constant 0 : index
    %c0_5 = arith.constant 0 : index
    %3 = vector.load %arg9[%c0_3, %c0_4, %c0_5] : memref<18x18x64xf32, #tpu.memory_space<vmem>>, vector<18x18x64xf32>
    tpu.vector_store %arg9[%c0_3, %c0_4, %c0_5], %2 {strides = array<i32>} : memref<18x18x64xf32, #tpu.memory_space<vmem>>, vector<18x18x64xf32>,
    %c1 = arith.constant 1 : index
    %c1_6 = arith.constant 1 : index
    %c0_7 = arith.constant 0 : index
    %4 = vector.load %arg9[%c1, %c1_6, %c0_7] : memref<18x18x64xf32, #tpu.memory_space<vmem>>, vector<16x16x64xf32>
    %cst = arith.constant dense<0.000000e+00> : vector<16x64xf32>
    %5 = vector.multi_reduction <add>, %4, %cst [0] : vector<16x16x64xf32> to vector<16x64xf32>
    %cst_8 = arith.constant dense<0.000000e+00> : vector<64xf32>
    %6 = vector.multi_reduction <add>, %5, %cst_8 [0] : vector<16x64xf32> to vector<64xf32>
    %7 = vector.shape_cast %6 : vector<64xf32> to vector<1x64xf32>
    %cst_9 = arith.constant 3.906250e-03 : f32
    %8 = vector.broadcast %cst_9 : f32 to vector<1x64xf32>
    %9 = arith.mulf %7, %8 : vector<1x64xf32>
    %cst_10 = arith.constant dense<0xFF800000> : vector<16x64xf32>
    %10 = vector.multi_reduction <maximumf>, %4, %cst_10 [0] : vector<16x16x64xf32> to vector<16x64xf32>
    %cst_11 = arith.constant dense<0xFF800000> : vector<64xf32>
    %11 = vector.multi_reduction <maximumf>, %10, %cst_11 [0] : vector<16x64xf32> to vector<64xf32>
    %12 = vector.shape_cast %11 : vector<64xf32> to vector<1x64xf32>
    %13 = tpu.concatenate %9, %12 in 1 : vector<1x64xf32>, vector<1x64xf32> -> vector<1x128xf32>
    %c0_12 = arith.constant 0 : index
    %c0_13 = arith.constant 0 : index
    %14 = vector.load %arg2[%c0_12, %c0_13] : memref<128x8xf32, #tpu.memory_space<vmem>>, vector<128x8xf32>
    %cst_14 = arith.constant dense<0.000000e+00> : vector<1x8xf32>
    %15 = tpu.matmul %13, %14, %cst_14 {dimension_numbers = #tpu.dot_dimension_numbers<[1], [0], [0], [1], [0, 0, 1, 1], [], []>} : vector<1x128xf32>, vector<128x8xf32>, vector<1x8xf32> -> vector<1x8xf32>
    %c0_15 = arith.constant 0 : index
    %c0_16 = arith.constant 0 : index
    %16 = vector.load %arg3[%c0_15, %c0_16] : memref<1x8xf32, #tpu.memory_space<vmem>>, vector<1x8xf32>
    %17 = arith.addf %15, %16 : vector<1x8xf32>
    %cst_17 = arith.constant 0.000000e+00 : f32
    %18 = vector.broadcast %cst_17 : f32 to vector<1x8xf32>
    %19 = arith.maximumf %17, %18 : vector<1x8xf32>
    %c0_18 = arith.constant 0 : index
    %c0_19 = arith.constant 0 : index
    %20 = vector.load %arg4[%c0_18, %c0_19] : memref<8x128xf32, #tpu.memory_space<vmem>>, vector<8x128xf32>
    %cst_20 = arith.constant dense<0.000000e+00> : vector<1x128xf32>
    %21 = tpu.matmul %19, %20, %cst_20 {dimension_numbers = #tpu.dot_dimension_numbers<[1], [0], [0], [1], [0, 0, 1, 1], [], []>} : vector<1x8xf32>, vector<8x128xf32>, vector<1x128xf32> -> vector<1x128xf32>
    %c0_21 = arith.constant 0 : index
    %c0_22 = arith.constant 0 : index
    %22 = vector.load %arg5[%c0_21, %c0_22] : memref<1x128xf32, #tpu.memory_space<vmem>>, vector<1x128xf32>
    %23 = arith.addf %21, %22 : vector<1x128xf32>
    %cst_23 = arith.constant 0.000000e+00 : f32
    %24 = vector.broadcast %cst_23 : f32 to vector<1x128xf32>
    %25 = arith.subf %24, %23 : vector<1x128xf32>
    %26 = math.exp %25 : vector<1x128xf32>
    %cst_24 = arith.constant 1.000000e+00 : f32
    %27 = vector.broadcast %cst_24 : f32 to vector<1x128xf32>
    %28 = arith.addf %27, %26 : vector<1x128xf32>
    %cst_25 = arith.constant 1.000000e+00 : f32
    %29 = vector.broadcast %cst_25 : f32 to vector<1x128xf32>
    %30 = arith.divf %29, %28 : vector<1x128xf32>
    %31 = vector.extract_strided_slice %30 {offsets = [0, 0], sizes = [1, 64], strides = [1, 1]} : vector<1x128xf32> to vector<1x64xf32>
    %32 = vector.extract_strided_slice %30 {offsets = [0, 64], sizes = [1, 64], strides = [1, 1]} : vector<1x128xf32> to vector<1x64xf32>
    %33 = arith.addf %31, %32 : vector<1x64xf32>
    %c0_26 = arith.constant 0 : index
    %c0_27 = arith.constant 0 : index
    %c0_28 = arith.constant 0 : index
    %34 = vector.load %arg9[%c0_26, %c0_27, %c0_28] : memref<18x18x64xf32, #tpu.memory_space<vmem>>, vector<18x18x64xf32>
    %35 = vector.shape_cast %33 : vector<1x64xf32> to vector<1x1x64xf32>
    %36 = vector.broadcast %35 : vector<1x1x64xf32> to vector<18x18x64xf32>
    %37 = arith.mulf %34, %36 : vector<18x18x64xf32>
    %c0_29 = arith.constant 0 : index
    %c0_30 = arith.constant 0 : index
    %c0_31 = arith.constant 0 : index
    %38 = vector.load %arg9[%c0_29, %c0_30, %c0_31] : memref<18x18x64xf32, #tpu.memory_space<vmem>>, vector<18x18x64xf32>
    tpu.vector_store %arg9[%c0_29, %c0_30, %c0_31], %37 {strides = array<i32>} : memref<18x18x64xf32, #tpu.memory_space<vmem>>, vector<18x18x64xf32>,
    %c0_32 = arith.constant 0 : index
    %c0_33 = arith.constant 0 : index
    %c0_34 = arith.constant 0 : index
    %39 = vector.load %arg9[%c0_32, %c0_33, %c0_34] : memref<18x18x64xf32, #tpu.memory_space<vmem>>, vector<16x16x64xf32>
    %40 = arith.truncf %39 : vector<16x16x64xf32> to vector<16x16x64xbf16>
    %41 = vector.shape_cast %40 : vector<16x16x64xbf16> to vector<256x64xbf16>
    %c0_35 = arith.constant 0 : index
    %c0_36 = arith.constant 0 : index
    %c0_37 = arith.constant 0 : index
    %42 = vector.load %arg6[%c0_35, %c0_36, %c0_37] : memref<9x64x128xbf16, #tpu.memory_space<vmem>>, vector<1x64x128xbf16>
    %43 = vector.shape_cast %42 : vector<1x64x128xbf16> to vector<64x128xbf16>
    %cst_38 = arith.constant dense<0.000000e+00> : vector<256x128xf32>
    %44 = tpu.matmul %41, %43, %cst_38 {dimension_numbers = #tpu.dot_dimension_numbers<[1], [0], [0], [1], [0, 0, 1, 1], [], []>} : vector<256x64xbf16>, vector<64x128xbf16>, vector<256x128xf32> -> vector<256x128xf32>
    %c0_39 = arith.constant 0 : index
    %c0_40 = arith.constant 0 : index
    %c0_41 = arith.constant 0 : index
    %45 = vector.load %arg8[%c0_39, %c0_40, %c0_41] : memref<1x256x128xf32, #tpu.memory_space<vmem>>, vector<1x256x128xf32>
    %46 = vector.shape_cast %45 : vector<1x256x128xf32> to vector<256x128xf32>
    %47 = vector.shape_cast %44 : vector<256x128xf32> to vector<1x256x128xf32>
    tpu.vector_store %arg8[%c0_39, %c0_40, %c0_41], %47 {strides = array<i32>} : memref<1x256x128xf32, #tpu.memory_space<vmem>>, vector<1x256x128xf32>,
    %c0_42 = arith.constant 0 : index
    %c1_43 = arith.constant 1 : index
    %c0_44 = arith.constant 0 : index
    %48 = vector.load %arg9[%c0_42, %c1_43, %c0_44] : memref<18x18x64xf32, #tpu.memory_space<vmem>>, vector<16x16x64xf32>
    %49 = arith.truncf %48 : vector<16x16x64xf32> to vector<16x16x64xbf16>
    %50 = vector.shape_cast %49 : vector<16x16x64xbf16> to vector<256x64xbf16>
    %c1_45 = arith.constant 1 : index
    %c0_46 = arith.constant 0 : index
    %c0_47 = arith.constant 0 : index
    %51 = vector.load %arg6[%c1_45, %c0_46, %c0_47] : memref<9x64x128xbf16, #tpu.memory_space<vmem>>, vector<1x64x128xbf16>
    %52 = vector.shape_cast %51 : vector<1x64x128xbf16> to vector<64x128xbf16>
    %cst_48 = arith.constant dense<0.000000e+00> : vector<256x128xf32>
    %53 = tpu.matmul %50, %52, %cst_48 {dimension_numbers = #tpu.dot_dimension_numbers<[1], [0], [0], [1], [0, 0, 1, 1], [], []>} : vector<256x64xbf16>, vector<64x128xbf16>, vector<256x128xf32> -> vector<256x128xf32>
    %c0_49 = arith.constant 0 : index
    %c0_50 = arith.constant 0 : index
    %c0_51 = arith.constant 0 : index
    %54 = vector.load %arg8[%c0_49, %c0_50, %c0_51] : memref<1x256x128xf32, #tpu.memory_space<vmem>>, vector<1x256x128xf32>
    %55 = vector.shape_cast %54 : vector<1x256x128xf32> to vector<256x128xf32>
    %56 = arith.addf %55, %53 : vector<256x128xf32>
    %c0_52 = arith.constant 0 : index
    %c0_53 = arith.constant 0 : index
    %c0_54 = arith.constant 0 : index
    %57 = vector.load %arg8[%c0_52, %c0_53, %c0_54] : memref<1x256x128xf32, #tpu.memory_space<vmem>>, vector<1x256x128xf32>
    %58 = vector.shape_cast %57 : vector<1x256x128xf32> to vector<256x128xf32>
    %59 = vector.shape_cast %56 : vector<256x128xf32> to vector<1x256x128xf32>
    tpu.vector_store %arg8[%c0_52, %c0_53, %c0_54], %59 {strides = array<i32>} : memref<1x256x128xf32, #tpu.memory_space<vmem>>, vector<1x256x128xf32>,
    %c0_55 = arith.constant 0 : index
    %c2 = arith.constant 2 : index
    %c0_56 = arith.constant 0 : index
    %60 = vector.load %arg9[%c0_55, %c2, %c0_56] : memref<18x18x64xf32, #tpu.memory_space<vmem>>, vector<16x16x64xf32>
    %61 = arith.truncf %60 : vector<16x16x64xf32> to vector<16x16x64xbf16>
    %62 = vector.shape_cast %61 : vector<16x16x64xbf16> to vector<256x64xbf16>
    %c2_57 = arith.constant 2 : index
    %c0_58 = arith.constant 0 : index
    %c0_59 = arith.constant 0 : index
    %63 = vector.load %arg6[%c2_57, %c0_58, %c0_59] : memref<9x64x128xbf16, #tpu.memory_space<vmem>>, vector<1x64x128xbf16>
    %64 = vector.shape_cast %63 : vector<1x64x128xbf16> to vector<64x128xbf16>
    %cst_60 = arith.constant dense<0.000000e+00> : vector<256x128xf32>
    %65 = tpu.matmul %62, %64, %cst_60 {dimension_numbers = #tpu.dot_dimension_numbers<[1], [0], [0], [1], [0, 0, 1, 1], [], []>} : vector<256x64xbf16>, vector<64x128xbf16>, vector<256x128xf32> -> vector<256x128xf32>
    %c0_61 = arith.constant 0 : index
    %c0_62 = arith.constant 0 : index
    %c0_63 = arith.constant 0 : index
    %66 = vector.load %arg8[%c0_61, %c0_62, %c0_63] : memref<1x256x128xf32, #tpu.memory_space<vmem>>, vector<1x256x128xf32>
    %67 = vector.shape_cast %66 : vector<1x256x128xf32> to vector<256x128xf32>
    %68 = arith.addf %67, %65 : vector<256x128xf32>
    %c0_64 = arith.constant 0 : index
    %c0_65 = arith.constant 0 : index
    %c0_66 = arith.constant 0 : index
    %69 = vector.load %arg8[%c0_64, %c0_65, %c0_66] : memref<1x256x128xf32, #tpu.memory_space<vmem>>, vector<1x256x128xf32>
    %70 = vector.shape_cast %69 : vector<1x256x128xf32> to vector<256x128xf32>
    %71 = vector.shape_cast %68 : vector<256x128xf32> to vector<1x256x128xf32>
    tpu.vector_store %arg8[%c0_64, %c0_65, %c0_66], %71 {strides = array<i32>} : memref<1x256x128xf32, #tpu.memory_space<vmem>>, vector<1x256x128xf32>,
    %c1_67 = arith.constant 1 : index
    %c0_68 = arith.constant 0 : index
    %c0_69 = arith.constant 0 : index
    %72 = vector.load %arg9[%c1_67, %c0_68, %c0_69] : memref<18x18x64xf32, #tpu.memory_space<vmem>>, vector<16x16x64xf32>
    %73 = arith.truncf %72 : vector<16x16x64xf32> to vector<16x16x64xbf16>
    %74 = vector.shape_cast %73 : vector<16x16x64xbf16> to vector<256x64xbf16>
    %c3 = arith.constant 3 : index
    %c0_70 = arith.constant 0 : index
    %c0_71 = arith.constant 0 : index
    %75 = vector.load %arg6[%c3, %c0_70, %c0_71] : memref<9x64x128xbf16, #tpu.memory_space<vmem>>, vector<1x64x128xbf16>
    %76 = vector.shape_cast %75 : vector<1x64x128xbf16> to vector<64x128xbf16>
    %cst_72 = arith.constant dense<0.000000e+00> : vector<256x128xf32>
    %77 = tpu.matmul %74, %76, %cst_72 {dimension_numbers = #tpu.dot_dimension_numbers<[1], [0], [0], [1], [0, 0, 1, 1], [], []>} : vector<256x64xbf16>, vector<64x128xbf16>, vector<256x128xf32> -> vector<256x128xf32>
    %c0_73 = arith.constant 0 : index
    %c0_74 = arith.constant 0 : index
    %c0_75 = arith.constant 0 : index
    %78 = vector.load %arg8[%c0_73, %c0_74, %c0_75] : memref<1x256x128xf32, #tpu.memory_space<vmem>>, vector<1x256x128xf32>
    %79 = vector.shape_cast %78 : vector<1x256x128xf32> to vector<256x128xf32>
    %80 = arith.addf %79, %77 : vector<256x128xf32>
    %c0_76 = arith.constant 0 : index
    %c0_77 = arith.constant 0 : index
    %c0_78 = arith.constant 0 : index
    %81 = vector.load %arg8[%c0_76, %c0_77, %c0_78] : memref<1x256x128xf32, #tpu.memory_space<vmem>>, vector<1x256x128xf32>
    %82 = vector.shape_cast %81 : vector<1x256x128xf32> to vector<256x128xf32>
    %83 = vector.shape_cast %80 : vector<256x128xf32> to vector<1x256x128xf32>
    tpu.vector_store %arg8[%c0_76, %c0_77, %c0_78], %83 {strides = array<i32>} : memref<1x256x128xf32, #tpu.memory_space<vmem>>, vector<1x256x128xf32>,
    %c1_79 = arith.constant 1 : index
    %c1_80 = arith.constant 1 : index
    %c0_81 = arith.constant 0 : index
    %84 = vector.load %arg9[%c1_79, %c1_80, %c0_81] : memref<18x18x64xf32, #tpu.memory_space<vmem>>, vector<16x16x64xf32>
    %85 = arith.truncf %84 : vector<16x16x64xf32> to vector<16x16x64xbf16>
    %86 = vector.shape_cast %85 : vector<16x16x64xbf16> to vector<256x64xbf16>
    %c4 = arith.constant 4 : index
    %c0_82 = arith.constant 0 : index
    %c0_83 = arith.constant 0 : index
    %87 = vector.load %arg6[%c4, %c0_82, %c0_83] : memref<9x64x128xbf16, #tpu.memory_space<vmem>>, vector<1x64x128xbf16>
    %88 = vector.shape_cast %87 : vector<1x64x128xbf16> to vector<64x128xbf16>
    %cst_84 = arith.constant dense<0.000000e+00> : vector<256x128xf32>
    %89 = tpu.matmul %86, %88, %cst_84 {dimension_numbers = #tpu.dot_dimension_numbers<[1], [0], [0], [1], [0, 0, 1, 1], [], []>} : vector<256x64xbf16>, vector<64x128xbf16>, vector<256x128xf32> -> vector<256x128xf32>
    %c0_85 = arith.constant 0 : index
    %c0_86 = arith.constant 0 : index
    %c0_87 = arith.constant 0 : index
    %90 = vector.load %arg8[%c0_85, %c0_86, %c0_87] : memref<1x256x128xf32, #tpu.memory_space<vmem>>, vector<1x256x128xf32>
    %91 = vector.shape_cast %90 : vector<1x256x128xf32> to vector<256x128xf32>
    %92 = arith.addf %91, %89 : vector<256x128xf32>
    %c0_88 = arith.constant 0 : index
    %c0_89 = arith.constant 0 : index
    %c0_90 = arith.constant 0 : index
    %93 = vector.load %arg8[%c0_88, %c0_89, %c0_90] : memref<1x256x128xf32, #tpu.memory_space<vmem>>, vector<1x256x128xf32>
    %94 = vector.shape_cast %93 : vector<1x256x128xf32> to vector<256x128xf32>
    %95 = vector.shape_cast %92 : vector<256x128xf32> to vector<1x256x128xf32>
    tpu.vector_store %arg8[%c0_88, %c0_89, %c0_90], %95 {strides = array<i32>} : memref<1x256x128xf32, #tpu.memory_space<vmem>>, vector<1x256x128xf32>,
    %c1_91 = arith.constant 1 : index
    %c2_92 = arith.constant 2 : index
    %c0_93 = arith.constant 0 : index
    %96 = vector.load %arg9[%c1_91, %c2_92, %c0_93] : memref<18x18x64xf32, #tpu.memory_space<vmem>>, vector<16x16x64xf32>
    %97 = arith.truncf %96 : vector<16x16x64xf32> to vector<16x16x64xbf16>
    %98 = vector.shape_cast %97 : vector<16x16x64xbf16> to vector<256x64xbf16>
    %c5 = arith.constant 5 : index
    %c0_94 = arith.constant 0 : index
    %c0_95 = arith.constant 0 : index
    %99 = vector.load %arg6[%c5, %c0_94, %c0_95] : memref<9x64x128xbf16, #tpu.memory_space<vmem>>, vector<1x64x128xbf16>
    %100 = vector.shape_cast %99 : vector<1x64x128xbf16> to vector<64x128xbf16>
    %cst_96 = arith.constant dense<0.000000e+00> : vector<256x128xf32>
    %101 = tpu.matmul %98, %100, %cst_96 {dimension_numbers = #tpu.dot_dimension_numbers<[1], [0], [0], [1], [0, 0, 1, 1], [], []>} : vector<256x64xbf16>, vector<64x128xbf16>, vector<256x128xf32> -> vector<256x128xf32>
    %c0_97 = arith.constant 0 : index
    %c0_98 = arith.constant 0 : index
    %c0_99 = arith.constant 0 : index
    %102 = vector.load %arg8[%c0_97, %c0_98, %c0_99] : memref<1x256x128xf32, #tpu.memory_space<vmem>>, vector<1x256x128xf32>
    %103 = vector.shape_cast %102 : vector<1x256x128xf32> to vector<256x128xf32>
    %104 = arith.addf %103, %101 : vector<256x128xf32>
    %c0_100 = arith.constant 0 : index
    %c0_101 = arith.constant 0 : index
    %c0_102 = arith.constant 0 : index
    %105 = vector.load %arg8[%c0_100, %c0_101, %c0_102] : memref<1x256x128xf32, #tpu.memory_space<vmem>>, vector<1x256x128xf32>
    %106 = vector.shape_cast %105 : vector<1x256x128xf32> to vector<256x128xf32>
    %107 = vector.shape_cast %104 : vector<256x128xf32> to vector<1x256x128xf32>
    tpu.vector_store %arg8[%c0_100, %c0_101, %c0_102], %107 {strides = array<i32>} : memref<1x256x128xf32, #tpu.memory_space<vmem>>, vector<1x256x128xf32>,
    %c2_103 = arith.constant 2 : index
    %c0_104 = arith.constant 0 : index
    %c0_105 = arith.constant 0 : index
    %108 = vector.load %arg9[%c2_103, %c0_104, %c0_105] : memref<18x18x64xf32, #tpu.memory_space<vmem>>, vector<16x16x64xf32>
    %109 = arith.truncf %108 : vector<16x16x64xf32> to vector<16x16x64xbf16>
    %110 = vector.shape_cast %109 : vector<16x16x64xbf16> to vector<256x64xbf16>
    %c6 = arith.constant 6 : index
    %c0_106 = arith.constant 0 : index
    %c0_107 = arith.constant 0 : index
    %111 = vector.load %arg6[%c6, %c0_106, %c0_107] : memref<9x64x128xbf16, #tpu.memory_space<vmem>>, vector<1x64x128xbf16>
    %112 = vector.shape_cast %111 : vector<1x64x128xbf16> to vector<64x128xbf16>
    %cst_108 = arith.constant dense<0.000000e+00> : vector<256x128xf32>
    %113 = tpu.matmul %110, %112, %cst_108 {dimension_numbers = #tpu.dot_dimension_numbers<[1], [0], [0], [1], [0, 0, 1, 1], [], []>} : vector<256x64xbf16>, vector<64x128xbf16>, vector<256x128xf32> -> vector<256x128xf32>
    %c0_109 = arith.constant 0 : index
    %c0_110 = arith.constant 0 : index
    %c0_111 = arith.constant 0 : index
    %114 = vector.load %arg8[%c0_109, %c0_110, %c0_111] : memref<1x256x128xf32, #tpu.memory_space<vmem>>, vector<1x256x128xf32>
    %115 = vector.shape_cast %114 : vector<1x256x128xf32> to vector<256x128xf32>
    %116 = arith.addf %115, %113 : vector<256x128xf32>
    %c0_112 = arith.constant 0 : index
    %c0_113 = arith.constant 0 : index
    %c0_114 = arith.constant 0 : index
    %117 = vector.load %arg8[%c0_112, %c0_113, %c0_114] : memref<1x256x128xf32, #tpu.memory_space<vmem>>, vector<1x256x128xf32>
    %118 = vector.shape_cast %117 : vector<1x256x128xf32> to vector<256x128xf32>
    %119 = vector.shape_cast %116 : vector<256x128xf32> to vector<1x256x128xf32>
    tpu.vector_store %arg8[%c0_112, %c0_113, %c0_114], %119 {strides = array<i32>} : memref<1x256x128xf32, #tpu.memory_space<vmem>>, vector<1x256x128xf32>,
    %c2_115 = arith.constant 2 : index
    %c1_116 = arith.constant 1 : index
    %c0_117 = arith.constant 0 : index
    %120 = vector.load %arg9[%c2_115, %c1_116, %c0_117] : memref<18x18x64xf32, #tpu.memory_space<vmem>>, vector<16x16x64xf32>
    %121 = arith.truncf %120 : vector<16x16x64xf32> to vector<16x16x64xbf16>
    %122 = vector.shape_cast %121 : vector<16x16x64xbf16> to vector<256x64xbf16>
    %c7 = arith.constant 7 : index
    %c0_118 = arith.constant 0 : index
    %c0_119 = arith.constant 0 : index
    %123 = vector.load %arg6[%c7, %c0_118, %c0_119] : memref<9x64x128xbf16, #tpu.memory_space<vmem>>, vector<1x64x128xbf16>
    %124 = vector.shape_cast %123 : vector<1x64x128xbf16> to vector<64x128xbf16>
    %cst_120 = arith.constant dense<0.000000e+00> : vector<256x128xf32>
    %125 = tpu.matmul %122, %124, %cst_120 {dimension_numbers = #tpu.dot_dimension_numbers<[1], [0], [0], [1], [0, 0, 1, 1], [], []>} : vector<256x64xbf16>, vector<64x128xbf16>, vector<256x128xf32> -> vector<256x128xf32>
    %c0_121 = arith.constant 0 : index
    %c0_122 = arith.constant 0 : index
    %c0_123 = arith.constant 0 : index
    %126 = vector.load %arg8[%c0_121, %c0_122, %c0_123] : memref<1x256x128xf32, #tpu.memory_space<vmem>>, vector<1x256x128xf32>
    %127 = vector.shape_cast %126 : vector<1x256x128xf32> to vector<256x128xf32>
    %128 = arith.addf %127, %125 : vector<256x128xf32>
    %c0_124 = arith.constant 0 : index
    %c0_125 = arith.constant 0 : index
    %c0_126 = arith.constant 0 : index
    %129 = vector.load %arg8[%c0_124, %c0_125, %c0_126] : memref<1x256x128xf32, #tpu.memory_space<vmem>>, vector<1x256x128xf32>
    %130 = vector.shape_cast %129 : vector<1x256x128xf32> to vector<256x128xf32>
    %131 = vector.shape_cast %128 : vector<256x128xf32> to vector<1x256x128xf32>
    tpu.vector_store %arg8[%c0_124, %c0_125, %c0_126], %131 {strides = array<i32>} : memref<1x256x128xf32, #tpu.memory_space<vmem>>, vector<1x256x128xf32>,
    %c2_127 = arith.constant 2 : index
    %c2_128 = arith.constant 2 : index
    %c0_129 = arith.constant 0 : index
    %132 = vector.load %arg9[%c2_127, %c2_128, %c0_129] : memref<18x18x64xf32, #tpu.memory_space<vmem>>, vector<16x16x64xf32>
    %133 = arith.truncf %132 : vector<16x16x64xf32> to vector<16x16x64xbf16>
    %134 = vector.shape_cast %133 : vector<16x16x64xbf16> to vector<256x64xbf16>
    %c8 = arith.constant 8 : index
    %c0_130 = arith.constant 0 : index
    %c0_131 = arith.constant 0 : index
    %135 = vector.load %arg6[%c8, %c0_130, %c0_131] : memref<9x64x128xbf16, #tpu.memory_space<vmem>>, vector<1x64x128xbf16>
    %136 = vector.shape_cast %135 : vector<1x64x128xbf16> to vector<64x128xbf16>
    %cst_132 = arith.constant dense<0.000000e+00> : vector<256x128xf32>
    %137 = tpu.matmul %134, %136, %cst_132 {dimension_numbers = #tpu.dot_dimension_numbers<[1], [0], [0], [1], [0, 0, 1, 1], [], []>} : vector<256x64xbf16>, vector<64x128xbf16>, vector<256x128xf32> -> vector<256x128xf32>
    %c0_133 = arith.constant 0 : index
    %c0_134 = arith.constant 0 : index
    %c0_135 = arith.constant 0 : index
    %138 = vector.load %arg8[%c0_133, %c0_134, %c0_135] : memref<1x256x128xf32, #tpu.memory_space<vmem>>, vector<1x256x128xf32>
    %139 = vector.shape_cast %138 : vector<1x256x128xf32> to vector<256x128xf32>
    %140 = arith.addf %139, %137 : vector<256x128xf32>
    %c0_136 = arith.constant 0 : index
    %c0_137 = arith.constant 0 : index
    %c0_138 = arith.constant 0 : index
    %141 = vector.load %arg8[%c0_136, %c0_137, %c0_138] : memref<1x256x128xf32, #tpu.memory_space<vmem>>, vector<1x256x128xf32>
    %142 = vector.shape_cast %141 : vector<1x256x128xf32> to vector<256x128xf32>
    %143 = vector.shape_cast %140 : vector<256x128xf32> to vector<1x256x128xf32>
    tpu.vector_store %arg8[%c0_136, %c0_137, %c0_138], %143 {strides = array<i32>} : memref<1x256x128xf32, #tpu.memory_space<vmem>>, vector<1x256x128xf32>,
    %c0_139 = arith.constant 0 : index
    %c0_140 = arith.constant 0 : index
    %c0_141 = arith.constant 0 : index
    %144 = vector.load %arg8[%c0_139, %c0_140, %c0_141] : memref<1x256x128xf32, #tpu.memory_space<vmem>>, vector<1x256x128xf32>
    %145 = vector.shape_cast %144 : vector<1x256x128xf32> to vector<256x128xf32>
    %c0_142 = arith.constant 0 : index
    %c0_143 = arith.constant 0 : index
    %146 = vector.load %arg7[%c0_142, %c0_143] : memref<1x128xf32, #tpu.memory_space<vmem>>, vector<1x128xf32>
    %147 = vector.broadcast %146 : vector<1x128xf32> to vector<256x128xf32>
    %148 = arith.addf %145, %147 : vector<256x128xf32>
    %cst_144 = arith.constant 0.000000e+00 : f32
    %149 = vector.broadcast %cst_144 : f32 to vector<256x128xf32>
    %150 = arith.maximumf %148, %149 : vector<256x128xf32>
    %c0_145 = arith.constant 0 : index
    %c0_146 = arith.constant 0 : index
    %c0_147 = arith.constant 0 : index
    %151 = vector.load %arg8[%c0_145, %c0_146, %c0_147] : memref<1x256x128xf32, #tpu.memory_space<vmem>>, vector<1x256x128xf32>
    %152 = vector.shape_cast %151 : vector<1x256x128xf32> to vector<256x128xf32>
    %153 = vector.shape_cast %150 : vector<256x128xf32> to vector<1x256x128xf32>
    tpu.vector_store %arg8[%c0_145, %c0_146, %c0_147], %153 {strides = array<i32>} : memref<1x256x128xf32, #tpu.memory_space<vmem>>, vector<1x256x128xf32>,
    return
  }
  func.func @transform_0(%arg0: i32) -> (i32, i32, i32, i32) {
    %c0_i32 = arith.constant 0 : i32
    %c0_i32_0 = arith.constant 0 : i32
    %c0_i32_1 = arith.constant 0 : i32
    %c0_i32_2 = arith.constant 0 : i32
    return %arg0, %c0_i32, %c0_i32_0, %c0_i32_1 : i32, i32, i32, i32
  }
  func.func @transform_1(%arg0: i32) -> (i32, i32) {
    %c0_i32 = arith.constant 0 : i32
    %c0_i32_0 = arith.constant 0 : i32
    %c0_i32_1 = arith.constant 0 : i32
    return %c0_i32, %c0_i32_0 : i32, i32
  }
  func.func @transform_2(%arg0: i32) -> (i32, i32) {
    %c0_i32 = arith.constant 0 : i32
    %c0_i32_0 = arith.constant 0 : i32
    %c0_i32_1 = arith.constant 0 : i32
    return %c0_i32, %c0_i32_0 : i32, i32
  }
  func.func @transform_3(%arg0: i32) -> (i32, i32) {
    %c0_i32 = arith.constant 0 : i32
    %c0_i32_0 = arith.constant 0 : i32
    %c0_i32_1 = arith.constant 0 : i32
    return %c0_i32, %c0_i32_0 : i32, i32
  }
  func.func @transform_4(%arg0: i32) -> (i32, i32) {
    %c0_i32 = arith.constant 0 : i32
    %c0_i32_0 = arith.constant 0 : i32
    %c0_i32_1 = arith.constant 0 : i32
    return %c0_i32, %c0_i32_0 : i32, i32
  }
  func.func @transform_5(%arg0: i32) -> (i32, i32, i32) {
    %c0_i32 = arith.constant 0 : i32
    %c0_i32_0 = arith.constant 0 : i32
    %c0_i32_1 = arith.constant 0 : i32
    %c0_i32_2 = arith.constant 0 : i32
    return %c0_i32, %c0_i32_0, %c0_i32_1 : i32, i32, i32
  }
  func.func @transform_6(%arg0: i32) -> (i32, i32) {
    %c0_i32 = arith.constant 0 : i32
    %c0_i32_0 = arith.constant 0 : i32
    %c0_i32_1 = arith.constant 0 : i32
    return %c0_i32, %c0_i32_0 : i32, i32
  }
  func.func @transform_7(%arg0: i32) -> (i32, i32, i32) {
    %c0_i32 = arith.constant 0 : i32
    %c0_i32_0 = arith.constant 0 : i32
    %c0_i32_1 = arith.constant 0 : i32
    return %arg0, %c0_i32, %c0_i32_0 : i32, i32, i32
  }
}

</mosaic_0001>

<llo_original>
// kernel: macblock_forward.1
$region0: #{macblock_forward.1}
  #allocation0 [shape = 'u32[]', space=smem, size = 0x4, offset = 0x4, fixed_abs, tag = 'smem constant byte address 0x4 - core index']
  #allocation1 [shape = 'u32[144,128]{1,0:T(1,128)}', space=vmem, size = 0x12000, scoped, tag = 'internal scratch']
  #allocation2 [shape = 'f32[18,18,64]{2,1,0:T(8,128)}', space=vmem, size = 0x36000, scoped, tag = 'scratch operand']
  %s0 = inlined_call_operand.vmem [shape: bf16[4,18,18,64], index: 0, kind: input, shape index: {}]
  %s1 = inlined_call_operand.vmem [shape: f32[128,8], index: 1, kind: input, shape index: {}]
  %s2 = inlined_call_operand.vmem [shape: f32[1,8], index: 2, kind: input, shape index: {}]
  %s3 = inlined_call_operand.vmem [shape: f32[8,128], index: 3, kind: input, shape index: {}]
  %s4 = inlined_call_operand.vmem [shape: f32[1,128], index: 4, kind: input, shape index: {}]
  %s5 = inlined_call_operand.vmem [shape: bf16[9,64,128], index: 5, kind: input, shape index: {}]
  %s6 = inlined_call_operand.vmem [shape: f32[1,128], index: 6, kind: input, shape index: {}]
  %s7 = inlined_call_operand.hbm [shape: f32[4,256,128], index: 7, kind: output, shape index: {}]
  %s8 = sld [smem:[#allocation0]]
  $region61: #{macblock_forward.1} parent=0
    _
  %s10 = ssub.s32 1, %s8
  %s11 = scalar_select 0, %s10, %s8
  $region1: #{macblock_forward.1} parent=0
    #allocation3 [shape = 'u8[262144]{0}', space=vmem, size = 0x40000, scoped, tag = 'output window, operand 0']
    #allocation4 [shape = 's32[2]{0}', space=sflag, size = 0x8, scoped, tag = 'scoped memory for macblock_forward.1']
    %12 = vsyncpa [#allocation4], 0
    %s13 = scalar_lea.sflag [#allocation4], 1
    %14 = vsyncpa %s13, 0
    loop: start=0, step=1, limit=6
    $region2: #{macblock_forward.1} parent=1 // loop_pre_header
      _
    $region3: #{macblock_forward.1} parent=1 // loop_header
      %s16 = sphi 0, %s20
      %p17 = scmp.ge.s32.totalorder %s16, 6
      %s26 = sphi 0, %s28
      %s29 = sphi 0, %s26
      %s30 = sphi 0, %s29
      %s46 = sphi 0, %s30
      %s50 = sphi 0, %s50
      %s52 = sphi 0, %s50
      %s53 = sphi 0, %s52
      %s67 = sphi 0, %s53
      %s71 = sphi 0, %s71
      %s73 = sphi 0, %s71
      %s74 = sphi 0, %s73
      %s88 = sphi 0, %s74
      %s92 = sphi 0, %s92
      %s94 = sphi 0, %s92
      %s95 = sphi 0, %s94
      %s109 = sphi 0, %s95
      %s113 = sphi 0, %s113
      %s115 = sphi 0, %s113
      %s116 = sphi 0, %s115
      %s130 = sphi 0, %s116
      %s134 = sphi 0, %s134
      %s136 = sphi 0, %s134
      %s137 = sphi 0, %s136
      %s151 = sphi 0, %s137
      %s155 = sphi 0, %s155
      %s157 = sphi 0, %s155
      %s158 = sphi 0, %s157
      %s172 = sphi 0, %s158
      %s178 = sphi 0, %s180
      %s181 = sphi 0, %s178
      %s182 = sphi 0, %s181
      %s198 = sphi 0, %s182
    $region4: #{macblock_forward.1} parent=1 // loop_header_branch
      %19 = sbr.rel (%p17) target = $region8
    $region5: #{macblock_forward.1} parent=1 // loop_body
      %s21 = ssub.s32 %s16, 1
      %s22 = ssub.s32 %s16, 2
      %s23 = sadd.s32 %s16, 1
      %s24 = ssub.s32 %s16, %s23
      %p25 = scmp.eq.s32.totalorder %s24, 0
      %s27 = sadd.s32 %s26, 1
      %s28 = scalar_select %p25, %s26, %s27
      %p31 = pneg %p25
      %p32 = scmp.eq.s32.totalorder %s16, 3
      %p33 = por %p31, %p32
      %p34 = scmp.ne.s32.totalorder %s26, %s29
      %p35 = scmp.eq.s32.totalorder %s16, 0
      %p36 = por %p34, %p35
      %p37 = scmp.ne.s32.totalorder %s26, %s29
      %p38 = scmp.eq.s32.totalorder %s21, 3
      %p39 = por %p37, %p38
      %p40 = scmp.ne.s32.totalorder %s29, %s30
      %p41 = scmp.eq.s32.totalorder %s21, 0
      %p42 = por %p40, %p41
      %p43 = scmp.ne.s32.totalorder %s29, %s30
      %p44 = scmp.eq.s32.totalorder %s22, 3
      %p45 = por %p43, %p44
      %p47 = scmp.ne.s32.totalorder %s30, %s46
      %p48 = scmp.eq.s32.totalorder %s22, 0
      %p49 = por %p47, %p48
      %s51 = sadd.s32 %s50, 1
      %p54 = scmp.eq.s32.totalorder %s16, 3
      %p55 = scmp.ne.s32.totalorder %s50, %s52
      %p56 = scmp.eq.s32.totalorder %s16, 0
      %p57 = por %p55, %p56
      %p58 = scmp.ne.s32.totalorder %s50, %s52
      %p59 = scmp.eq.s32.totalorder %s21, 3
      %p60 = por %p58, %p59
      %p61 = scmp.ne.s32.totalorder %s52, %s53
      %p62 = scmp.eq.s32.totalorder %s21, 0
      %p63 = por %p61, %p62
      %p64 = scmp.ne.s32.totalorder %s52, %s53
      %p65 = scmp.eq.s32.totalorder %s22, 3
      %p66 = por %p64, %p65
      %p68 = scmp.ne.s32.totalorder %s53, %s67
      %p69 = scmp.eq.s32.totalorder %s22, 0
      %p70 = por %p68, %p69
      %s72 = sadd.s32 %s71, 1
      %p75 = scmp.eq.s32.totalorder %s16, 3
      %p76 = scmp.ne.s32.totalorder %s71, %s73
      %p77 = scmp.eq.s32.totalorder %s16, 0
      %p78 = por %p76, %p77
      %p79 = scmp.ne.s32.totalorder %s71, %s73
      %p80 = scmp.eq.s32.totalorder %s21, 3
      %p81 = por %p79, %p80
      %p82 = scmp.ne.s32.totalorder %s73, %s74
      %p83 = scmp.eq.s32.totalorder %s21, 0
      %p84 = por %p82, %p83
      %p85 = scmp.ne.s32.totalorder %s73, %s74
      %p86 = scmp.eq.s32.totalorder %s22, 3
      %p87 = por %p85, %p86
      %p89 = scmp.ne.s32.totalorder %s74, %s88
      %p90 = scmp.eq.s32.totalorder %s22, 0
      %p91 = por %p89, %p90
      %s93 = sadd.s32 %s92, 1
      %p96 = scmp.eq.s32.totalorder %s16, 3
      %p97 = scmp.ne.s32.totalorder %s92, %s94
      %p98 = scmp.eq.s32.totalorder %s16, 0
      %p99 = por %p97, %p98
      %p100 = scmp.ne.s32.totalorder %s92, %s94
      %p101 = scmp.eq.s32.totalorder %s21, 3
      %p102 = por %p100, %p101
      %p103 = scmp.ne.s32.totalorder %s94, %s95
      %p104 = scmp.eq.s32.totalorder %s21, 0
      %p105 = por %p103, %p104
      %p106 = scmp.ne.s32.totalorder %s94, %s95
      %p107 = scmp.eq.s32.totalorder %s22, 3
      %p108 = por %p106, %p107
      %p110 = scmp.ne.s32.totalorder %s95, %s109
      %p111 = scmp.eq.s32.totalorder %s22, 0
      %p112 = por %p110, %p111
      %s114 = sadd.s32 %s113, 1
      %p117 = scmp.eq.s32.totalorder %s16, 3
      %p118 = scmp.ne.s32.totalorder %s113, %s115
      %p119 = scmp.eq.s32.totalorder %s16, 0
      %p120 = por %p118, %p119
      %p121 = scmp.ne.s32.totalorder %s113, %s115
      %p122 = scmp.eq.s32.totalorder %s21, 3
      %p123 = por %p121, %p122
      %p124 = scmp.ne.s32.totalorder %s115, %s116
      %p125 = scmp.eq.s32.totalorder %s21, 0
      %p126 = por %p124, %p125
      %p127 = scmp.ne.s32.totalorder %s115, %s116
      %p128 = scmp.eq.s32.totalorder %s22, 3
      %p129 = por %p127, %p128
      %p131 = scmp.ne.s32.totalorder %s116, %s130
      %p132 = scmp.eq.s32.totalorder %s22, 0
      %p133 = por %p131, %p132
      %s135 = sadd.s32 %s134, 1
      %p138 = scmp.eq.s32.totalorder %s16, 3
      %p139 = scmp.ne.s32.totalorder %s134, %s136
      %p140 = scmp.eq.s32.totalorder %s16, 0
      %p141 = por %p139, %p140
      %p142 = scmp.ne.s32.totalorder %s134, %s136
      %p143 = scmp.eq.s32.totalorder %s21, 3
      %p144 = por %p142, %p143
      %p145 = scmp.ne.s32.totalorder %s136, %s137
      %p146 = scmp.eq.s32.totalorder %s21, 0
      %p147 = por %p145, %p146
      %p148 = scmp.ne.s32.totalorder %s136, %s137
      %p149 = scmp.eq.s32.totalorder %s22, 3
      %p150 = por %p148, %p149
      %p152 = scmp.ne.s32.totalorder %s137, %s151
      %p153 = scmp.eq.s32.totalorder %s22, 0
      %p154 = por %p152, %p153
      %s156 = sadd.s32 %s155, 1
      %p159 = scmp.eq.s32.totalorder %s16, 3
      %p160 = scmp.ne.s32.totalorder %s155, %s157
      %p161 = scmp.eq.s32.totalorder %s16, 0
      %p162 = por %p160, %p161
      %p163 = scmp.ne.s32.totalorder %s155, %s157
      %p164 = scmp.eq.s32.totalorder %s21, 3
      %p165 = por %p163, %p164
      %p166 = scmp.ne.s32.totalorder %s157, %s158
      %p167 = scmp.eq.s32.totalorder %s21, 0
      %p168 = por %p166, %p167
      %p169 = scmp.ne.s32.totalorder %s157, %s158
      %p170 = scmp.eq.s32.totalorder %s22, 3
      %p171 = por %p169, %p170
      %p173 = scmp.ne.s32.totalorder %s158, %s172
      %p174 = scmp.eq.s32.totalorder %s22, 0
      %p175 = por %p173, %p174
      %s176 = ssub.s32 %s16, %s23
      %p177 = scmp.eq.s32.totalorder %s176, 0
      %s179 = sadd.s32 %s178, 1
      %s180 = scalar_select %p177, %s178, %s179
      %p183 = pneg %p177
      %p184 = scmp.eq.s32.totalorder %s16, 3
      %p185 = por %p183, %p184
      %p186 = scmp.ne.s32.totalorder %s178, %s181
      %p187 = scmp.eq.s32.totalorder %s16, 0
      %p188 = por %p186, %p187
      %p189 = scmp.ne.s32.totalorder %s178, %s181
      %p190 = scmp.eq.s32.totalorder %s21, 3
      %p191 = por %p189, %p190
      %p192 = scmp.ne.s32.totalorder %s181, %s182
      %p193 = scmp.eq.s32.totalorder %s21, 0
      %p194 = por %p192, %p193
      %p195 = scmp.ne.s32.totalorder %s181, %s182
      %p196 = scmp.eq.s32.totalorder %s22, 3
      %p197 = por %p195, %p196
      %p199 = scmp.ne.s32.totalorder %s182, %s198
      %p200 = scmp.eq.s32.totalorder %s22, 0
      %p201 = por %p199, %p200
      %p202 = scmp.le.s32.totalorder 1, %s16
      %p203 = scmp.lt.s32.totalorder %s16, 5
      %p204 = pnand %p202, %p203
      %p205 = pneg %p204
      // Predicated region
      $region9: #{macblock_forward.1} parent=5 // pred_check
        _
      $region10: #{macblock_forward.1} parent=5 // pred_check_branch
        %207 = sbr.rel (%p204) target = $region12
      $region11: #{macblock_forward.1} parent=5 // pred_region
        %s208 = ssub.s32 %s16, 1
        // Predicated region
        $region13: #{macblock_forward.1} parent=11 // pred_check
          %p209 = pneg %p63
        $region14: #{macblock_forward.1} parent=11 // pred_check_branch
          %211 = sbr.rel (%p209) target = $region16
        $region15: #{macblock_forward.1} parent=11 // pred_region
          _
        $region16: #{macblock_forward.1} parent=11 // pred_fallthru
          _
        // Predicated region
        $region17: #{macblock_forward.1} parent=11 // pred_check
          %p212 = pneg %p84
        $region18: #{macblock_forward.1} parent=11 // pred_check_branch
          %214 = sbr.rel (%p212) target = $region20
        $region19: #{macblock_forward.1} parent=11 // pred_region
          _
        $region20: #{macblock_forward.1} parent=11 // pred_fallthru
          _
        // Predicated region
        $region21: #{macblock_forward.1} parent=11 // pred_check
          %p215 = pneg %p105
        $region22: #{macblock_forward.1} parent=11 // pred_check_branch
          %217 = sbr.rel (%p215) target = $region24
        $region23: #{macblock_forward.1} parent=11 // pred_region
          _
        $region24: #{macblock_forward.1} parent=11 // pred_fallthru
          _
        // Predicated region
        $region25: #{macblock_forward.1} parent=11 // pred_check
          %p218 = pneg %p126
        $region26: #{macblock_forward.1} parent=11 // pred_check_branch
          %220 = sbr.rel (%p218) target = $region28
        $region27: #{macblock_forward.1} parent=11 // pred_region
          _
        $region28: #{macblock_forward.1} parent=11 // pred_fallthru
          _
        // Predicated region
        $region29: #{macblock_forward.1} parent=11 // pred_check
          %p221 = pneg %p147
        $region30: #{macblock_forward.1} parent=11 // pred_check_branch
          %223 = sbr.rel (%p221) target = $region32
        $region31: #{macblock_forward.1} parent=11 // pred_region
          _
        $region32: #{macblock_forward.1} parent=11 // pred_fallthru
          _
        // Predicated region
        $region33: #{macblock_forward.1} parent=11 // pred_check
          %p224 = pneg %p168
        $region34: #{macblock_forward.1} parent=11 // pred_check_branch
          %226 = sbr.rel (%p224) target = $region36
        $region35: #{macblock_forward.1} parent=11 // pred_region
          _
        $region36: #{macblock_forward.1} parent=11 // pred_fallthru
          _
      $region12: #{macblock_forward.1} parent=5 // pred_fallthru
        _
      %p227 = scmp.lt.s32.totalorder %s16, 4
      // Predicated region
      $region37: #{macblock_forward.1} parent=5 // pred_check
        %p228 = pneg %p227
      $region38: #{macblock_forward.1} parent=5 // pred_check_branch
        %230 = sbr.rel (%p228) target = $region40
      $region39: #{macblock_forward.1} parent=5 // pred_region
        // Predicated region
        $region41: #{macblock_forward.1} parent=39 // pred_check
          %p231 = pneg %p36
        $region42: #{macblock_forward.1} parent=39 // pred_check_branch
          %233 = sbr.rel (%p231) target = $region44
        $region43: #{macblock_forward.1} parent=39 // pred_region
          %p234 = scmp.lt.s32.totalorder %s16, 3
          %s235 = scalar_select %p234, %s16, 3
          %s236 = smul.addr %s235, 54
          %s237 = smul.addr %s236, 4
          %s238 = scalar_lea.vmem %s0, %s237
        $region44: #{macblock_forward.1} parent=39 // pred_fallthru
          _
      $region40: #{macblock_forward.1} parent=5 // pred_fallthru
        _
      %p239 = scmp.le.s32.totalorder 1, %s16
      %p240 = scmp.lt.s32.totalorder %s16, 5
      %p241 = pnand %p239, %p240
      %p242 = pneg %p241
      // Predicated region
      $region45: #{macblock_forward.1} parent=5 // pred_check
        _
      $region46: #{macblock_forward.1} parent=5 // pred_check_branch
        %244 = sbr.rel (%p241) target = $region48
      $region47: #{macblock_forward.1} parent=5 // pred_region
        %s245 = ssub.s32 %s16, 1
        %p246 = scmp.lt.s32.totalorder %s21, 3
        %s247 = scalar_select %p246, %s21, 3
        %s248 = smul.addr %s247, 54
        %s249 = smul.addr %s248, 4
        %s250 = scalar_lea.vmem %s0, %s249
        %p251 = pneg %p42
        %p252 = pneg %p39
        %p253 = pneg %p63
        %p254 = pneg %p60
        %p255 = pneg %p84
        %p256 = pneg %p81
        %p257 = pneg %p105
        %p258 = pneg %p102
        %p259 = pneg %p126
        %p260 = pneg %p123
        %p261 = pneg %p147
        %p262 = pneg %p144
        %p263 = pneg %p168
        %p264 = pneg %p165
        %p265 = pneg %p194
        %p266 = pneg %p191
        %s267 = sand.u32 %s181, 1
        %s268 = scalar_lea.sflag [#allocation4], %s267
        %s269 = sand.u32 %s181, 1
        %s270 = smul.addr %s269, 256
        %s271 = scalar_lea.vmem [#allocation3], %s270
        %p272 = scmp.lt.s32.totalorder %s21, 3
        %s273 = scalar_select %p272, %s21, 3
        %s274 = smul.addr %s273, 54
        %s275 = smul.addr %s274, 4
        %s276 = scalar_lea.vmem %s0, %s275
        %v278 = vld [vmem:[%s276] sm:$0xf]
        %v279 = vld [vmem:[%s276 + $0x4] sm:$0xf]
        %v280 = vld [vmem:[%s276 + $0x8] sm:$0x1]
        %v281 = vld [vmem:[%s276 + $0xc] sm:$0xf]
        %v282 = vld [vmem:[%s276 + $0x10] sm:$0xf]
        %v283 = vld [vmem:[%s276 + $0x14] sm:$0x1]
        %v284 = vld [vmem:[%s276 + $0x18] sm:$0xf]
        %v285 = vld [vmem:[%s276 + $0x1c] sm:$0xf]
        %v286 = vld [vmem:[%s276 + $0x20] sm:$0x1]
        %v287 = vld [vmem:[%s276 + $0x24] sm:$0xf]
        %v288 = vld [vmem:[%s276 + $0x28] sm:$0xf]
        %v289 = vld [vmem:[%s276 + $0x2c] sm:$0x1]
        %v290 = vld [vmem:[%s276 + $0x30] sm:$0xf]
        %v291 = vld [vmem:[%s276 + $0x34] sm:$0xf]
        %v292 = vld [vmem:[%s276 + $0x38] sm:$0x1]
        %v293 = vld [vmem:[%s276 + $0x3c] sm:$0xf]
        %v294 = vld [vmem:[%s276 + $0x40] sm:$0xf]
        %v295 = vld [vmem:[%s276 + $0x44] sm:$0x1]
        %v296 = vld [vmem:[%s276 + $0x48] sm:$0xf]
        %v297 = vld [vmem:[%s276 + $0x4c] sm:$0xf]
        %v298 = vld [vmem:[%s276 + $0x50] sm:$0x1]
        %v299 = vld [vmem:[%s276 + $0x54] sm:$0xf]
        %v300 = vld [vmem:[%s276 + $0x58] sm:$0xf]
        %v301 = vld [vmem:[%s276 + $0x5c] sm:$0x1]
        %v302 = vld [vmem:[%s276 + $0x60] sm:$0xf]
        %v303 = vld [vmem:[%s276 + $0x64] sm:$0xf]
        %v304 = vld [vmem:[%s276 + $0x68] sm:$0x1]
        %v305 = vld [vmem:[%s276 + $0x6c] sm:$0xf]
        %v306 = vld [vmem:[%s276 + $0x70] sm:$0xf]
        %v307 = vld [vmem:[%s276 + $0x74] sm:$0x1]
        %v308 = vld [vmem:[%s276 + $0x78] sm:$0xf]
        %v309 = vld [vmem:[%s276 + $0x7c] sm:$0xf]
        %v310 = vld [vmem:[%s276 + $0x80] sm:$0x1]
        %v311 = vld [vmem:[%s276 + $0x84] sm:$0xf]
        %v312 = vld [vmem:[%s276 + $0x88] sm:$0xf]
        %v313 = vld [vmem:[%s276 + $0x8c] sm:$0x1]
        %v314 = vld [vmem:[%s276 + $0x90] sm:$0xf]
        %v315 = vld [vmem:[%s276 + $0x94] sm:$0xf]
        %v316 = vld [vmem:[%s276 + $0x98] sm:$0x1]
        %v317 = vld [vmem:[%s276 + $0x9c] sm:$0xf]
        %v318 = vld [vmem:[%s276 + $0xa0] sm:$0xf]
        %v319 = vld [vmem:[%s276 + $0xa4] sm:$0x1]
        %v320 = vld [vmem:[%s276 + $0xa8] sm:$0xf]
        %v321 = vld [vmem:[%s276 + $0xac] sm:$0xf]
        %v322 = vld [vmem:[%s276 + $0xb0] sm:$0x1]
        %v323 = vld [vmem:[%s276 + $0xb4] sm:$0xf]
        %v324 = vld [vmem:[%s276 + $0xb8] sm:$0xf]
        %v325 = vld [vmem:[%s276 + $0xbc] sm:$0x1]
        %v326 = vld [vmem:[%s276 + $0xc0] sm:$0xf]
        %v327 = vld [vmem:[%s276 + $0xc4] sm:$0xf]
        %v328 = vld [vmem:[%s276 + $0xc8] sm:$0x1]
        %v329 = vld [vmem:[%s276 + $0xcc] sm:$0xf]
        %v330 = vld [vmem:[%s276 + $0xd0] sm:$0xf]
        %v331 = vld [vmem:[%s276 + $0xd4] sm:$0x1]
        %v332 = vunpack.c.l.bf16 %v278
        %v333 = vunpack.c.l.bf16 %v279
        %v334 = vunpack.c.l.bf16 %v280
        %v335 = vunpack.c.l.bf16 %v281
        %v336 = vunpack.c.l.bf16 %v282
        %v337 = vunpack.c.l.bf16 %v283
        %v338 = vunpack.c.l.bf16 %v284
        %v339 = vunpack.c.l.bf16 %v285
        %v340 = vunpack.c.l.bf16 %v286
        %v341 = vunpack.c.l.bf16 %v287
        %v342 = vunpack.c.l.bf16 %v288
        %v343 = vunpack.c.l.bf16 %v289
        %v344 = vunpack.c.l.bf16 %v290
        %v345 = vunpack.c.l.bf16 %v291
        %v346 = vunpack.c.l.bf16 %v292
        %v347 = vunpack.c.l.bf16 %v293
        %v348 = vunpack.c.l.bf16 %v294
        %v349 = vunpack.c.l.bf16 %v295
        %v350 = vunpack.c.l.bf16 %v296
        %v351 = vunpack.c.l.bf16 %v297
        %v352 = vunpack.c.l.bf16 %v298
        %v353 = vunpack.c.l.bf16 %v299
        %v354 = vunpack.c.l.bf16 %v300
        %v355 = vunpack.c.l.bf16 %v301
        %v356 = vunpack.c.l.bf16 %v302
        %v357 = vunpack.c.l.bf16 %v303
        %v358 = vunpack.c.l.bf16 %v304
        %v359 = vunpack.c.l.bf16 %v305
        %v360 = vunpack.c.l.bf16 %v306
        %v361 = vunpack.c.l.bf16 %v307
        %v362 = vunpack.c.l.bf16 %v308
        %v363 = vunpack.c.l.bf16 %v309
        %v364 = vunpack.c.l.bf16 %v310
        %v365 = vunpack.c.l.bf16 %v311
        %v366 = vunpack.c.l.bf16 %v312
        %v367 = vunpack.c.l.bf16 %v313
        %v368 = vunpack.c.l.bf16 %v314
        %v369 = vunpack.c.l.bf16 %v315
        %v370 = vunpack.c.l.bf16 %v316
        %v371 = vunpack.c.l.bf16 %v317
        %v372 = vunpack.c.l.bf16 %v318
        %v373 = vunpack.c.l.bf16 %v319
        %v374 = vunpack.c.l.bf16 %v320
        %v375 = vunpack.c.l.bf16 %v321
        %v376 = vunpack.c.l.bf16 %v322
        %v377 = vunpack.c.l.bf16 %v323
        %v378 = vunpack.c.l.bf16 %v324
        %v379 = vunpack.c.l.bf16 %v325
        %v380 = vunpack.c.l.bf16 %v326
        %v381 = vunpack.c.l.bf16 %v327
        %v382 = vunpack.c.l.bf16 %v328
        %v383 = vunpack.c.l.bf16 %v329
        %v384 = vunpack.c.l.bf16 %v330
        %v385 = vunpack.c.l.bf16 %v331
        %vm386 = vcmask 523264
        %387 = vst.msk [vmem:[#allocation2] sm:$0xff] %vm386, %v332
        %388 = vst.msk [vmem:[#allocation2 + $0x8] sm:$0xff] %vm386, %v333
        %vm389 = vcmask 517120
        %390 = vst.msk [vmem:[#allocation2 + $0x10] sm:$0x3] %vm389, %v334
        %391 = vst.msk [vmem:[#allocation2 + $0x18] sm:$0xff] %vm386, %v335
        %392 = vst.msk [vmem:[#allocation2 + $0x20] sm:$0xff] %vm386, %v336
        %393 = vst.msk [vmem:[#allocation2 + $0x28] sm:$0x3] %vm389, %v337
        %394 = vst.msk [vmem:[#allocation2 + $0x30] sm:$0xff] %vm386, %v338
        %395 = vst.msk [vmem:[#allocation2 + $0x38] sm:$0xff] %vm386, %v339
        %396 = vst.msk [vmem:[#allocation2 + $0x40] sm:$0x3] %vm389, %v340
        %397 = vst.msk [vmem:[#allocation2 + $0x48] sm:$0xff] %vm386, %v341
        %398 = vst.msk [vmem:[#allocation2 + $0x50] sm:$0xff] %vm386, %v342
        %399 = vst.msk [vmem:[#allocation2 + $0x58] sm:$0x3] %vm389, %v343
        %400 = vst.msk [vmem:[#allocation2 + $0x60] sm:$0xff] %vm386, %v344
        %401 = vst.msk [vmem:[#allocation2 + $0x68] sm:$0xff] %vm386, %v345
        %402 = vst.msk [vmem:[#allocation2 + $0x70] sm:$0x3] %vm389, %v346
        %403 = vst.msk [vmem:[#allocation2 + $0x78] sm:$0xff] %vm386, %v347
        %404 = vst.msk [vmem:[#allocation2 + $0x80] sm:$0xff] %vm386, %v348
        %405 = vst.msk [vmem:[#allocation2 + $0x88] sm:$0x3] %vm389, %v349
        %406 = vst.msk [vmem:[#allocation2 + $0x90] sm:$0xff] %vm386, %v350
        %407 = vst.msk [vmem:[#allocation2 + $0x98] sm:$0xff] %vm386, %v351
        %408 = vst.msk [vmem:[#allocation2 + $0xa0] sm:$0x3] %vm389, %v352
        %409 = vst.msk [vmem:[#allocation2 + $0xa8] sm:$0xff] %vm386, %v353
        %410 = vst.msk [vmem:[#allocation2 + $0xb0] sm:$0xff] %vm386, %v354
        %411 = vst.msk [vmem:[#allocation2 + $0xb8] sm:$0x3] %vm389, %v355
        %412 = vst.msk [vmem:[#allocation2 + $0xc0] sm:$0xff] %vm386, %v356
        %413 = vst.msk [vmem:[#allocation2 + $0xc8] sm:$0xff] %vm386, %v357
        %414 = vst.msk [vmem:[#allocation2 + $0xd0] sm:$0x3] %vm389, %v358
        %415 = vst.msk [vmem:[#allocation2 + $0xd8] sm:$0xff] %vm386, %v359
        %416 = vst.msk [vmem:[#allocation2 + $0xe0] sm:$0xff] %vm386, %v360
        %417 = vst.msk [vmem:[#allocation2 + $0xe8] sm:$0x3] %vm389, %v361
        %418 = vst.msk [vmem:[#allocation2 + $0xf0] sm:$0xff] %vm386, %v362
        %419 = vst.msk [vmem:[#allocation2 + $0xf8] sm:$0xff] %vm386, %v363
        %420 = vst.msk [vmem:[#allocation2 + $0x100] sm:$0x3] %vm389, %v364
        %421 = vst.msk [vmem:[#allocation2 + $0x108] sm:$0xff] %vm386, %v365
        %422 = vst.msk [vmem:[#allocation2 + $0x110] sm:$0xff] %vm386, %v366
        %423 = vst.msk [vmem:[#allocation2 + $0x118] sm:$0x3] %vm389, %v367
        %424 = vst.msk [vmem:[#allocation2 + $0x120] sm:$0xff] %vm386, %v368
        %425 = vst.msk [vmem:[#allocation2 + $0x128] sm:$0xff] %vm386, %v369
        %426 = vst.msk [vmem:[#allocation2 + $0x130] sm:$0x3] %vm389, %v370
        %427 = vst.msk [vmem:[#allocation2 + $0x138] sm:$0xff] %vm386, %v371
        %428 = vst.msk [vmem:[#allocation2 + $0x140] sm:$0xff] %vm386, %v372
        %429 = vst.msk [vmem:[#allocation2 + $0x148] sm:$0x3] %vm389, %v373
        %430 = vst.msk [vmem:[#allocation2 + $0x150] sm:$0xff] %vm386, %v374
        %431 = vst.msk [vmem:[#allocation2 + $0x158] sm:$0xff] %vm386, %v375
        %432 = vst.msk [vmem:[#allocation2 + $0x160] sm:$0x3] %vm389, %v376
        %433 = vst.msk [vmem:[#allocation2 + $0x168] sm:$0xff] %vm386, %v377
        %434 = vst.msk [vmem:[#allocation2 + $0x170] sm:$0xff] %vm386, %v378
        %435 = vst.msk [vmem:[#allocation2 + $0x178] sm:$0x3] %vm389, %v379
        %436 = vst.msk [vmem:[#allocation2 + $0x180] sm:$0xff] %vm386, %v380
        %437 = vst.msk [vmem:[#allocation2 + $0x188] sm:$0xff] %vm386, %v381
        %438 = vst.msk [vmem:[#allocation2 + $0x190] sm:$0x3] %vm389, %v382
        %439 = vst.msk [vmem:[#allocation2 + $0x198] sm:$0xff] %vm386, %v383
        %440 = vst.msk [vmem:[#allocation2 + $0x1a0] sm:$0xff] %vm386, %v384
        %441 = vst.msk [vmem:[#allocation2 + $0x1a8] sm:$0x3] %vm389, %v385
        %s442 = scalar_lea.vmem [#allocation2], 24
        %v443 = vld [vmem:[%s442 + $0x1] sm:$0xff]
        %v444 = vld [vmem:[%s442 + $0x9] sm:$0xff]
        %v445 = vld [vmem:[%s442 + $0x19] sm:$0xff]
        %v446 = vld [vmem:[%s442 + $0x21] sm:$0xff]
        %v447 = vld [vmem:[%s442 + $0x31] sm:$0xff]
        %v448 = vld [vmem:[%s442 + $0x39] sm:$0xff]
        %v449 = vld [vmem:[%s442 + $0x49] sm:$0xff]
        %v450 = vld [vmem:[%s442 + $0x51] sm:$0xff]
        %v451 = vld [vmem:[%s442 + $0x61] sm:$0xff]
        %v452 = vld [vmem:[%s442 + $0x69] sm:$0xff]
        %v453 = vld [vmem:[%s442 + $0x79] sm:$0xff]
        %v454 = vld [vmem:[%s442 + $0x81] sm:$0xff]
        %v455 = vld [vmem:[%s442 + $0x91] sm:$0xff]
        %v456 = vld [vmem:[%s442 + $0x99] sm:$0xff]
        %v457 = vld [vmem:[%s442 + $0xa9] sm:$0xff]
        %v458 = vld [vmem:[%s442 + $0xb1] sm:$0xff]
        %v459 = vld [vmem:[%s442 + $0xc1] sm:$0xff]
        %v460 = vld [vmem:[%s442 + $0xc9] sm:$0xff]
        %v461 = vld [vmem:[%s442 + $0xd9] sm:$0xff]
        %v462 = vld [vmem:[%s442 + $0xe1] sm:$0xff]
        %v463 = vld [vmem:[%s442 + $0xf1] sm:$0xff]
        %v464 = vld [vmem:[%s442 + $0xf9] sm:$0xff]
        %v465 = vld [vmem:[%s442 + $0x109] sm:$0xff]
        %v466 = vld [vmem:[%s442 + $0x111] sm:$0xff]
        %v467 = vld [vmem:[%s442 + $0x121] sm:$0xff]
        %v468 = vld [vmem:[%s442 + $0x129] sm:$0xff]
        %v469 = vld [vmem:[%s442 + $0x139] sm:$0xff]
        %v470 = vld [vmem:[%s442 + $0x141] sm:$0xff]
        %v471 = vld [vmem:[%s442 + $0x151] sm:$0xff]
        %v472 = vld [vmem:[%s442 + $0x159] sm:$0xff]
        %v473 = vld [vmem:[%s442 + $0x169] sm:$0xff]
        %v474 = vld [vmem:[%s442 + $0x171] sm:$0xff]
        %v475 = vsel %vm386, %v443, 0.0
        %v476 = vsel %vm386, %v445, 0.0
        %v477 = vadd.f32 %v475, %v476
        %v478 = vsel %vm386, %v447, 0.0
        %v479 = vadd.f32 %v477, %v478
        %v480 = vsel %vm386, %v449, 0.0
        %v481 = vadd.f32 %v479, %v480
        %v482 = vsel %vm386, %v451, 0.0
        %v483 = vadd.f32 %v481, %v482
        %v484 = vsel %vm386, %v453, 0.0
        %v485 = vadd.f32 %v483, %v484
        %v486 = vsel %vm386, %v455, 0.0
        %v487 = vadd.f32 %v485, %v486
        %v488 = vsel %vm386, %v457, 0.0
        %v489 = vadd.f32 %v487, %v488
        %v490 = vsel %vm386, %v459, 0.0
        %v491 = vadd.f32 %v489, %v490
        %v492 = vsel %vm386, %v461, 0.0
        %v493 = vadd.f32 %v491, %v492
        %v494 = vsel %vm386, %v463, 0.0
        %v495 = vadd.f32 %v493, %v494
        %v496 = vsel %vm386, %v465, 0.0
        %v497 = vadd.f32 %v495, %v496
        %v498 = vsel %vm386, %v467, 0.0
        %v499 = vadd.f32 %v497, %v498
        %v500 = vsel %vm386, %v469, 0.0
        %v501 = vadd.f32 %v499, %v500
        %v502 = vsel %vm386, %v471, 0.0
        %v503 = vadd.f32 %v501, %v502
        %v504 = vsel %vm386, %v473, 0.0
        %v505 = vadd.f32 %v503, %v504
        %v506 = vsel %vm386, %v444, 0.0
        %v507 = vsel %vm386, %v446, 0.0
        %v508 = vadd.f32 %v506, %v507
        %v509 = vsel %vm386, %v448, 0.0
        %v510 = vadd.f32 %v508, %v509
        %v511 = vsel %vm386, %v450, 0.0
        %v512 = vadd.f32 %v510, %v511
        %v513 = vsel %vm386, %v452, 0.0
        %v514 = vadd.f32 %v512, %v513
        %v515 = vsel %vm386, %v454, 0.0
        %v516 = vadd.f32 %v514, %v515
        %v517 = vsel %vm386, %v456, 0.0
        %v518 = vadd.f32 %v516, %v517
        %v519 = vsel %vm386, %v458, 0.0
        %v520 = vadd.f32 %v518, %v519
        %v521 = vsel %vm386, %v460, 0.0
        %v522 = vadd.f32 %v520, %v521
        %v523 = vsel %vm386, %v462, 0.0
        %v524 = vadd.f32 %v522, %v523
        %v525 = vsel %vm386, %v464, 0.0
        %v526 = vadd.f32 %v524, %v525
        %v527 = vsel %vm386, %v466, 0.0
        %v528 = vadd.f32 %v526, %v527
        %v529 = vsel %vm386, %v468, 0.0
        %v530 = vadd.f32 %v528, %v529
        %v531 = vsel %vm386, %v470, 0.0
        %v532 = vadd.f32 %v530, %v531
        %v533 = vsel %vm386, %v472, 0.0
        %v534 = vadd.f32 %v532, %v533
        %v535 = vsel %vm386, %v474, 0.0
        %v536 = vadd.f32 %v534, %v535
        %v537 = vsel %vm386, %v505, 0.0
        %v538 = vsel %vm386, %v536, 0.0
        %v539 = vadd.f32 %v537, %v538
        %v540 = vrot.slane %v539, 4
        %v541 = vadd.f32 %v539, %v540
        %v542 = vrot.slane %v541, 2
        %v543 = vadd.f32 %v541, %v542
        %v544 = vrot.slane %v543, 1
        %v545 = vadd.f32 %v543, %v544
        %v546 = vmul.f32 %v545, 0.00390625
        %v547 = vsel %vm386, %v443, -inf
        %v548 = vsel %vm386, %v445, -inf
        %v549 = vsel %vm386, %v447, -inf
        %v550 = vmax.f32 %v547, %v549
        %v551 = vsel %vm386, %v449, -inf
        %v552 = vmax.f32 %v548, %v551
        %v553 = vsel %vm386, %v451, -inf
        %v554 = vmax.f32 %v550, %v553
        %v555 = vsel %vm386, %v453, -inf
        %v556 = vmax.f32 %v552, %v555
        %v557 = vsel %vm386, %v455, -inf
        %v558 = vmax.f32 %v554, %v557
        %v559 = vsel %vm386, %v457, -inf
        %v560 = vmax.f32 %v556, %v559
        %v561 = vsel %vm386, %v459, -inf
        %v562 = vmax.f32 %v558, %v561
        %v563 = vsel %vm386, %v461, -inf
        %v564 = vmax.f32 %v560, %v563
        %v565 = vsel %vm386, %v463, -inf
        %v566 = vmax.f32 %v562, %v565
        %v567 = vsel %vm386, %v465, -inf
        %v568 = vmax.f32 %v564, %v567
        %v569 = vsel %vm386, %v467, -inf
        %v570 = vmax.f32 %v566, %v569
        %v571 = vsel %vm386, %v469, -inf
        %v572 = vmax.f32 %v568, %v571
        %v573 = vsel %vm386, %v471, -inf
        %v574 = vmax.f32 %v570, %v573
        %v575 = vsel %vm386, %v473, -inf
        %v576 = vmax.f32 %v572, %v575
        %v577 = vmax.f32 %v574, %v576
        %v578 = vsel %vm386, %v444, -inf
        %v579 = vsel %vm386, %v446, -inf
        %v580 = vsel %vm386, %v448, -inf
        %v581 = vmax.f32 %v578, %v580
        %v582 = vsel %vm386, %v450, -inf
        %v583 = vmax.f32 %v579, %v582
        %v584 = vsel %vm386, %v452, -inf
        %v585 = vmax.f32 %v581, %v584
        %v586 = vsel %vm386, %v454, -inf
        %v587 = vmax.f32 %v583, %v586
        %v588 = vsel %vm386, %v456, -inf
        %v589 = vmax.f32 %v585, %v588
        %v590 = vsel %vm386, %v458, -inf
        %v591 = vmax.f32 %v587, %v590
        %v592 = vsel %vm386, %v460, -inf
        %v593 = vmax.f32 %v589, %v592
        %v594 = vsel %vm386, %v462, -inf
        %v595 = vmax.f32 %v591, %v594
        %v596 = vsel %vm386, %v464, -inf
        %v597 = vmax.f32 %v593, %v596
        %v598 = vsel %vm386, %v466, -inf
        %v599 = vmax.f32 %v595, %v598
        %v600 = vsel %vm386, %v468, -inf
        %v601 = vmax.f32 %v597, %v600
        %v602 = vsel %vm386, %v470, -inf
        %v603 = vmax.f32 %v599, %v602
        %v604 = vsel %vm386, %v472, -inf
        %v605 = vmax.f32 %v601, %v604
        %v606 = vsel %vm386, %v474, -inf
        %v607 = vmax.f32 %v603, %v606
        %v608 = vmax.f32 %v605, %v607
        %v609 = vsel %vm386, %v577, -inf
        %v610 = vsel %vm386, %v608, -inf
        %v611 = vmax.f32 %v609, %v610
        %v612 = vrot.slane %v611, 4
        %v613 = vmax.f32 %v611, %v612
        %v614 = vrot.slane %v613, 2
        %v615 = vmax.f32 %v613, %v614
        %v616 = vrot.slane %v615, 1
        %v617 = vmax.f32 %v615, %v616
        %619 = vrot.lane.b32.xlu0 %v617, 64
        %v620 = vpop.permute.xlu0 %619
        %v622 = vsel %vm386, %v546, %v620
        %v623 = vld [vmem:[%s1] sm:$0xff]
        %v624 = vld [vmem:[%s1 + $0x8] sm:$0xff]
        %v625 = vld [vmem:[%s1 + $0x10] sm:$0xff]
        %v626 = vld [vmem:[%s1 + $0x18] sm:$0xff]
        %v627 = vld [vmem:[%s1 + $0x20] sm:$0xff]
        %v628 = vld [vmem:[%s1 + $0x28] sm:$0xff]
        %v629 = vld [vmem:[%s1 + $0x30] sm:$0xff]
        %v630 = vld [vmem:[%s1 + $0x38] sm:$0xff]
        %v631 = vld [vmem:[%s1 + $0x40] sm:$0xff]
        %v632 = vld [vmem:[%s1 + $0x48] sm:$0xff]
        %v633 = vld [vmem:[%s1 + $0x50] sm:$0xff]
        %v634 = vld [vmem:[%s1 + $0x58] sm:$0xff]
        %v635 = vld [vmem:[%s1 + $0x60] sm:$0xff]
        %v636 = vld [vmem:[%s1 + $0x68] sm:$0xff]
        %v637 = vld [vmem:[%s1 + $0x70] sm:$0xff]
        %v638 = vld [vmem:[%s1 + $0x78] sm:$0xff]
        %v639 = vld [vmem:[%s2] sm:$0x1]
        %640 = vmatprep.subr.mxu0 0.0
        %641 = vmatpush1.msra.mxu0 %v623
        %642 = vmatprep.subr.mxu0 0.0
        %643 = vmatpush1.msra.mxu0 %v624
        %644 = vmatprep.subr.mxu0 0.0
        %645 = vmatpush1.msra.mxu0 %v625
        %646 = vmatprep.subr.mxu0 0.0
        %647 = vmatpush1.msra.mxu0 %v626
        %648 = vmatprep.subr.mxu0 0.0
        %649 = vmatpush1.msra.mxu0 %v627
        %650 = vmatprep.subr.mxu0 0.0
        %651 = vmatpush1.msra.mxu0 %v628
        %652 = vmatprep.subr.mxu0 0.0
        %653 = vmatpush1.msra.mxu0 %v629
        %654 = vmatprep.subr.mxu0 0.0
        %655 = vmatpush1.msra.mxu0 %v630
        %656 = vmatprep.subr.mxu0 0.0
        %657 = vmatpush1.msra.mxu0 %v631
        %658 = vmatprep.subr.mxu0 0.0
        %659 = vmatpush1.msra.mxu0 %v632
        %660 = vmatprep.subr.mxu0 0.0
        %661 = vmatpush1.msra.mxu0 %v633
        %662 = vmatprep.subr.mxu0 0.0
        %663 = vmatpush1.msra.mxu0 %v634
        %664 = vmatprep.subr.mxu0 0.0
        %665 = vmatpush1.msra.mxu0 %v635
        %666 = vmatprep.subr.mxu0 0.0
        %667 = vmatpush1.msra.mxu0 %v636
        %668 = vmatprep.subr.mxu0 0.0
        %669 = vmatpush1.msra.mxu0 %v637
        %670 = vmatprep.subr.mxu0 0.0
        %671 = vmatpush1.msra.mxu0 %v638
        %672 = vmatprep.subr.mxu0 0.0
        %673 = vmatpush1.msra.mxu0 0.0
        %674 = vmatprep.subr.mxu0 0.0
        %675 = vmatpush1.msra.mxu0 0.0
        %676 = vmatprep.subr.mxu0 0.0
        %677 = vmatpush1.msra.mxu0 0.0
        %678 = vmatprep.subr.mxu0 0.0
        %679 = vmatpush1.msra.mxu0 0.0
        %680 = vmatprep.subr.mxu0 0.0
        %681 = vmatpush1.msra.mxu0 0.0
        %682 = vmatprep.subr.mxu0 0.0
        %683 = vmatpush1.msra.mxu0 0.0
        %684 = vmatprep.subr.mxu0 0.0
        %685 = vmatpush1.msra.mxu0 0.0
        %686 = vmatprep.subr.mxu0 0.0
        %687 = vmatpush1.msra.mxu0 0.0
        %688 = vmatprep.subr.mxu0 0.0
        %689 = vmatpush1.msra.mxu0 0.0
        %690 = vmatprep.subr.mxu0 0.0
        %691 = vmatpush1.msra.mxu0 0.0
        %692 = vmatprep.subr.mxu0 0.0
        %693 = vmatpush1.msra.mxu0 0.0
        %694 = vmatprep.subr.mxu0 0.0
        %695 = vmatpush1.msra.mxu0 0.0
        %696 = vmatprep.subr.mxu0 0.0
        %697 = vmatpush1.msra.mxu0 0.0
        %698 = vmatprep.subr.mxu0 0.0
        %699 = vmatpush1.msra.mxu0 0.0
        %700 = vmatprep.subr.mxu0 0.0
        %701 = vmatpush1.msra.mxu0 0.0
        %702 = vmatprep.subr.mxu0 0.0
        %703 = vmatpush1.msra.mxu0 0.0
        %704 = vmatprep.mubr.f32.mxu0 0.0
        %705 = vmatmul.mubr.f32.gmra.mrb[0].mxu0 %v622
        %v706 = vpop.f32.mrb[0].mxu0
        %v707 = vadd.f32 %v639, %v706
        %v708 = vpop.f32.mrb[0].mxu0
        %709 = vdwg.mxu0
        %v710 = vmax.f32 %v707, 0.0
        %v711 = vld [vmem:[%s3] sm:$0xff]
        %v712 = vld [vmem:[%s4] sm:$0x1]
        %vm713 = vcmask 64512
        %v715 = vsel %vm713, %v710, 0
        %717 = vmatprep.subr.mxu0 0.0
        %718 = vmatpush1.msra.mxu0 %v711
        %719 = vmatprep.subr.mxu0 0.0
        %720 = vmatpush1.msra.mxu0 0.0
        %721 = vmatprep.subr.mxu0 0.0
        %722 = vmatpush1.msra.mxu0 0.0
        %723 = vmatprep.subr.mxu0 0.0
        %724 = vmatpush1.msra.mxu0 0.0
        %725 = vmatprep.subr.mxu0 0.0
        %726 = vmatpush1.msra.mxu0 0.0
        %727 = vmatprep.subr.mxu0 0.0
        %728 = vmatpush1.msra.mxu0 0.0
        %729 = vmatprep.subr.mxu0 0.0
        %730 = vmatpush1.msra.mxu0 0.0
        %731 = vmatprep.subr.mxu0 0.0
        %732 = vmatpush1.msra.mxu0 0.0
        %733 = vmatprep.subr.mxu0 0.0
        %734 = vmatpush1.msra.mxu0 0.0
        %735 = vmatprep.subr.mxu0 0.0
        %736 = vmatpush1.msra.mxu0 0.0
        %737 = vmatprep.subr.mxu0 0.0
        %738 = vmatpush1.msra.mxu0 0.0
        %739 = vmatprep.subr.mxu0 0.0
        %740 = vmatpush1.msra.mxu0 0.0
        %741 = vmatprep.subr.mxu0 0.0
        %742 = vmatpush1.msra.mxu0 0.0
        %743 = vmatprep.subr.mxu0 0.0
        %744 = vmatpush1.msra.mxu0 0.0
        %745 = vmatprep.subr.mxu0 0.0
        %746 = vmatpush1.msra.mxu0 0.0
        %747 = vmatprep.subr.mxu0 0.0
        %748 = vmatpush1.msra.mxu0 0.0
        %749 = vmatprep.subr.mxu0 0.0
        %750 = vmatpush1.msra.mxu0 0.0
        %751 = vmatprep.subr.mxu0 0.0
        %752 = vmatpush1.msra.mxu0 0.0
        %753 = vmatprep.subr.mxu0 0.0
        %754 = vmatpush1.msra.mxu0 0.0
        %755 = vmatprep.subr.mxu0 0.0
        %756 = vmatpush1.msra.mxu0 0.0
        %757 = vmatprep.subr.mxu0 0.0
        %758 = vmatpush1.msra.mxu0 0.0
        %759 = vmatprep.subr.mxu0 0.0
        %760 = vmatpush1.msra.mxu0 0.0
        %761 = vmatprep.subr.mxu0 0.0
        %762 = vmatpush1.msra.mxu0 0.0
        %763 = vmatprep.subr.mxu0 0.0
        %764 = vmatpush1.msra.mxu0 0.0
        %765 = vmatprep.subr.mxu0 0.0
        %766 = vmatpush1.msra.mxu0 0.0
        %767 = vmatprep.subr.mxu0 0.0
        %768 = vmatpush1.msra.mxu0 0.0
        %769 = vmatprep.subr.mxu0 0.0
        %770 = vmatpush1.msra.mxu0 0.0
        %771 = vmatprep.subr.mxu0 0.0
        %772 = vmatpush1.msra.mxu0 0.0
        %773 = vmatprep.subr.mxu0 0.0
        %774 = vmatpush1.msra.mxu0 0.0
        %775 = vmatprep.subr.mxu0 0.0
        %776 = vmatpush1.msra.mxu0 0.0
        %777 = vmatprep.subr.mxu0 0.0
        %778 = vmatpush1.msra.mxu0 0.0
        %779 = vmatprep.subr.mxu0 0.0
        %780 = vmatpush1.msra.mxu0 0.0
        %781 = vmatprep.mubr.f32.mxu0 0.0
        %782 = vmatmul.mubr.f32.gmra.mrb[0].mxu0 %v715
        %v783 = vpop.f32.mrb[0].mxu0
        %v784 = vadd.f32 %v712, %v783
        %v785 = vpop.f32.mrb[0].mxu0
        %786 = vdwg.mxu0
        %v787 = vsub.f32 0.0, %v784
        %v788 = vmul.f32 %v787, 1.442695
        %v789 = vpow.pop %v788
        %v790 = vadd.f32 %v789, 1.0
        %v791 = vrcp.pop %v790
        %v792 = vmul.f32 1.0, %v791
        %794 = vrot.lane.b32.xlu0 %v792, 64
        %v795 = vpop.permute.xlu0 %794
        %v797 = vadd.f32 %v792, %v795
        %v798 = vld [vmem:[#allocation2] sm:$0xff]
        %v799 = vld [vmem:[#allocation2 + $0x8] sm:$0xff]
        %v800 = vld [vmem:[#allocation2 + $0x10] sm:$0x3]
        %v801 = vld [vmem:[#allocation2 + $0x18] sm:$0xff]
        %v802 = vld [vmem:[#allocation2 + $0x20] sm:$0xff]
        %v803 = vld [vmem:[#allocation2 + $0x28] sm:$0x3]
        %v804 = vld [vmem:[#allocation2 + $0x30] sm:$0xff]
        %v805 = vld [vmem:[#allocation2 + $0x38] sm:$0xff]
        %v806 = vld [vmem:[#allocation2 + $0x40] sm:$0x3]
        %v807 = vld [vmem:[#allocation2 + $0x48] sm:$0xff]
        %v808 = vld [vmem:[#allocation2 + $0x50] sm:$0xff]
        %v809 = vld [vmem:[#allocation2 + $0x58] sm:$0x3]
        %v810 = vld [vmem:[#allocation2 + $0x60] sm:$0xff]
        %v811 = vld [vmem:[#allocation2 + $0x68] sm:$0xff]
        %v812 = vld [vmem:[#allocation2 + $0x70] sm:$0x3]
        %v813 = vld [vmem:[#allocation2 + $0x78] sm:$0xff]
        %v814 = vld [vmem:[#allocation2 + $0x80] sm:$0xff]
        %v815 = vld [vmem:[#allocation2 + $0x88] sm:$0x3]
        %v816 = vld [vmem:[#allocation2 + $0x90] sm:$0xff]
        %v817 = vld [vmem:[#allocation2 + $0x98] sm:$0xff]
        %v818 = vld [vmem:[#allocation2 + $0xa0] sm:$0x3]
        %v819 = vld [vmem:[#allocation2 + $0xa8] sm:$0xff]
        %v820 = vld [vmem:[#allocation2 + $0xb0] sm:$0xff]
        %v821 = vld [vmem:[#allocation2 + $0xb8] sm:$0x3]
        %v822 = vld [vmem:[#allocation2 + $0xc0] sm:$0xff]
        %v823 = vld [vmem:[#allocation2 + $0xc8] sm:$0xff]
        %v824 = vld [vmem:[#allocation2 + $0xd0] sm:$0x3]
        %v825 = vld [vmem:[#allocation2 + $0xd8] sm:$0xff]
        %v826 = vld [vmem:[#allocation2 + $0xe0] sm:$0xff]
        %v827 = vld [vmem:[#allocation2 + $0xe8] sm:$0x3]
        %v828 = vld [vmem:[#allocation2 + $0xf0] sm:$0xff]
        %v829 = vld [vmem:[#allocation2 + $0xf8] sm:$0xff]
        %v830 = vld [vmem:[#allocation2 + $0x100] sm:$0x3]
        %v831 = vld [vmem:[#allocation2 + $0x108] sm:$0xff]
        %v832 = vld [vmem:[#allocation2 + $0x110] sm:$0xff]
        %v833 = vld [vmem:[#allocation2 + $0x118] sm:$0x3]
        %v834 = vld [vmem:[#allocation2 + $0x120] sm:$0xff]
        %v835 = vld [vmem:[#allocation2 + $0x128] sm:$0xff]
        %v836 = vld [vmem:[#allocation2 + $0x130] sm:$0x3]
        %v837 = vld [vmem:[#allocation2 + $0x138] sm:$0xff]
        %v838 = vld [vmem:[#allocation2 + $0x140] sm:$0xff]
        %v839 = vld [vmem:[#allocation2 + $0x148] sm:$0x3]
        %v840 = vld [vmem:[#allocation2 + $0x150] sm:$0xff]
        %v841 = vld [vmem:[#allocation2 + $0x158] sm:$0xff]
        %v842 = vld [vmem:[#allocation2 + $0x160] sm:$0x3]
        %v843 = vld [vmem:[#allocation2 + $0x168] sm:$0xff]
        %v844 = vld [vmem:[#allocation2 + $0x170] sm:$0xff]
        %v845 = vld [vmem:[#allocation2 + $0x178] sm:$0x3]
        %v846 = vld [vmem:[#allocation2 + $0x180] sm:$0xff]
        %v847 = vld [vmem:[#allocation2 + $0x188] sm:$0xff]
        %v848 = vld [vmem:[#allocation2 + $0x190] sm:$0x3]
        %v849 = vld [vmem:[#allocation2 + $0x198] sm:$0xff]
        %v850 = vld [vmem:[#allocation2 + $0x1a0] sm:$0xff]
        %v851 = vld [vmem:[#allocation2 + $0x1a8] sm:$0x3]
        %v852 = vlaneseq
        %v853 = vshrl.u32 %v852, 7
        %v854 = vsub.s32 0, %v853
        %v855 = vrot.slane %v797, %v854
        %v856 = vmul.f32 %v798, %v855
        %v857 = vmul.f32 %v799, %v855
        %v858 = vmul.f32 %v800, %v855
        %v859 = vmul.f32 %v801, %v855
        %v860 = vmul.f32 %v802, %v855
        %v861 = vmul.f32 %v803, %v855
        %v862 = vmul.f32 %v804, %v855
        %v863 = vmul.f32 %v805, %v855
        %v864 = vmul.f32 %v806, %v855
        %v865 = vmul.f32 %v807, %v855
        %v866 = vmul.f32 %v808, %v855
        %v867 = vmul.f32 %v809, %v855
        %v868 = vmul.f32 %v810, %v855
        %v869 = vmul.f32 %v811, %v855
        %v870 = vmul.f32 %v812, %v855
        %v871 = vmul.f32 %v813, %v855
        %v872 = vmul.f32 %v814, %v855
        %v873 = vmul.f32 %v815, %v855
        %v874 = vmul.f32 %v816, %v855
        %v875 = vmul.f32 %v817, %v855
        %v876 = vmul.f32 %v818, %v855
        %v877 = vmul.f32 %v819, %v855
        %v878 = vmul.f32 %v820, %v855
        %v879 = vmul.f32 %v821, %v855
        %v880 = vmul.f32 %v822, %v855
        %v881 = vmul.f32 %v823, %v855
        %v882 = vmul.f32 %v824, %v855
        %v883 = vmul.f32 %v825, %v855
        %v884 = vmul.f32 %v826, %v855
        %v885 = vmul.f32 %v827, %v855
        %v886 = vmul.f32 %v828, %v855
        %v887 = vmul.f32 %v829, %v855
        %v888 = vmul.f32 %v830, %v855
        %v889 = vmul.f32 %v831, %v855
        %v890 = vmul.f32 %v832, %v855
        %v891 = vmul.f32 %v833, %v855
        %v892 = vmul.f32 %v834, %v855
        %v893 = vmul.f32 %v835, %v855
        %v894 = vmul.f32 %v836, %v855
        %v895 = vmul.f32 %v837, %v855
        %v896 = vmul.f32 %v838, %v855
        %v897 = vmul.f32 %v839, %v855
        %v898 = vmul.f32 %v840, %v855
        %v899 = vmul.f32 %v841, %v855
        %v900 = vmul.f32 %v842, %v855
        %v901 = vmul.f32 %v843, %v855
        %v902 = vmul.f32 %v844, %v855
        %v903 = vmul.f32 %v845, %v855
        %v904 = vmul.f32 %v846, %v855
        %v905 = vmul.f32 %v847, %v855
        %v906 = vmul.f32 %v848, %v855
        %v907 = vmul.f32 %v849, %v855
        %v908 = vmul.f32 %v850, %v855
        %v909 = vmul.f32 %v851, %v855
        %910 = vst.msk [vmem:[#allocation2] sm:$0xff] %vm386, %v856
        %911 = vst.msk [vmem:[#allocation2 + $0x8] sm:$0xff] %vm386, %v857
        %912 = vst.msk [vmem:[#allocation2 + $0x10] sm:$0x3] %vm389, %v858
        %913 = vst.msk [vmem:[#allocation2 + $0x18] sm:$0xff] %vm386, %v859
        %914 = vst.msk [vmem:[#allocation2 + $0x20] sm:$0xff] %vm386, %v860
        %915 = vst.msk [vmem:[#allocation2 + $0x28] sm:$0x3] %vm389, %v861
        %916 = vst.msk [vmem:[#allocation2 + $0x30] sm:$0xff] %vm386, %v862
        %917 = vst.msk [vmem:[#allocation2 + $0x38] sm:$0xff] %vm386, %v863
        %918 = vst.msk [vmem:[#allocation2 + $0x40] sm:$0x3] %vm389, %v864
        %919 = vst.msk [vmem:[#allocation2 + $0x48] sm:$0xff] %vm386, %v865
        %920 = vst.msk [vmem:[#allocation2 + $0x50] sm:$0xff] %vm386, %v866
        %921 = vst.msk [vmem:[#allocation2 + $0x58] sm:$0x3] %vm389, %v867
        %922 = vst.msk [vmem:[#allocation2 + $0x60] sm:$0xff] %vm386, %v868
        %923 = vst.msk [vmem:[#allocation2 + $0x68] sm:$0xff] %vm386, %v869
        %924 = vst.msk [vmem:[#allocation2 + $0x70] sm:$0x3] %vm389, %v870
        %925 = vst.msk [vmem:[#allocation2 + $0x78] sm:$0xff] %vm386, %v871
        %926 = vst.msk [vmem:[#allocation2 + $0x80] sm:$0xff] %vm386, %v872
        %927 = vst.msk [vmem:[#allocation2 + $0x88] sm:$0x3] %vm389, %v873
        %928 = vst.msk [vmem:[#allocation2 + $0x90] sm:$0xff] %vm386, %v874
        %929 = vst.msk [vmem:[#allocation2 + $0x98] sm:$0xff] %vm386, %v875
        %930 = vst.msk [vmem:[#allocation2 + $0xa0] sm:$0x3] %vm389, %v876
        %931 = vst.msk [vmem:[#allocation2 + $0xa8] sm:$0xff] %vm386, %v877
        %932 = vst.msk [vmem:[#allocation2 + $0xb0] sm:$0xff] %vm386, %v878
        %933 = vst.msk [vmem:[#allocation2 + $0xb8] sm:$0x3] %vm389, %v879
        %934 = vst.msk [vmem:[#allocation2 + $0xc0] sm:$0xff] %vm386, %v880
        %935 = vst.msk [vmem:[#allocation2 + $0xc8] sm:$0xff] %vm386, %v881
        %936 = vst.msk [vmem:[#allocation2 + $0xd0] sm:$0x3] %vm389, %v882
        %937 = vst.msk [vmem:[#allocation2 + $0xd8] sm:$0xff] %vm386, %v883
        %938 = vst.msk [vmem:[#allocation2 + $0xe0] sm:$0xff] %vm386, %v884
        %939 = vst.msk [vmem:[#allocation2 + $0xe8] sm:$0x3] %vm389, %v885
        %940 = vst.msk [vmem:[#allocation2 + $0xf0] sm:$0xff] %vm386, %v886
        %941 = vst.msk [vmem:[#allocation2 + $0xf8] sm:$0xff] %vm386, %v887
        %942 = vst.msk [vmem:[#allocation2 + $0x100] sm:$0x3] %vm389, %v888
        %943 = vst.msk [vmem:[#allocation2 + $0x108] sm:$0xff] %vm386, %v889
        %944 = vst.msk [vmem:[#allocation2 + $0x110] sm:$0xff] %vm386, %v890
        %945 = vst.msk [vmem:[#allocation2 + $0x118] sm:$0x3] %vm389, %v891
        %946 = vst.msk [vmem:[#allocation2 + $0x120] sm:$0xff] %vm386, %v892
        %947 = vst.msk [vmem:[#allocation2 + $0x128] sm:$0xff] %vm386, %v893
        %948 = vst.msk [vmem:[#allocation2 + $0x130] sm:$0x3] %vm389, %v894
        %949 = vst.msk [vmem:[#allocation2 + $0x138] sm:$0xff] %vm386, %v895
        %950 = vst.msk [vmem:[#allocation2 + $0x140] sm:$0xff] %vm386, %v896
        %951 = vst.msk [vmem:[#allocation2 + $0x148] sm:$0x3] %vm389, %v897
        %952 = vst.msk [vmem:[#allocation2 + $0x150] sm:$0xff] %vm386, %v898
        %953 = vst.msk [vmem:[#allocation2 + $0x158] sm:$0xff] %vm386, %v899
        %954 = vst.msk [vmem:[#allocation2 + $0x160] sm:$0x3] %vm389, %v900
        %955 = vst.msk [vmem:[#allocation2 + $0x168] sm:$0xff] %vm386, %v901
        %956 = vst.msk [vmem:[#allocation2 + $0x170] sm:$0xff] %vm386, %v902
        %957 = vst.msk [vmem:[#allocation2 + $0x178] sm:$0x3] %vm389, %v903
        %958 = vst.msk [vmem:[#allocation2 + $0x180] sm:$0xff] %vm386, %v904
        %959 = vst.msk [vmem:[#allocation2 + $0x188] sm:$0xff] %vm386, %v905
        %960 = vst.msk [vmem:[#allocation2 + $0x190] sm:$0x3] %vm389, %v906
        %961 = vst.msk [vmem:[#allocation2 + $0x198] sm:$0xff] %vm386, %v907
        %962 = vst.msk [vmem:[#allocation2 + $0x1a0] sm:$0xff] %vm386, %v908
        %963 = vst.msk [vmem:[#allocation2 + $0x1a8] sm:$0x3] %vm389, %v909
        %v964 = vld [vmem:[#allocation2] sm:$0xff]
        %v965 = vld [vmem:[#allocation2 + $0x8] sm:$0xff]
        %v966 = vld [vmem:[#allocation2 + $0x18] sm:$0xff]
        %v967 = vld [vmem:[#allocation2 + $0x20] sm:$0xff]
        %v968 = vld [vmem:[#allocation2 + $0x30] sm:$0xff]
        %v969 = vld [vmem:[#allocation2 + $0x38] sm:$0xff]
        %v970 = vld [vmem:[#allocation2 + $0x48] sm:$0xff]
        %v971 = vld [vmem:[#allocation2 + $0x50] sm:$0xff]
        %v972 = vld [vmem:[#allocation2 + $0x60] sm:$0xff]
        %v973 = vld [vmem:[#allocation2 + $0x68] sm:$0xff]
        %v974 = vld [vmem:[#allocation2 + $0x78] sm:$0xff]
        %v975 = vld [vmem:[#allocation2 + $0x80] sm:$0xff]
        %v976 = vld [vmem:[#allocation2 + $0x90] sm:$0xff]
        %v977 = vld [vmem:[#allocation2 + $0x98] sm:$0xff]
        %v978 = vld [vmem:[#allocation2 + $0xa8] sm:$0xff]
        %v979 = vld [vmem:[#allocation2 + $0xb0] sm:$0xff]
        %v980 = vld [vmem:[#allocation2 + $0xc0] sm:$0xff]
        %v981 = vld [vmem:[#allocation2 + $0xc8] sm:$0xff]
        %v982 = vld [vmem:[#allocation2 + $0xd8] sm:$0xff]
        %v983 = vld [vmem:[#allocation2 + $0xe0] sm:$0xff]
        %v984 = vld [vmem:[#allocation2 + $0xf0] sm:$0xff]
        %v985 = vld [vmem:[#allocation2 + $0xf8] sm:$0xff]
        %v986 = vld [vmem:[#allocation2 + $0x108] sm:$0xff]
        %v987 = vld [vmem:[#allocation2 + $0x110] sm:$0xff]
        %v988 = vld [vmem:[#allocation2 + $0x120] sm:$0xff]
        %v989 = vld [vmem:[#allocation2 + $0x128] sm:$0xff]
        %v990 = vld [vmem:[#allocation2 + $0x138] sm:$0xff]
        %v991 = vld [vmem:[#allocation2 + $0x140] sm:$0xff]
        %v992 = vld [vmem:[#allocation2 + $0x150] sm:$0xff]
        %v993 = vld [vmem:[#allocation2 + $0x158] sm:$0xff]
        %v994 = vld [vmem:[#allocation2 + $0x168] sm:$0xff]
        %v995 = vld [vmem:[#allocation2 + $0x170] sm:$0xff]
        %v996 = vpack.c.bf16 %v965, %v964
        %v997 = vpack.c.bf16 %v967, %v966
        %v998 = vpack.c.bf16 %v969, %v968
        %v999 = vpack.c.bf16 %v971, %v970
        %v1000 = vpack.c.bf16 %v973, %v972
        %v1001 = vpack.c.bf16 %v975, %v974
        %v1002 = vpack.c.bf16 %v977, %v976
        %v1003 = vpack.c.bf16 %v979, %v978
        %v1004 = vpack.c.bf16 %v981, %v980
        %v1005 = vpack.c.bf16 %v983, %v982
        %v1006 = vpack.c.bf16 %v985, %v984
        %v1007 = vpack.c.bf16 %v987, %v986
        %v1008 = vpack.c.bf16 %v989, %v988
        %v1009 = vpack.c.bf16 %v991, %v990
        %v1010 = vpack.c.bf16 %v993, %v992
        %v1011 = vpack.c.bf16 %v995, %v994
        %v1012 = vld [vmem:[%s5] sm:$0xf]
        %v1013 = vld [vmem:[%s5 + $0x4] sm:$0xf]
        %v1014 = vld [vmem:[%s5 + $0x8] sm:$0xf]
        %v1015 = vld [vmem:[%s5 + $0xc] sm:$0xf]
        %v1016 = vld [vmem:[%s5 + $0x10] sm:$0xf]
        %v1017 = vld [vmem:[%s5 + $0x14] sm:$0xf]
        %v1018 = vld [vmem:[%s5 + $0x18] sm:$0xf]
        %v1019 = vld [vmem:[%s5 + $0x1c] sm:$0xf]
        %v1028 = vunpack.c.l.b16 %v1012
        %v1029 = vunpack.c.l.b16 %v1013
        %v1030 = vunpack.c.l.b16 %v1014
        %v1031 = vunpack.c.l.b16 %v1015
        %v1032 = vunpack.c.l.b16 %v1016
        %v1033 = vunpack.c.l.b16 %v1017
        %v1034 = vunpack.c.l.b16 %v1018
        %v1035 = vunpack.c.l.b16 %v1019
        %v1036 = vpack.c.b16 %v1029, %v1028
        %v1037 = vpack.c.b16 %v1031, %v1030
        %v1038 = vpack.c.b16 %v1033, %v1032
        %v1039 = vpack.c.b16 %v1035, %v1034
        %v1045 = vsel %vm386, %v996, 0
        %v1048 = vsel %vm386, %v997, 0
        %v1051 = vsel %vm386, %v998, 0
        %v1054 = vsel %vm386, %v999, 0
        %v1057 = vsel %vm386, %v1000, 0
        %v1060 = vsel %vm386, %v1001, 0
        %v1063 = vsel %vm386, %v1002, 0
        %v1066 = vsel %vm386, %v1003, 0
        %v1069 = vsel %vm386, %v1004, 0
        %v1072 = vsel %vm386, %v1005, 0
        %v1075 = vsel %vm386, %v1006, 0
        %v1078 = vsel %vm386, %v1007, 0
        %v1081 = vsel %vm386, %v1008, 0
        %v1084 = vsel %vm386, %v1009, 0
        %v1087 = vsel %vm386, %v1010, 0
        %v1090 = vsel %vm386, %v1011, 0
        %1092 = vmatprep.subr.bf16.mxu0 0
        %1093 = vmatpush1.bf16.msra.mxu0 %v1036
        %1094 = vmatprep.subr.bf16.mxu0 0
        %1095 = vmatpush1.bf16.msra.mxu0 %v1037
        %1096 = vmatprep.subr.bf16.mxu0 0
        %1097 = vmatpush1.bf16.msra.mxu0 %v1038
        %1098 = vmatprep.subr.bf16.mxu0 0
        %1099 = vmatpush1.bf16.msra.mxu0 %v1039
        %1100 = vmatprep.subr.bf16.mxu0 0
        %1101 = vmatpush1.bf16.msra.mxu0 0
        %1102 = vmatprep.subr.bf16.mxu0 0
        %1103 = vmatpush1.bf16.msra.mxu0 0
        %1104 = vmatprep.subr.bf16.mxu0 0
        %1105 = vmatpush1.bf16.msra.mxu0 0
        %1106 = vmatprep.subr.bf16.mxu0 0
        %1107 = vmatpush1.bf16.msra.mxu0 0
        %1108 = vmatprep.subr.bf16.mxu0 0
        %1109 = vmatpush1.bf16.msra.mxu0 0
        %1110 = vmatprep.subr.bf16.mxu0 0
        %1111 = vmatpush1.bf16.msra.mxu0 0
        %1112 = vmatprep.subr.bf16.mxu0 0
        %1113 = vmatpush1.bf16.msra.mxu0 0
        %1114 = vmatprep.subr.bf16.mxu0 0
        %1115 = vmatpush1.bf16.msra.mxu0 0
        %1116 = vmatprep.subr.bf16.mxu0 0
        %1117 = vmatpush1.bf16.msra.mxu0 0
        %1118 = vmatprep.subr.bf16.mxu0 0
        %1119 = vmatpush1.bf16.msra.mxu0 0
        %1120 = vmatprep.subr.bf16.mxu0 0
        %1121 = vmatpush1.bf16.msra.mxu0 0
        %1122 = vmatprep.subr.bf16.mxu0 0
        %1123 = vmatpush1.bf16.msra.mxu0 0
        %1124 = vmatprep.mubr.bf16.mxu0 0
        %1125 = vmatmul.mubr.bf16.gmra.mrb[0].mxu0 %v1045
        %v1126 = vpop.f32.mrb[0].mxu0
        %v1127 = vadd.f32 0.0, %v1126
        %v1128 = vpop.f32.mrb[0].mxu0
        %v1129 = vpop.f32.mrb[0].mxu0
        %v1130 = vadd.f32 0.0, %v1129
        %v1131 = vpop.f32.mrb[0].mxu0
        %1132 = vmatprep.mubr.bf16.mxu0 0
        %1133 = vmatmul.mubr.bf16.gmra.mrb[0].mxu0 %v1048
        %v1134 = vpop.f32.mrb[0].mxu0
        %v1135 = vadd.f32 0.0, %v1134
        %v1136 = vpop.f32.mrb[0].mxu0
        %v1137 = vpop.f32.mrb[0].mxu0
        %v1138 = vadd.f32 0.0, %v1137
        %v1139 = vpop.f32.mrb[0].mxu0
        %1140 = vmatprep.mubr.bf16.mxu0 0
        %1141 = vmatmul.mubr.bf16.gmra.mrb[0].mxu0 %v1051
        %v1142 = vpop.f32.mrb[0].mxu0
        %v1143 = vadd.f32 0.0, %v1142
        %v1144 = vpop.f32.mrb[0].mxu0
        %v1145 = vpop.f32.mrb[0].mxu0
        %v1146 = vadd.f32 0.0, %v1145
        %v1147 = vpop.f32.mrb[0].mxu0
        %1148 = vmatprep.mubr.bf16.mxu0 0
        %1149 = vmatmul.mubr.bf16.gmra.mrb[0].mxu0 %v1054
        %v1150 = vpop.f32.mrb[0].mxu0
        %v1151 = vadd.f32 0.0, %v1150
        %v1152 = vpop.f32.mrb[0].mxu0
        %v1153 = vpop.f32.mrb[0].mxu0
        %v1154 = vadd.f32 0.0, %v1153
        %v1155 = vpop.f32.mrb[0].mxu0
        %1156 = vmatprep.mubr.bf16.mxu0 0
        %1157 = vmatmul.mubr.bf16.gmra.mrb[0].mxu0 %v1057
        %v1158 = vpop.f32.mrb[0].mxu0
        %v1159 = vadd.f32 0.0, %v1158
        %v1160 = vpop.f32.mrb[0].mxu0
        %v1161 = vpop.f32.mrb[0].mxu0
        %v1162 = vadd.f32 0.0, %v1161
        %v1163 = vpop.f32.mrb[0].mxu0
        %1164 = vmatprep.mubr.bf16.mxu0 0
        %1165 = vmatmul.mubr.bf16.gmra.mrb[0].mxu0 %v1060
        %v1166 = vpop.f32.mrb[0].mxu0
        %v1167 = vadd.f32 0.0, %v1166
        %v1168 = vpop.f32.mrb[0].mxu0
        %v1169 = vpop.f32.mrb[0].mxu0
        %v1170 = vadd.f32 0.0, %v1169
        %v1171 = vpop.f32.mrb[0].mxu0
        %1172 = vmatprep.mubr.bf16.mxu0 0
        %1173 = vmatmul.mubr.bf16.gmra.mrb[0].mxu0 %v1063
        %v1174 = vpop.f32.mrb[0].mxu0
        %v1175 = vadd.f32 0.0, %v1174
        %v1176 = vpop.f32.mrb[0].mxu0
        %v1177 = vpop.f32.mrb[0].mxu0
        %v1178 = vadd.f32 0.0, %v1177
        %v1179 = vpop.f32.mrb[0].mxu0
        %1180 = vmatprep.mubr.bf16.mxu0 0
        %1181 = vmatmul.mubr.bf16.gmra.mrb[0].mxu0 %v1066
        %v1182 = vpop.f32.mrb[0].mxu0
        %v1183 = vadd.f32 0.0, %v1182
        %v1184 = vpop.f32.mrb[0].mxu0
        %v1185 = vpop.f32.mrb[0].mxu0
        %v1186 = vadd.f32 0.0, %v1185
        %v1187 = vpop.f32.mrb[0].mxu0
        %1188 = vmatprep.mubr.bf16.mxu0 0
        %1189 = vmatmul.mubr.bf16.gmra.mrb[0].mxu0 %v1069
        %v1190 = vpop.f32.mrb[0].mxu0
        %v1191 = vadd.f32 0.0, %v1190
        %v1192 = vpop.f32.mrb[0].mxu0
        %v1193 = vpop.f32.mrb[0].mxu0
        %v1194 = vadd.f32 0.0, %v1193
        %v1195 = vpop.f32.mrb[0].mxu0
        %1196 = vmatprep.mubr.bf16.mxu0 0
        %1197 = vmatmul.mubr.bf16.gmra.mrb[0].mxu0 %v1072
        %v1198 = vpop.f32.mrb[0].mxu0
        %v1199 = vadd.f32 0.0, %v1198
        %v1200 = vpop.f32.mrb[0].mxu0
        %v1201 = vpop.f32.mrb[0].mxu0
        %v1202 = vadd.f32 0.0, %v1201
        %v1203 = vpop.f32.mrb[0].mxu0
        %1204 = vmatprep.mubr.bf16.mxu0 0
        %1205 = vmatmul.mubr.bf16.gmra.mrb[0].mxu0 %v1075
        %v1206 = vpop.f32.mrb[0].mxu0
        %v1207 = vadd.f32 0.0, %v1206
        %v1208 = vpop.f32.mrb[0].mxu0
        %v1209 = vpop.f32.mrb[0].mxu0
        %v1210 = vadd.f32 0.0, %v1209
        %v1211 = vpop.f32.mrb[0].mxu0
        %1212 = vmatprep.mubr.bf16.mxu0 0
        %1213 = vmatmul.mubr.bf16.gmra.mrb[0].mxu0 %v1078
        %v1214 = vpop.f32.mrb[0].mxu0
        %v1215 = vadd.f32 0.0, %v1214
        %v1216 = vpop.f32.mrb[0].mxu0
        %v1217 = vpop.f32.mrb[0].mxu0
        %v1218 = vadd.f32 0.0, %v1217
        %v1219 = vpop.f32.mrb[0].mxu0
        %1220 = vmatprep.mubr.bf16.mxu0 0
        %1221 = vmatmul.mubr.bf16.gmra.mrb[0].mxu0 %v1081
        %v1222 = vpop.f32.mrb[0].mxu0
        %v1223 = vadd.f32 0.0, %v1222
        %v1224 = vpop.f32.mrb[0].mxu0
        %v1225 = vpop.f32.mrb[0].mxu0
        %v1226 = vadd.f32 0.0, %v1225
        %v1227 = vpop.f32.mrb[0].mxu0
        %1228 = vmatprep.mubr.bf16.mxu0 0
        %1229 = vmatmul.mubr.bf16.gmra.mrb[0].mxu0 %v1084
        %v1230 = vpop.f32.mrb[0].mxu0
        %v1231 = vadd.f32 0.0, %v1230
        %v1232 = vpop.f32.mrb[0].mxu0
        %v1233 = vpop.f32.mrb[0].mxu0
        %v1234 = vadd.f32 0.0, %v1233
        %v1235 = vpop.f32.mrb[0].mxu0
        %1236 = vmatprep.mubr.bf16.mxu0 0
        %1237 = vmatmul.mubr.bf16.gmra.mrb[0].mxu0 %v1087
        %v1238 = vpop.f32.mrb[0].mxu0
        %v1239 = vadd.f32 0.0, %v1238
        %v1240 = vpop.f32.mrb[0].mxu0
        %v1241 = vpop.f32.mrb[0].mxu0
        %v1242 = vadd.f32 0.0, %v1241
        %v1243 = vpop.f32.mrb[0].mxu0
        %1244 = vmatprep.mubr.bf16.mxu0 0
        %1245 = vmatmul.mubr.bf16.gmra.mrb[0].mxu0 %v1090
        %v1246 = vpop.f32.mrb[0].mxu0
        %v1247 = vadd.f32 0.0, %v1246
        %v1248 = vpop.f32.mrb[0].mxu0
        %v1249 = vpop.f32.mrb[0].mxu0
        %v1250 = vadd.f32 0.0, %v1249
        %v1251 = vpop.f32.mrb[0].mxu0
        %1252 = vdwg.mxu0
        %1253 = vst [vmem:[%s271] sm:$0xff] %v1127
        %1254 = vst [vmem:[%s271 + $0x8] sm:$0xff] %v1130
        %1255 = vst [vmem:[%s271 + $0x10] sm:$0xff] %v1135
        %1256 = vst [vmem:[%s271 + $0x18] sm:$0xff] %v1138
        %1257 = vst [vmem:[%s271 + $0x20] sm:$0xff] %v1143
        %1258 = vst [vmem:[%s271 + $0x28] sm:$0xff] %v1146
        %1259 = vst [vmem:[%s271 + $0x30] sm:$0xff] %v1151
        %1260 = vst [vmem:[%s271 + $0x38] sm:$0xff] %v1154
        %1261 = vst [vmem:[%s271 + $0x40] sm:$0xff] %v1159
        %1262 = vst [vmem:[%s271 + $0x48] sm:$0xff] %v1162
        %1263 = vst [vmem:[%s271 + $0x50] sm:$0xff] %v1167
        %1264 = vst [vmem:[%s271 + $0x58] sm:$0xff] %v1170
        %1265 = vst [vmem:[%s271 + $0x60] sm:$0xff] %v1175
        %1266 = vst [vmem:[%s271 + $0x68] sm:$0xff] %v1178
        %1267 = vst [vmem:[%s271 + $0x70] sm:$0xff] %v1183
        %1268 = vst [vmem:[%s271 + $0x78] sm:$0xff] %v1186
        %1269 = vst [vmem:[%s271 + $0x80] sm:$0xff] %v1191
        %1270 = vst [vmem:[%s271 + $0x88] sm:$0xff] %v1194
        %1271 = vst [vmem:[%s271 + $0x90] sm:$0xff] %v1199
        %1272 = vst [vmem:[%s271 + $0x98] sm:$0xff] %v1202
        %1273 = vst [vmem:[%s271 + $0xa0] sm:$0xff] %v1207
        %1274 = vst [vmem:[%s271 + $0xa8] sm:$0xff] %v1210
        %1275 = vst [vmem:[%s271 + $0xb0] sm:$0xff] %v1215
        %1276 = vst [vmem:[%s271 + $0xb8] sm:$0xff] %v1218
        %1277 = vst [vmem:[%s271 + $0xc0] sm:$0xff] %v1223
        %1278 = vst [vmem:[%s271 + $0xc8] sm:$0xff] %v1226
        %1279 = vst [vmem:[%s271 + $0xd0] sm:$0xff] %v1231
        %1280 = vst [vmem:[%s271 + $0xd8] sm:$0xff] %v1234
        %1281 = vst [vmem:[%s271 + $0xe0] sm:$0xff] %v1239
        %1282 = vst [vmem:[%s271 + $0xe8] sm:$0xff] %v1242
        %1283 = vst [vmem:[%s271 + $0xf0] sm:$0xff] %v1247
        %1284 = vst [vmem:[%s271 + $0xf8] sm:$0xff] %v1250
        %v1285 = vld [vmem:[#allocation2 + $0x1] sm:$0xff]
        %v1286 = vld [vmem:[#allocation2 + $0x9] sm:$0xff]
        %v1287 = vld [vmem:[#allocation2 + $0x19] sm:$0xff]
        %v1288 = vld [vmem:[#allocation2 + $0x21] sm:$0xff]
        %v1289 = vld [vmem:[#allocation2 + $0x31] sm:$0xff]
        %v1290 = vld [vmem:[#allocation2 + $0x39] sm:$0xff]
        %v1291 = vld [vmem:[#allocation2 + $0x49] sm:$0xff]
        %v1292 = vld [vmem:[#allocation2 + $0x51] sm:$0xff]
        %v1293 = vld [vmem:[#allocation2 + $0x61] sm:$0xff]
        %v1294 = vld [vmem:[#allocation2 + $0x69] sm:$0xff]
        %v1295 = vld [vmem:[#allocation2 + $0x79] sm:$0xff]
        %v1296 = vld [vmem:[#allocation2 + $0x81] sm:$0xff]
        %v1297 = vld [vmem:[#allocation2 + $0x91] sm:$0xff]
        %v1298 = vld [vmem:[#allocation2 + $0x99] sm:$0xff]
        %v1299 = vld [vmem:[#allocation2 + $0xa9] sm:$0xff]
        %v1300 = vld [vmem:[#allocation2 + $0xb1] sm:$0xff]
        %v1301 = vld [vmem:[#allocation2 + $0xc1] sm:$0xff]
        %v1302 = vld [vmem:[#allocation2 + $0xc9] sm:$0xff]
        %v1303 = vld [vmem:[#allocation2 + $0xd9] sm:$0xff]
        %v1304 = vld [vmem:[#allocation2 + $0xe1] sm:$0xff]
        %v1305 = vld [vmem:[#allocation2 + $0xf1] sm:$0xff]
        %v1306 = vld [vmem:[#allocation2 + $0xf9] sm:$0xff]
        %v1307 = vld [vmem:[#allocation2 + $0x109] sm:$0xff]
        %v1308 = vld [vmem:[#allocation2 + $0x111] sm:$0xff]
        %v1309 = vld [vmem:[#allocation2 + $0x121] sm:$0xff]
        %v1310 = vld [vmem:[#allocation2 + $0x129] sm:$0xff]
        %v1311 = vld [vmem:[#allocation2 + $0x139] sm:$0xff]
        %v1312 = vld [vmem:[#allocation2 + $0x141] sm:$0xff]
        %v1313 = vld [vmem:[#allocation2 + $0x151] sm:$0xff]
        %v1314 = vld [vmem:[#allocation2 + $0x159] sm:$0xff]
        %v1315 = vld [vmem:[#allocation2 + $0x169] sm:$0xff]
        %v1316 = vld [vmem:[#allocation2 + $0x171] sm:$0xff]
        %v1317 = vpack.c.bf16 %v1286, %v1285
        %v1318 = vpack.c.bf16 %v1288, %v1287
        %v1319 = vpack.c.bf16 %v1290, %v1289
        %v1320 = vpack.c.bf16 %v1292, %v1291
        %v1321 = vpack.c.bf16 %v1294, %v1293
        %v1322 = vpack.c.bf16 %v1296, %v1295
        %v1323 = vpack.c.bf16 %v1298, %v1297
        %v1324 = vpack.c.bf16 %v1300, %v1299
        %v1325 = vpack.c.bf16 %v1302, %v1301
        %v1326 = vpack.c.bf16 %v1304, %v1303
        %v1327 = vpack.c.bf16 %v1306, %v1305
        %v1328 = vpack.c.bf16 %v1308, %v1307
        %v1329 = vpack.c.bf16 %v1310, %v1309
        %v1330 = vpack.c.bf16 %v1312, %v1311
        %v1331 = vpack.c.bf16 %v1314, %v1313
        %v1332 = vpack.c.bf16 %v1316, %v1315
        %s1333 = scalar_lea.vmem %s5, 32
        %v1334 = vld [vmem:[%s1333] sm:$0xf]
        %v1335 = vld [vmem:[%s1333 + $0x4] sm:$0xf]
        %v1336 = vld [vmem:[%s1333 + $0x8] sm:$0xf]
        %v1337 = vld [vmem:[%s1333 + $0xc] sm:$0xf]
        %v1338 = vld [vmem:[%s1333 + $0x10] sm:$0xf]
        %v1339 = vld [vmem:[%s1333 + $0x14] sm:$0xf]
        %v1340 = vld [vmem:[%s1333 + $0x18] sm:$0xf]
        %v1341 = vld [vmem:[%s1333 + $0x1c] sm:$0xf]
        %v1350 = vunpack.c.l.b16 %v1334
        %v1351 = vunpack.c.l.b16 %v1335
        %v1352 = vunpack.c.l.b16 %v1336
        %v1353 = vunpack.c.l.b16 %v1337
        %v1354 = vunpack.c.l.b16 %v1338
        %v1355 = vunpack.c.l.b16 %v1339
        %v1356 = vunpack.c.l.b16 %v1340
        %v1357 = vunpack.c.l.b16 %v1341
        %v1358 = vpack.c.b16 %v1351, %v1350
        %v1359 = vpack.c.b16 %v1353, %v1352
        %v1360 = vpack.c.b16 %v1355, %v1354
        %v1361 = vpack.c.b16 %v1357, %v1356
        %v1367 = vsel %vm386, %v1317, 0
        %v1370 = vsel %vm386, %v1318, 0
        %v1373 = vsel %vm386, %v1319, 0
        %v1376 = vsel %vm386, %v1320, 0
        %v1379 = vsel %vm386, %v1321, 0
        %v1382 = vsel %vm386, %v1322, 0
        %v1385 = vsel %vm386, %v1323, 0
        %v1388 = vsel %vm386, %v1324, 0
        %v1391 = vsel %vm386, %v1325, 0
        %v1394 = vsel %vm386, %v1326, 0
        %v1397 = vsel %vm386, %v1327, 0
        %v1400 = vsel %vm386, %v1328, 0
        %v1403 = vsel %vm386, %v1329, 0
        %v1406 = vsel %vm386, %v1330, 0
        %v1409 = vsel %vm386, %v1331, 0
        %v1412 = vsel %vm386, %v1332, 0
        %1414 = vmatprep.subr.bf16.mxu0 0
        %1415 = vmatpush1.bf16.msra.mxu0 %v1358
        %1416 = vmatprep.subr.bf16.mxu0 0
        %1417 = vmatpush1.bf16.msra.mxu0 %v1359
        %1418 = vmatprep.subr.bf16.mxu0 0
        %1419 = vmatpush1.bf16.msra.mxu0 %v1360
        %1420 = vmatprep.subr.bf16.mxu0 0
        %1421 = vmatpush1.bf16.msra.mxu0 %v1361
        %1422 = vmatprep.subr.bf16.mxu0 0
        %1423 = vmatpush1.bf16.msra.mxu0 0
        %1424 = vmatprep.subr.bf16.mxu0 0
        %1425 = vmatpush1.bf16.msra.mxu0 0
        %1426 = vmatprep.subr.bf16.mxu0 0
        %1427 = vmatpush1.bf16.msra.mxu0 0
        %1428 = vmatprep.subr.bf16.mxu0 0
        %1429 = vmatpush1.bf16.msra.mxu0 0
        %1430 = vmatprep.subr.bf16.mxu0 0
        %1431 = vmatpush1.bf16.msra.mxu0 0
        %1432 = vmatprep.subr.bf16.mxu0 0
        %1433 = vmatpush1.bf16.msra.mxu0 0
        %1434 = vmatprep.subr.bf16.mxu0 0
        %1435 = vmatpush1.bf16.msra.mxu0 0
        %1436 = vmatprep.subr.bf16.mxu0 0
        %1437 = vmatpush1.bf16.msra.mxu0 0
        %1438 = vmatprep.subr.bf16.mxu0 0
        %1439 = vmatpush1.bf16.msra.mxu0 0
        %1440 = vmatprep.subr.bf16.mxu0 0
        %1441 = vmatpush1.bf16.msra.mxu0 0
        %1442 = vmatprep.subr.bf16.mxu0 0
        %1443 = vmatpush1.bf16.msra.mxu0 0
        %1444 = vmatprep.subr.bf16.mxu0 0
        %1445 = vmatpush1.bf16.msra.mxu0 0
        %1446 = vmatprep.mubr.bf16.mxu0 0
        %1447 = vmatmul.mubr.bf16.gmra.mrb[0].mxu0 %v1367
        %v1448 = vpop.f32.mrb[0].mxu0
        %v1449 = vadd.f32 0.0, %v1448
        %v1450 = vpop.f32.mrb[0].mxu0
        %v1451 = vpop.f32.mrb[0].mxu0
        %v1452 = vadd.f32 0.0, %v1451
        %v1453 = vpop.f32.mrb[0].mxu0
        %1454 = vmatprep.mubr.bf16.mxu0 0
        %1455 = vmatmul.mubr.bf16.gmra.mrb[0].mxu0 %v1370
        %v1456 = vpop.f32.mrb[0].mxu0
        %v1457 = vadd.f32 0.0, %v1456
        %v1458 = vpop.f32.mrb[0].mxu0
        %v1459 = vpop.f32.mrb[0].mxu0
        %v1460 = vadd.f32 0.0, %v1459
        %v1461 = vpop.f32.mrb[0].mxu0
        %1462 = vmatprep.mubr.bf16.mxu0 0
        %1463 = vmatmul.mubr.bf16.gmra.mrb[0].mxu0 %v1373
        %v1464 = vpop.f32.mrb[0].mxu0
        %v1465 = vadd.f32 0.0, %v1464
        %v1466 = vpop.f32.mrb[0].mxu0
        %v1467 = vpop.f32.mrb[0].mxu0
        %v1468 = vadd.f32 0.0, %v1467
        %v1469 = vpop.f32.mrb[0].mxu0
        %1470 = vmatprep.mubr.bf16.mxu0 0
        %1471 = vmatmul.mubr.bf16.gmra.mrb[0].mxu0 %v1376
        %v1472 = vpop.f32.mrb[0].mxu0
        %v1473 = vadd.f32 0.0, %v1472
        %v1474 = vpop.f32.mrb[0].mxu0
        %v1475 = vpop.f32.mrb[0].mxu0
        %v1476 = vadd.f32 0.0, %v1475
        %v1477 = vpop.f32.mrb[0].mxu0
        %1478 = vmatprep.mubr.bf16.mxu0 0
        %1479 = vmatmul.mubr.bf16.gmra.mrb[0].mxu0 %v1379
        %v1480 = vpop.f32.mrb[0].mxu0
        %v1481 = vadd.f32 0.0, %v1480
        %v1482 = vpop.f32.mrb[0].mxu0
        %v1483 = vpop.f32.mrb[0].mxu0
        %v1484 = vadd.f32 0.0, %v1483
        %v1485 = vpop.f32.mrb[0].mxu0
        %1486 = vmatprep.mubr.bf16.mxu0 0
        %1487 = vmatmul.mubr.bf16.gmra.mrb[0].mxu0 %v1382
        %v1488 = vpop.f32.mrb[0].mxu0
        %v1489 = vadd.f32 0.0, %v1488
        %v1490 = vpop.f32.mrb[0].mxu0
        %v1491 = vpop.f32.mrb[0].mxu0
        %v1492 = vadd.f32 0.0, %v1491
        %v1493 = vpop.f32.mrb[0].mxu0
        %1494 = vmatprep.mubr.bf16.mxu0 0
        %1495 = vmatmul.mubr.bf16.gmra.mrb[0].mxu0 %v1385
        %v1496 = vpop.f32.mrb[0].mxu0
        %v1497 = vadd.f32 0.0, %v1496
        %v1498 = vpop.f32.mrb[0].mxu0
        %v1499 = vpop.f32.mrb[0].mxu0
        %v1500 = vadd.f32 0.0, %v1499
        %v1501 = vpop.f32.mrb[0].mxu0
        %1502 = vmatprep.mubr.bf16.mxu0 0
        %1503 = vmatmul.mubr.bf16.gmra.mrb[0].mxu0 %v1388
        %v1504 = vpop.f32.mrb[0].mxu0
        %v1505 = vadd.f32 0.0, %v1504
        %v1506 = vpop.f32.mrb[0].mxu0
        %v1507 = vpop.f32.mrb[0].mxu0
        %v1508 = vadd.f32 0.0, %v1507
        %v1509 = vpop.f32.mrb[0].mxu0
        %1510 = vmatprep.mubr.bf16.mxu0 0
        %1511 = vmatmul.mubr.bf16.gmra.mrb[0].mxu0 %v1391
        %v1512 = vpop.f32.mrb[0].mxu0
        %v1513 = vadd.f32 0.0, %v1512
        %v1514 = vpop.f32.mrb[0].mxu0
        %v1515 = vpop.f32.mrb[0].mxu0
        %v1516 = vadd.f32 0.0, %v1515
        %v1517 = vpop.f32.mrb[0].mxu0
        %1518 = vmatprep.mubr.bf16.mxu0 0
        %1519 = vmatmul.mubr.bf16.gmra.mrb[0].mxu0 %v1394
        %v1520 = vpop.f32.mrb[0].mxu0
        %v1521 = vadd.f32 0.0, %v1520
        %v1522 = vpop.f32.mrb[0].mxu0
        %v1523 = vpop.f32.mrb[0].mxu0
        %v1524 = vadd.f32 0.0, %v1523
        %v1525 = vpop.f32.mrb[0].mxu0
        %1526 = vmatprep.mubr.bf16.mxu0 0
        %1527 = vmatmul.mubr.bf16.gmra.mrb[0].mxu0 %v1397
        %v1528 = vpop.f32.mrb[0].mxu0
        %v1529 = vadd.f32 0.0, %v1528
        %v1530 = vpop.f32.mrb[0].mxu0
        %v1531 = vpop.f32.mrb[0].mxu0
        %v1532 = vadd.f32 0.0, %v1531
        %v1533 = vpop.f32.mrb[0].mxu0
        %1534 = vmatprep.mubr.bf16.mxu0 0
        %1535 = vmatmul.mubr.bf16.gmra.mrb[0].mxu0 %v1400
        %v1536 = vpop.f32.mrb[0].mxu0
        %v1537 = vadd.f32 0.0, %v1536
        %v1538 = vpop.f32.mrb[0].mxu0
        %v1539 = vpop.f32.mrb[0].mxu0
        %v1540 = vadd.f32 0.0, %v1539
        %v1541 = vpop.f32.mrb[0].mxu0
        %1542 = vmatprep.mubr.bf16.mxu0 0
        %1543 = vmatmul.mubr.bf16.gmra.mrb[0].mxu0 %v1403
        %v1544 = vpop.f32.mrb[0].mxu0
        %v1545 = vadd.f32 0.0, %v1544
        %v1546 = vpop.f32.mrb[0].mxu0
        %v1547 = vpop.f32.mrb[0].mxu0
        %v1548 = vadd.f32 0.0, %v1547
        %v1549 = vpop.f32.mrb[0].mxu0
        %1550 = vmatprep.mubr.bf16.mxu0 0
        %1551 = vmatmul.mubr.bf16.gmra.mrb[0].mxu0 %v1406
        %v1552 = vpop.f32.mrb[0].mxu0
        %v1553 = vadd.f32 0.0, %v1552
        %v1554 = vpop.f32.mrb[0].mxu0
        %v1555 = vpop.f32.mrb[0].mxu0
        %v1556 = vadd.f32 0.0, %v1555
        %v1557 = vpop.f32.mrb[0].mxu0
        %1558 = vmatprep.mubr.bf16.mxu0 0
        %1559 = vmatmul.mubr.bf16.gmra.mrb[0].mxu0 %v1409
        %v1560 = vpop.f32.mrb[0].mxu0
        %v1561 = vadd.f32 0.0, %v1560
        %v1562 = vpop.f32.mrb[0].mxu0
        %v1563 = vpop.f32.mrb[0].mxu0
        %v1564 = vadd.f32 0.0, %v1563
        %v1565 = vpop.f32.mrb[0].mxu0
        %1566 = vmatprep.mubr.bf16.mxu0 0
        %1567 = vmatmul.mubr.bf16.gmra.mrb[0].mxu0 %v1412
        %v1568 = vpop.f32.mrb[0].mxu0
        %v1569 = vadd.f32 0.0, %v1568
        %v1570 = vpop.f32.mrb[0].mxu0
        %v1571 = vpop.f32.mrb[0].mxu0
        %v1572 = vadd.f32 0.0, %v1571
        %v1573 = vpop.f32.mrb[0].mxu0
        %1574 = vdwg.mxu0
        %v1575 = vld [vmem:[%s271] sm:$0xff]
        %v1576 = vld [vmem:[%s271 + $0x8] sm:$0xff]
        %v1577 = vld [vmem:[%s271 + $0x10] sm:$0xff]
        %v1578 = vld [vmem:[%s271 + $0x18] sm:$0xff]
        %v1579 = vld [vmem:[%s271 + $0x20] sm:$0xff]
        %v1580 = vld [vmem:[%s271 + $0x28] sm:$0xff]
        %v1581 = vld [vmem:[%s271 + $0x30] sm:$0xff]
        %v1582 = vld [vmem:[%s271 + $0x38] sm:$0xff]
        %v1583 = vld [vmem:[%s271 + $0x40] sm:$0xff]
        %v1584 = vld [vmem:[%s271 + $0x48] sm:$0xff]
        %v1585 = vld [vmem:[%s271 + $0x50] sm:$0xff]
        %v1586 = vld [vmem:[%s271 + $0x58] sm:$0xff]
        %v1587 = vld [vmem:[%s271 + $0x60] sm:$0xff]
        %v1588 = vld [vmem:[%s271 + $0x68] sm:$0xff]
        %v1589 = vld [vmem:[%s271 + $0x70] sm:$0xff]
        %v1590 = vld [vmem:[%s271 + $0x78] sm:$0xff]
        %v1591 = vld [vmem:[%s271 + $0x80] sm:$0xff]
        %v1592 = vld [vmem:[%s271 + $0x88] sm:$0xff]
        %v1593 = vld [vmem:[%s271 + $0x90] sm:$0xff]
        %v1594 = vld [vmem:[%s271 + $0x98] sm:$0xff]
        %v1595 = vld [vmem:[%s271 + $0xa0] sm:$0xff]
        %v1596 = vld [vmem:[%s271 + $0xa8] sm:$0xff]
        %v1597 = vld [vmem:[%s271 + $0xb0] sm:$0xff]
        %v1598 = vld [vmem:[%s271 + $0xb8] sm:$0xff]
        %v1599 = vld [vmem:[%s271 + $0xc0] sm:$0xff]
        %v1600 = vld [vmem:[%s271 + $0xc8] sm:$0xff]
        %v1601 = vld [vmem:[%s271 + $0xd0] sm:$0xff]
        %v1602 = vld [vmem:[%s271 + $0xd8] sm:$0xff]
        %v1603 = vld [vmem:[%s271 + $0xe0] sm:$0xff]
        %v1604 = vld [vmem:[%s271 + $0xe8] sm:$0xff]
        %v1605 = vld [vmem:[%s271 + $0xf0] sm:$0xff]
        %v1606 = vld [vmem:[%s271 + $0xf8] sm:$0xff]
        %v1607 = vadd.f32 %v1575, %v1449
        %v1608 = vadd.f32 %v1576, %v1452
        %v1609 = vadd.f32 %v1577, %v1457
        %v1610 = vadd.f32 %v1578, %v1460
        %v1611 = vadd.f32 %v1579, %v1465
        %v1612 = vadd.f32 %v1580, %v1468
        %v1613 = vadd.f32 %v1581, %v1473
        %v1614 = vadd.f32 %v1582, %v1476
        %v1615 = vadd.f32 %v1583, %v1481
        %v1616 = vadd.f32 %v1584, %v1484
        %v1617 = vadd.f32 %v1585, %v1489
        %v1618 = vadd.f32 %v1586, %v1492
        %v1619 = vadd.f32 %v1587, %v1497
        %v1620 = vadd.f32 %v1588, %v1500
        %v1621 = vadd.f32 %v1589, %v1505
        %v1622 = vadd.f32 %v1590, %v1508
        %v1623 = vadd.f32 %v1591, %v1513
        %v1624 = vadd.f32 %v1592, %v1516
        %v1625 = vadd.f32 %v1593, %v1521
        %v1626 = vadd.f32 %v1594, %v1524
        %v1627 = vadd.f32 %v1595, %v1529
        %v1628 = vadd.f32 %v1596, %v1532
        %v1629 = vadd.f32 %v1597, %v1537
        %v1630 = vadd.f32 %v1598, %v1540
        %v1631 = vadd.f32 %v1599, %v1545
        %v1632 = vadd.f32 %v1600, %v1548
        %v1633 = vadd.f32 %v1601, %v1553
        %v1634 = vadd.f32 %v1602, %v1556
        %v1635 = vadd.f32 %v1603, %v1561
        %v1636 = vadd.f32 %v1604, %v1564
        %v1637 = vadd.f32 %v1605, %v1569
        %v1638 = vadd.f32 %v1606, %v1572
        %1639 = vst [vmem:[%s271] sm:$0xff] %v1607
        %1640 = vst [vmem:[%s271 + $0x8] sm:$0xff] %v1608
        %1641 = vst [vmem:[%s271 + $0x10] sm:$0xff] %v1609
        %1642 = vst [vmem:[%s271 + $0x18] sm:$0xff] %v1610
        %1643 = vst [vmem:[%s271 + $0x20] sm:$0xff] %v1611
        %1644 = vst [vmem:[%s271 + $0x28] sm:$0xff] %v1612
        %1645 = vst [vmem:[%s271 + $0x30] sm:$0xff] %v1613
        %1646 = vst [vmem:[%s271 + $0x38] sm:$0xff] %v1614
        %1647 = vst [vmem:[%s271 + $0x40] sm:$0xff] %v1615
        %1648 = vst [vmem:[%s271 + $0x48] sm:$0xff] %v1616
        %1649 = vst [vmem:[%s271 + $0x50] sm:$0xff] %v1617
        %1650 = vst [vmem:[%s271 + $0x58] sm:$0xff] %v1618
        %1651 = vst [vmem:[%s271 + $0x60] sm:$0xff] %v1619
        %1652 = vst [vmem:[%s271 + $0x68] sm:$0xff] %v1620
        %1653 = vst [vmem:[%s271 + $0x70] sm:$0xff] %v1621
        %1654 = vst [vmem:[%s271 + $0x78] sm:$0xff] %v1622
        %1655 = vst [vmem:[%s271 + $0x80] sm:$0xff] %v1623
        %1656 = vst [vmem:[%s271 + $0x88] sm:$0xff] %v1624
        %1657 = vst [vmem:[%s271 + $0x90] sm:$0xff] %v1625
        %1658 = vst [vmem:[%s271 + $0x98] sm:$0xff] %v1626
        %1659 = vst [vmem:[%s271 + $0xa0] sm:$0xff] %v1627
        %1660 = vst [vmem:[%s271 + $0xa8] sm:$0xff] %v1628
        %1661 = vst [vmem:[%s271 + $0xb0] sm:$0xff] %v1629
        %1662 = vst [vmem:[%s271 + $0xb8] sm:$0xff] %v1630
        %1663 = vst [vmem:[%s271 + $0xc0] sm:$0xff] %v1631
        %1664 = vst [vmem:[%s271 + $0xc8] sm:$0xff] %v1632
        %1665 = vst [vmem:[%s271 + $0xd0] sm:$0xff] %v1633
        %1666 = vst [vmem:[%s271 + $0xd8] sm:$0xff] %v1634
        %1667 = vst [vmem:[%s271 + $0xe0] sm:$0xff] %v1635
        %1668 = vst [vmem:[%s271 + $0xe8] sm:$0xff] %v1636
        %1669 = vst [vmem:[%s271 + $0xf0] sm:$0xff] %v1637
        %1670 = vst [vmem:[%s271 + $0xf8] sm:$0xff] %v1638
        %v1671 = vld [vmem:[#allocation2 + $0x2] sm:$0xff]
        %v1672 = vld [vmem:[#allocation2 + $0xa] sm:$0xff]
        %v1673 = vld [vmem:[#allocation2 + $0x1a] sm:$0xff]
        %v1674 = vld [vmem:[#allocation2 + $0x22] sm:$0xff]
        %v1675 = vld [vmem:[#allocation2 + $0x32] sm:$0xff]
        %v1676 = vld [vmem:[#allocation2 + $0x3a] sm:$0xff]
        %v1677 = vld [vmem:[#allocation2 + $0x4a] sm:$0xff]
        %v1678 = vld [vmem:[#allocation2 + $0x52] sm:$0xff]
        %v1679 = vld [vmem:[#allocation2 + $0x62] sm:$0xff]
        %v1680 = vld [vmem:[#allocation2 + $0x6a] sm:$0xff]
        %v1681 = vld [vmem:[#allocation2 + $0x7a] sm:$0xff]
        %v1682 = vld [vmem:[#allocation2 + $0x82] sm:$0xff]
        %v1683 = vld [vmem:[#allocation2 + $0x92] sm:$0xff]
        %v1684 = vld [vmem:[#allocation2 + $0x9a] sm:$0xff]
        %v1685 = vld [vmem:[#allocation2 + $0xaa] sm:$0xff]
        %v1686 = vld [vmem:[#allocation2 + $0xb2] sm:$0xff]
        %v1687 = vld [vmem:[#allocation2 + $0xc2] sm:$0xff]
        %v1688 = vld [vmem:[#allocation2 + $0xca] sm:$0xff]
        %v1689 = vld [vmem:[#allocation2 + $0xda] sm:$0xff]
        %v1690 = vld [vmem:[#allocation2 + $0xe2] sm:$0xff]
        %v1691 = vld [vmem:[#allocation2 + $0xf2] sm:$0xff]
        %v1692 = vld [vmem:[#allocation2 + $0xfa] sm:$0xff]
        %v1693 = vld [vmem:[#allocation2 + $0x10a] sm:$0xff]
        %v1694 = vld [vmem:[#allocation2 + $0x112] sm:$0xff]
        %v1695 = vld [vmem:[#allocation2 + $0x122] sm:$0xff]
        %v1696 = vld [vmem:[#allocation2 + $0x12a] sm:$0xff]
        %v1697 = vld [vmem:[#allocation2 + $0x13a] sm:$0xff]
        %v1698 = vld [vmem:[#allocation2 + $0x142] sm:$0xff]
        %v1699 = vld [vmem:[#allocation2 + $0x152] sm:$0xff]
        %v1700 = vld [vmem:[#allocation2 + $0x15a] sm:$0xff]
        %v1701 = vld [vmem:[#allocation2 + $0x16a] sm:$0xff]
        %v1702 = vld [vmem:[#allocation2 + $0x172] sm:$0xff]
        %v1703 = vpack.c.bf16 %v1672, %v1671
        %v1704 = vpack.c.bf16 %v1674, %v1673
        %v1705 = vpack.c.bf16 %v1676, %v1675
        %v1706 = vpack.c.bf16 %v1678, %v1677
        %v1707 = vpack.c.bf16 %v1680, %v1679
        %v1708 = vpack.c.bf16 %v1682, %v1681
        %v1709 = vpack.c.bf16 %v1684, %v1683
        %v1710 = vpack.c.bf16 %v1686, %v1685
        %v1711 = vpack.c.bf16 %v1688, %v1687
        %v1712 = vpack.c.bf16 %v1690, %v1689
        %v1713 = vpack.c.bf16 %v1692, %v1691
        %v1714 = vpack.c.bf16 %v1694, %v1693
        %v1715 = vpack.c.bf16 %v1696, %v1695
        %v1716 = vpack.c.bf16 %v1698, %v1697
        %v1717 = vpack.c.bf16 %v1700, %v1699
        %v1718 = vpack.c.bf16 %v1702, %v1701
        %s1719 = scalar_lea.vmem %s5, 64
        %v1720 = vld [vmem:[%s1719] sm:$0xf]
        %v1721 = vld [vmem:[%s1719 + $0x4] sm:$0xf]
        %v1722 = vld [vmem:[%s1719 + $0x8] sm:$0xf]
        %v1723 = vld [vmem:[%s1719 + $0xc] sm:$0xf]
        %v1724 = vld [vmem:[%s1719 + $0x10] sm:$0xf]
        %v1725 = vld [vmem:[%s1719 + $0x14] sm:$0xf]
        %v1726 = vld [vmem:[%s1719 + $0x18] sm:$0xf]
        %v1727 = vld [vmem:[%s1719 + $0x1c] sm:$0xf]
        %v1736 = vunpack.c.l.b16 %v1720
        %v1737 = vunpack.c.l.b16 %v1721
        %v1738 = vunpack.c.l.b16 %v1722
        %v1739 = vunpack.c.l.b16 %v1723
        %v1740 = vunpack.c.l.b16 %v1724
        %v1741 = vunpack.c.l.b16 %v1725
        %v1742 = vunpack.c.l.b16 %v1726
        %v1743 = vunpack.c.l.b16 %v1727
        %v1744 = vpack.c.b16 %v1737, %v1736
        %v1745 = vpack.c.b16 %v1739, %v1738
        %v1746 = vpack.c.b16 %v1741, %v1740
        %v1747 = vpack.c.b16 %v1743, %v1742
        %v1753 = vsel %vm386, %v1703, 0
        %v1756 = vsel %vm386, %v1704, 0
        %v1759 = vsel %vm386, %v1705, 0
        %v1762 = vsel %vm386, %v1706, 0
        %v1765 = vsel %vm386, %v1707, 0
        %v1768 = vsel %vm386, %v1708, 0
        %v1771 = vsel %vm386, %v1709, 0
        %v1774 = vsel %vm386, %v1710, 0
        %v1777 = vsel %vm386, %v1711, 0
        %v1780 = vsel %vm386, %v1712, 0
        %v1783 = vsel %vm386, %v1713, 0
        %v1786 = vsel %vm386, %v1714, 0
        %v1789 = vsel %vm386, %v1715, 0
        %v1792 = vsel %vm386, %v1716, 0
        %v1795 = vsel %vm386, %v1717, 0
        %v1798 = vsel %vm386, %v1718, 0
        %1800 = vmatprep.subr.bf16.mxu0 0
        %1801 = vmatpush1.bf16.msra.mxu0 %v1744
        %1802 = vmatprep.subr.bf16.mxu0 0
        %1803 = vmatpush1.bf16.msra.mxu0 %v1745
        %1804 = vmatprep.subr.bf16.mxu0 0
        %1805 = vmatpush1.bf16.msra.mxu0 %v1746
        %1806 = vmatprep.subr.bf16.mxu0 0
        %1807 = vmatpush1.bf16.msra.mxu0 %v1747
        %1808 = vmatprep.subr.bf16.mxu0 0
        %1809 = vmatpush1.bf16.msra.mxu0 0
        %1810 = vmatprep.subr.bf16.mxu0 0
        %1811 = vmatpush1.bf16.msra.mxu0 0
        %1812 = vmatprep.subr.bf16.mxu0 0
        %1813 = vmatpush1.bf16.msra.mxu0 0
        %1814 = vmatprep.subr.bf16.mxu0 0
        %1815 = vmatpush1.bf16.msra.mxu0 0
        %1816 = vmatprep.subr.bf16.mxu0 0
        %1817 = vmatpush1.bf16.msra.mxu0 0
        %1818 = vmatprep.subr.bf16.mxu0 0
        %1819 = vmatpush1.bf16.msra.mxu0 0
        %1820 = vmatprep.subr.bf16.mxu0 0
        %1821 = vmatpush1.bf16.msra.mxu0 0
        %1822 = vmatprep.subr.bf16.mxu0 0
        %1823 = vmatpush1.bf16.msra.mxu0 0
        %1824 = vmatprep.subr.bf16.mxu0 0
        %1825 = vmatpush1.bf16.msra.mxu0 0
        %1826 = vmatprep.subr.bf16.mxu0 0
        %1827 = vmatpush1.bf16.msra.mxu0 0
        %1828 = vmatprep.subr.bf16.mxu0 0
        %1829 = vmatpush1.bf16.msra.mxu0 0
        %1830 = vmatprep.subr.bf16.mxu0 0
        %1831 = vmatpush1.bf16.msra.mxu0 0
        %1832 = vmatprep.mubr.bf16.mxu0 0
        %1833 = vmatmul.mubr.bf16.gmra.mrb[0].mxu0 %v1753
        %v1834 = vpop.f32.mrb[0].mxu0
        %v1835 = vadd.f32 0.0, %v1834
        %v1836 = vpop.f32.mrb[0].mxu0
        %v1837 = vpop.f32.mrb[0].mxu0
        %v1838 = vadd.f32 0.0, %v1837
        %v1839 = vpop.f32.mrb[0].mxu0
        %1840 = vmatprep.mubr.bf16.mxu0 0
        %1841 = vmatmul.mubr.bf16.gmra.mrb[0].mxu0 %v1756
        %v1842 = vpop.f32.mrb[0].mxu0
        %v1843 = vadd.f32 0.0, %v1842
        %v1844 = vpop.f32.mrb[0].mxu0
        %v1845 = vpop.f32.mrb[0].mxu0
        %v1846 = vadd.f32 0.0, %v1845
        %v1847 = vpop.f32.mrb[0].mxu0
        %1848 = vmatprep.mubr.bf16.mxu0 0
        %1849 = vmatmul.mubr.bf16.gmra.mrb[0].mxu0 %v1759
        %v1850 = vpop.f32.mrb[0].mxu0
        %v1851 = vadd.f32 0.0, %v1850
        %v1852 = vpop.f32.mrb[0].mxu0
        %v1853 = vpop.f32.mrb[0].mxu0
        %v1854 = vadd.f32 0.0, %v1853
        %v1855 = vpop.f32.mrb[0].mxu0
        %1856 = vmatprep.mubr.bf16.mxu0 0
        %1857 = vmatmul.mubr.bf16.gmra.mrb[0].mxu0 %v1762
        %v1858 = vpop.f32.mrb[0].mxu0
        %v1859 = vadd.f32 0.0, %v1858
        %v1860 = vpop.f32.mrb[0].mxu0
        %v1861 = vpop.f32.mrb[0].mxu0
        %v1862 = vadd.f32 0.0, %v1861
        %v1863 = vpop.f32.mrb[0].mxu0
        %1864 = vmatprep.mubr.bf16.mxu0 0
        %1865 = vmatmul.mubr.bf16.gmra.mrb[0].mxu0 %v1765
        %v1866 = vpop.f32.mrb[0].mxu0
        %v1867 = vadd.f32 0.0, %v1866
        %v1868 = vpop.f32.mrb[0].mxu0
        %v1869 = vpop.f32.mrb[0].mxu0
        %v1870 = vadd.f32 0.0, %v1869
        %v1871 = vpop.f32.mrb[0].mxu0
        %1872 = vmatprep.mubr.bf16.mxu0 0
        %1873 = vmatmul.mubr.bf16.gmra.mrb[0].mxu0 %v1768
        %v1874 = vpop.f32.mrb[0].mxu0
        %v1875 = vadd.f32 0.0, %v1874
        %v1876 = vpop.f32.mrb[0].mxu0
        %v1877 = vpop.f32.mrb[0].mxu0
        %v1878 = vadd.f32 0.0, %v1877
        %v1879 = vpop.f32.mrb[0].mxu0
        %1880 = vmatprep.mubr.bf16.mxu0 0
        %1881 = vmatmul.mubr.bf16.gmra.mrb[0].mxu0 %v1771
        %v1882 = vpop.f32.mrb[0].mxu0
        %v1883 = vadd.f32 0.0, %v1882
        %v1884 = vpop.f32.mrb[0].mxu0
        %v1885 = vpop.f32.mrb[0].mxu0
        %v1886 = vadd.f32 0.0, %v1885
        %v1887 = vpop.f32.mrb[0].mxu0
        %1888 = vmatprep.mubr.bf16.mxu0 0
        %1889 = vmatmul.mubr.bf16.gmra.mrb[0].mxu0 %v1774
        %v1890 = vpop.f32.mrb[0].mxu0
        %v1891 = vadd.f32 0.0, %v1890
        %v1892 = vpop.f32.mrb[0].mxu0
        %v1893 = vpop.f32.mrb[0].mxu0
        %v1894 = vadd.f32 0.0, %v1893
        %v1895 = vpop.f32.mrb[0].mxu0
        %1896 = vmatprep.mubr.bf16.mxu0 0
        %1897 = vmatmul.mubr.bf16.gmra.mrb[0].mxu0 %v1777
        %v1898 = vpop.f32.mrb[0].mxu0
        %v1899 = vadd.f32 0.0, %v1898
        %v1900 = vpop.f32.mrb[0].mxu0
        %v1901 = vpop.f32.mrb[0].mxu0
        %v1902 = vadd.f32 0.0, %v1901
        %v1903 = vpop.f32.mrb[0].mxu0
        %1904 = vmatprep.mubr.bf16.mxu0 0
        %1905 = vmatmul.mubr.bf16.gmra.mrb[0].mxu0 %v1780
        %v1906 = vpop.f32.mrb[0].mxu0
        %v1907 = vadd.f32 0.0, %v1906
        %v1908 = vpop.f32.mrb[0].mxu0
        %v1909 = vpop.f32.mrb[0].mxu0
        %v1910 = vadd.f32 0.0, %v1909
        %v1911 = vpop.f32.mrb[0].mxu0
        %1912 = vmatprep.mubr.bf16.mxu0 0
        %1913 = vmatmul.mubr.bf16.gmra.mrb[0].mxu0 %v1783
        %v1914 = vpop.f32.mrb[0].mxu0
        %v1915 = vadd.f32 0.0, %v1914
        %v1916 = vpop.f32.mrb[0].mxu0
        %v1917 = vpop.f32.mrb[0].mxu0
        %v1918 = vadd.f32 0.0, %v1917
        %v1919 = vpop.f32.mrb[0].mxu0
        %1920 = vmatprep.mubr.bf16.mxu0 0
        %1921 = vmatmul.mubr.bf16.gmra.mrb[0].mxu0 %v1786
        %v1922 = vpop.f32.mrb[0].mxu0
        %v1923 = vadd.f32 0.0, %v1922
        %v1924 = vpop.f32.mrb[0].mxu0
        %v1925 = vpop.f32.mrb[0].mxu0
        %v1926 = vadd.f32 0.0, %v1925
        %v1927 = vpop.f32.mrb[0].mxu0
        %1928 = vmatprep.mubr.bf16.mxu0 0
        %1929 = vmatmul.mubr.bf16.gmra.mrb[0].mxu0 %v1789
        %v1930 = vpop.f32.mrb[0].mxu0
        %v1931 = vadd.f32 0.0, %v1930
        %v1932 = vpop.f32.mrb[0].mxu0
        %v1933 = vpop.f32.mrb[0].mxu0
        %v1934 = vadd.f32 0.0, %v1933
        %v1935 = vpop.f32.mrb[0].mxu0
        %1936 = vmatprep.mubr.bf16.mxu0 0
        %1937 = vmatmul.mubr.bf16.gmra.mrb[0].mxu0 %v1792
        %v1938 = vpop.f32.mrb[0].mxu0
        %v1939 = vadd.f32 0.0, %v1938
        %v1940 = vpop.f32.mrb[0].mxu0
        %v1941 = vpop.f32.mrb[0].mxu0
        %v1942 = vadd.f32 0.0, %v1941
        %v1943 = vpop.f32.mrb[0].mxu0
        %1944 = vmatprep.mubr.bf16.mxu0 0
        %1945 = vmatmul.mubr.bf16.gmra.mrb[0].mxu0 %v1795
        %v1946 = vpop.f32.mrb[0].mxu0
        %v1947 = vadd.f32 0.0, %v1946
        %v1948 = vpop.f32.mrb[0].mxu0
        %v1949 = vpop.f32.mrb[0].mxu0
        %v1950 = vadd.f32 0.0, %v1949
        %v1951 = vpop.f32.mrb[0].mxu0
        %1952 = vmatprep.mubr.bf16.mxu0 0
        %1953 = vmatmul.mubr.bf16.gmra.mrb[0].mxu0 %v1798
        %v1954 = vpop.f32.mrb[0].mxu0
        %v1955 = vadd.f32 0.0, %v1954
        %v1956 = vpop.f32.mrb[0].mxu0
        %v1957 = vpop.f32.mrb[0].mxu0
        %v1958 = vadd.f32 0.0, %v1957
        %v1959 = vpop.f32.mrb[0].mxu0
        %1960 = vdwg.mxu0
        %v1961 = vld [vmem:[%s271] sm:$0xff]
        %v1962 = vld [vmem:[%s271 + $0x8] sm:$0xff]
        %v1963 = vld [vmem:[%s271 + $0x10] sm:$0xff]
        %v1964 = vld [vmem:[%s271 + $0x18] sm:$0xff]
        %v1965 = vld [vmem:[%s271 + $0x20] sm:$0xff]
        %v1966 = vld [vmem:[%s271 + $0x28] sm:$0xff]
        %v1967 = vld [vmem:[%s271 + $0x30] sm:$0xff]
        %v1968 = vld [vmem:[%s271 + $0x38] sm:$0xff]
        %v1969 = vld [vmem:[%s271 + $0x40] sm:$0xff]
        %v1970 = vld [vmem:[%s271 + $0x48] sm:$0xff]
        %v1971 = vld [vmem:[%s271 + $0x50] sm:$0xff]
        %v1972 = vld [vmem:[%s271 + $0x58] sm:$0xff]
        %v1973 = vld [vmem:[%s271 + $0x60] sm:$0xff]
        %v1974 = vld [vmem:[%s271 + $0x68] sm:$0xff]
        %v1975 = vld [vmem:[%s271 + $0x70] sm:$0xff]
        %v1976 = vld [vmem:[%s271 + $0x78] sm:$0xff]
        %v1977 = vld [vmem:[%s271 + $0x80] sm:$0xff]
        %v1978 = vld [vmem:[%s271 + $0x88] sm:$0xff]
        %v1979 = vld [vmem:[%s271 + $0x90] sm:$0xff]
        %v1980 = vld [vmem:[%s271 + $0x98] sm:$0xff]
        %v1981 = vld [vmem:[%s271 + $0xa0] sm:$0xff]
        %v1982 = vld [vmem:[%s271 + $0xa8] sm:$0xff]
        %v1983 = vld [vmem:[%s271 + $0xb0] sm:$0xff]
        %v1984 = vld [vmem:[%s271 + $0xb8] sm:$0xff]
        %v1985 = vld [vmem:[%s271 + $0xc0] sm:$0xff]
        %v1986 = vld [vmem:[%s271 + $0xc8] sm:$0xff]
        %v1987 = vld [vmem:[%s271 + $0xd0] sm:$0xff]
        %v1988 = vld [vmem:[%s271 + $0xd8] sm:$0xff]
        %v1989 = vld [vmem:[%s271 + $0xe0] sm:$0xff]
        %v1990 = vld [vmem:[%s271 + $0xe8] sm:$0xff]
        %v1991 = vld [vmem:[%s271 + $0xf0] sm:$0xff]
        %v1992 = vld [vmem:[%s271 + $0xf8] sm:$0xff]
        %v1993 = vadd.f32 %v1961, %v1835
        %v1994 = vadd.f32 %v1962, %v1838
        %v1995 = vadd.f32 %v1963, %v1843
        %v1996 = vadd.f32 %v1964, %v1846
        %v1997 = vadd.f32 %v1965, %v1851
        %v1998 = vadd.f32 %v1966, %v1854
        %v1999 = vadd.f32 %v1967, %v1859
        %v2000 = vadd.f32 %v1968, %v1862
        %v2001 = vadd.f32 %v1969, %v1867
        %v2002 = vadd.f32 %v1970, %v1870
        %v2003 = vadd.f32 %v1971, %v1875
        %v2004 = vadd.f32 %v1972, %v1878
        %v2005 = vadd.f32 %v1973, %v1883
        %v2006 = vadd.f32 %v1974, %v1886
        %v2007 = vadd.f32 %v1975, %v1891
        %v2008 = vadd.f32 %v1976, %v1894
        %v2009 = vadd.f32 %v1977, %v1899
        %v2010 = vadd.f32 %v1978, %v1902
        %v2011 = vadd.f32 %v1979, %v1907
        %v2012 = vadd.f32 %v1980, %v1910
        %v2013 = vadd.f32 %v1981, %v1915
        %v2014 = vadd.f32 %v1982, %v1918
        %v2015 = vadd.f32 %v1983, %v1923
        %v2016 = vadd.f32 %v1984, %v1926
        %v2017 = vadd.f32 %v1985, %v1931
        %v2018 = vadd.f32 %v1986, %v1934
        %v2019 = vadd.f32 %v1987, %v1939
        %v2020 = vadd.f32 %v1988, %v1942
        %v2021 = vadd.f32 %v1989, %v1947
        %v2022 = vadd.f32 %v1990, %v1950
        %v2023 = vadd.f32 %v1991, %v1955
        %v2024 = vadd.f32 %v1992, %v1958
        %2025 = vst [vmem:[%s271] sm:$0xff] %v1993
        %2026 = vst [vmem:[%s271 + $0x8] sm:$0xff] %v1994
        %2027 = vst [vmem:[%s271 + $0x10] sm:$0xff] %v1995
        %2028 = vst [vmem:[%s271 + $0x18] sm:$0xff] %v1996
        %2029 = vst [vmem:[%s271 + $0x20] sm:$0xff] %v1997
        %2030 = vst [vmem:[%s271 + $0x28] sm:$0xff] %v1998
        %2031 = vst [vmem:[%s271 + $0x30] sm:$0xff] %v1999
        %2032 = vst [vmem:[%s271 + $0x38] sm:$0xff] %v2000
        %2033 = vst [vmem:[%s271 + $0x40] sm:$0xff] %v2001
        %2034 = vst [vmem:[%s271 + $0x48] sm:$0xff] %v2002
        %2035 = vst [vmem:[%s271 + $0x50] sm:$0xff] %v2003
        %2036 = vst [vmem:[%s271 + $0x58] sm:$0xff] %v2004
        %2037 = vst [vmem:[%s271 + $0x60] sm:$0xff] %v2005
        %2038 = vst [vmem:[%s271 + $0x68] sm:$0xff] %v2006
        %2039 = vst [vmem:[%s271 + $0x70] sm:$0xff] %v2007
        %2040 = vst [vmem:[%s271 + $0x78] sm:$0xff] %v2008
        %2041 = vst [vmem:[%s271 + $0x80] sm:$0xff] %v2009
        %2042 = vst [vmem:[%s271 + $0x88] sm:$0xff] %v2010
        %2043 = vst [vmem:[%s271 + $0x90] sm:$0xff] %v2011
        %2044 = vst [vmem:[%s271 + $0x98] sm:$0xff] %v2012
        %2045 = vst [vmem:[%s271 + $0xa0] sm:$0xff] %v2013
        %2046 = vst [vmem:[%s271 + $0xa8] sm:$0xff] %v2014
        %2047 = vst [vmem:[%s271 + $0xb0] sm:$0xff] %v2015
        %2048 = vst [vmem:[%s271 + $0xb8] sm:$0xff] %v2016
        %2049 = vst [vmem:[%s271 + $0xc0] sm:$0xff] %v2017
        %2050 = vst [vmem:[%s271 + $0xc8] sm:$0xff] %v2018
        %2051 = vst [vmem:[%s271 + $0xd0] sm:$0xff] %v2019
        %2052 = vst [vmem:[%s271 + $0xd8] sm:$0xff] %v2020
        %2053 = vst [vmem:[%s271 + $0xe0] sm:$0xff] %v2021
        %2054 = vst [vmem:[%s271 + $0xe8] sm:$0xff] %v2022
        %2055 = vst [vmem:[%s271 + $0xf0] sm:$0xff] %v2023
        %2056 = vst [vmem:[%s271 + $0xf8] sm:$0xff] %v2024
        %v2057 = vld [vmem:[%s442] sm:$0xff]
        %v2058 = vld [vmem:[%s442 + $0x8] sm:$0xff]
        %v2059 = vld [vmem:[%s442 + $0x18] sm:$0xff]
        %v2060 = vld [vmem:[%s442 + $0x20] sm:$0xff]
        %v2061 = vld [vmem:[%s442 + $0x30] sm:$0xff]
        %v2062 = vld [vmem:[%s442 + $0x38] sm:$0xff]
        %v2063 = vld [vmem:[%s442 + $0x48] sm:$0xff]
        %v2064 = vld [vmem:[%s442 + $0x50] sm:$0xff]
        %v2065 = vld [vmem:[%s442 + $0x60] sm:$0xff]
        %v2066 = vld [vmem:[%s442 + $0x68] sm:$0xff]
        %v2067 = vld [vmem:[%s442 + $0x78] sm:$0xff]
        %v2068 = vld [vmem:[%s442 + $0x80] sm:$0xff]
        %v2069 = vld [vmem:[%s442 + $0x90] sm:$0xff]
        %v2070 = vld [vmem:[%s442 + $0x98] sm:$0xff]
        %v2071 = vld [vmem:[%s442 + $0xa8] sm:$0xff]
        %v2072 = vld [vmem:[%s442 + $0xb0] sm:$0xff]
        %v2073 = vld [vmem:[%s442 + $0xc0] sm:$0xff]
        %v2074 = vld [vmem:[%s442 + $0xc8] sm:$0xff]
        %v2075 = vld [vmem:[%s442 + $0xd8] sm:$0xff]
        %v2076 = vld [vmem:[%s442 + $0xe0] sm:$0xff]
        %v2077 = vld [vmem:[%s442 + $0xf0] sm:$0xff]
        %v2078 = vld [vmem:[%s442 + $0xf8] sm:$0xff]
        %v2079 = vld [vmem:[%s442 + $0x108] sm:$0xff]
        %v2080 = vld [vmem:[%s442 + $0x110] sm:$0xff]
        %v2081 = vld [vmem:[%s442 + $0x120] sm:$0xff]
        %v2082 = vld [vmem:[%s442 + $0x128] sm:$0xff]
        %v2083 = vld [vmem:[%s442 + $0x138] sm:$0xff]
        %v2084 = vld [vmem:[%s442 + $0x140] sm:$0xff]
        %v2085 = vld [vmem:[%s442 + $0x150] sm:$0xff]
        %v2086 = vld [vmem:[%s442 + $0x158] sm:$0xff]
        %v2087 = vld [vmem:[%s442 + $0x168] sm:$0xff]
        %v2088 = vld [vmem:[%s442 + $0x170] sm:$0xff]
        %v2089 = vpack.c.bf16 %v2058, %v2057
        %v2090 = vpack.c.bf16 %v2060, %v2059
        %v2091 = vpack.c.bf16 %v2062, %v2061
        %v2092 = vpack.c.bf16 %v2064, %v2063
        %v2093 = vpack.c.bf16 %v2066, %v2065
        %v2094 = vpack.c.bf16 %v2068, %v2067
        %v2095 = vpack.c.bf16 %v2070, %v2069
        %v2096 = vpack.c.bf16 %v2072, %v2071
        %v2097 = vpack.c.bf16 %v2074, %v2073
        %v2098 = vpack.c.bf16 %v2076, %v2075
        %v2099 = vpack.c.bf16 %v2078, %v2077
        %v2100 = vpack.c.bf16 %v2080, %v2079
        %v2101 = vpack.c.bf16 %v2082, %v2081
        %v2102 = vpack.c.bf16 %v2084, %v2083
        %v2103 = vpack.c.bf16 %v2086, %v2085
        %v2104 = vpack.c.bf16 %v2088, %v2087
        %s2105 = scalar_lea.vmem %s5, 96
        %v2106 = vld [vmem:[%s2105] sm:$0xf]
        %v2107 = vld [vmem:[%s2105 + $0x4] sm:$0xf]
        %v2108 = vld [vmem:[%s2105 + $0x8] sm:$0xf]
        %v2109 = vld [vmem:[%s2105 + $0xc] sm:$0xf]
        %v2110 = vld [vmem:[%s2105 + $0x10] sm:$0xf]
        %v2111 = vld [vmem:[%s2105 + $0x14] sm:$0xf]
        %v2112 = vld [vmem:[%s2105 + $0x18] sm:$0xf]
        %v2113 = vld [vmem:[%s2105 + $0x1c] sm:$0xf]
        %v2122 = vunpack.c.l.b16 %v2106
        %v2123 = vunpack.c.l.b16 %v2107
        %v2124 = vunpack.c.l.b16 %v2108
        %v2125 = vunpack.c.l.b16 %v2109
        %v2126 = vunpack.c.l.b16 %v2110
        %v2127 = vunpack.c.l.b16 %v2111
        %v2128 = vunpack.c.l.b16 %v2112
        %v2129 = vunpack.c.l.b16 %v2113
        %v2130 = vpack.c.b16 %v2123, %v2122
        %v2131 = vpack.c.b16 %v2125, %v2124
        %v2132 = vpack.c.b16 %v2127, %v2126
        %v2133 = vpack.c.b16 %v2129, %v2128
        %v2139 = vsel %vm386, %v2089, 0
        %v2142 = vsel %vm386, %v2090, 0
        %v2145 = vsel %vm386, %v2091, 0
        %v2148 = vsel %vm386, %v2092, 0
        %v2151 = vsel %vm386, %v2093, 0
        %v2154 = vsel %vm386, %v2094, 0
        %v2157 = vsel %vm386, %v2095, 0
        %v2160 = vsel %vm386, %v2096, 0
        %v2163 = vsel %vm386, %v2097, 0
        %v2166 = vsel %vm386, %v2098, 0
        %v2169 = vsel %vm386, %v2099, 0
        %v2172 = vsel %vm386, %v2100, 0
        %v2175 = vsel %vm386, %v2101, 0
        %v2178 = vsel %vm386, %v2102, 0
        %v2181 = vsel %vm386, %v2103, 0
        %v2184 = vsel %vm386, %v2104, 0
        %2186 = vmatprep.subr.bf16.mxu0 0
        %2187 = vmatpush1.bf16.msra.mxu0 %v2130
        %2188 = vmatprep.subr.bf16.mxu0 0
        %2189 = vmatpush1.bf16.msra.mxu0 %v2131
        %2190 = vmatprep.subr.bf16.mxu0 0
        %2191 = vmatpush1.bf16.msra.mxu0 %v2132
        %2192 = vmatprep.subr.bf16.mxu0 0
        %2193 = vmatpush1.bf16.msra.mxu0 %v2133
        %2194 = vmatprep.subr.bf16.mxu0 0
        %2195 = vmatpush1.bf16.msra.mxu0 0
        %2196 = vmatprep.subr.bf16.mxu0 0
        %2197 = vmatpush1.bf16.msra.mxu0 0
        %2198 = vmatprep.subr.bf16.mxu0 0
        %2199 = vmatpush1.bf16.msra.mxu0 0
        %2200 = vmatprep.subr.bf16.mxu0 0
        %2201 = vmatpush1.bf16.msra.mxu0 0
        %2202 = vmatprep.subr.bf16.mxu0 0
        %2203 = vmatpush1.bf16.msra.mxu0 0
        %2204 = vmatprep.subr.bf16.mxu0 0
        %2205 = vmatpush1.bf16.msra.mxu0 0
        %2206 = vmatprep.subr.bf16.mxu0 0
        %2207 = vmatpush1.bf16.msra.mxu0 0
        %2208 = vmatprep.subr.bf16.mxu0 0
        %2209 = vmatpush1.bf16.msra.mxu0 0
        %2210 = vmatprep.subr.bf16.mxu0 0
        %2211 = vmatpush1.bf16.msra.mxu0 0
        %2212 = vmatprep.subr.bf16.mxu0 0
        %2213 = vmatpush1.bf16.msra.mxu0 0
        %2214 = vmatprep.subr.bf16.mxu0 0
        %2215 = vmatpush1.bf16.msra.mxu0 0
        %2216 = vmatprep.subr.bf16.mxu0 0
        %2217 = vmatpush1.bf16.msra.mxu0 0
        %2218 = vmatprep.mubr.bf16.mxu0 0
        %2219 = vmatmul.mubr.bf16.gmra.mrb[0].mxu0 %v2139
        %v2220 = vpop.f32.mrb[0].mxu0
        %v2221 = vadd.f32 0.0, %v2220
        %v2222 = vpop.f32.mrb[0].mxu0
        %v2223 = vpop.f32.mrb[0].mxu0
        %v2224 = vadd.f32 0.0, %v2223
        %v2225 = vpop.f32.mrb[0].mxu0
        %2226 = vmatprep.mubr.bf16.mxu0 0
        %2227 = vmatmul.mubr.bf16.gmra.mrb[0].mxu0 %v2142
        %v2228 = vpop.f32.mrb[0].mxu0
        %v2229 = vadd.f32 0.0, %v2228
        %v2230 = vpop.f32.mrb[0].mxu0
        %v2231 = vpop.f32.mrb[0].mxu0
        %v2232 = vadd.f32 0.0, %v2231
        %v2233 = vpop.f32.mrb[0].mxu0
        %2234 = vmatprep.mubr.bf16.mxu0 0
        %2235 = vmatmul.mubr.bf16.gmra.mrb[0].mxu0 %v2145
        %v2236 = vpop.f32.mrb[0].mxu0
        %v2237 = vadd.f32 0.0, %v2236
        %v2238 = vpop.f32.mrb[0].mxu0
        %v2239 = vpop.f32.mrb[0].mxu0
        %v2240 = vadd.f32 0.0, %v2239
        %v2241 = vpop.f32.mrb[0].mxu0
        %2242 = vmatprep.mubr.bf16.mxu0 0
        %2243 = vmatmul.mubr.bf16.gmra.mrb[0].mxu0 %v2148
        %v2244 = vpop.f32.mrb[0].mxu0
        %v2245 = vadd.f32 0.0, %v2244
        %v2246 = vpop.f32.mrb[0].mxu0
        %v2247 = vpop.f32.mrb[0].mxu0
        %v2248 = vadd.f32 0.0, %v2247
        %v2249 = vpop.f32.mrb[0].mxu0
        %2250 = vmatprep.mubr.bf16.mxu0 0
        %2251 = vmatmul.mubr.bf16.gmra.mrb[0].mxu0 %v2151
        %v2252 = vpop.f32.mrb[0].mxu0
        %v2253 = vadd.f32 0.0, %v2252
        %v2254 = vpop.f32.mrb[0].mxu0
        %v2255 = vpop.f32.mrb[0].mxu0
        %v2256 = vadd.f32 0.0, %v2255
        %v2257 = vpop.f32.mrb[0].mxu0
        %2258 = vmatprep.mubr.bf16.mxu0 0
        %2259 = vmatmul.mubr.bf16.gmra.mrb[0].mxu0 %v2154
        %v2260 = vpop.f32.mrb[0].mxu0
        %v2261 = vadd.f32 0.0, %v2260
        %v2262 = vpop.f32.mrb[0].mxu0
        %v2263 = vpop.f32.mrb[0].mxu0
        %v2264 = vadd.f32 0.0, %v2263
        %v2265 = vpop.f32.mrb[0].mxu0
        %2266 = vmatprep.mubr.bf16.mxu0 0
        %2267 = vmatmul.mubr.bf16.gmra.mrb[0].mxu0 %v2157
        %v2268 = vpop.f32.mrb[0].mxu0
        %v2269 = vadd.f32 0.0, %v2268
        %v2270 = vpop.f32.mrb[0].mxu0
        %v2271 = vpop.f32.mrb[0].mxu0
        %v2272 = vadd.f32 0.0, %v2271
        %v2273 = vpop.f32.mrb[0].mxu0
        %2274 = vmatprep.mubr.bf16.mxu0 0
        %2275 = vmatmul.mubr.bf16.gmra.mrb[0].mxu0 %v2160
        %v2276 = vpop.f32.mrb[0].mxu0
        %v2277 = vadd.f32 0.0, %v2276
        %v2278 = vpop.f32.mrb[0].mxu0
        %v2279 = vpop.f32.mrb[0].mxu0
        %v2280 = vadd.f32 0.0, %v2279
        %v2281 = vpop.f32.mrb[0].mxu0
        %2282 = vmatprep.mubr.bf16.mxu0 0
        %2283 = vmatmul.mubr.bf16.gmra.mrb[0].mxu0 %v2163
        %v2284 = vpop.f32.mrb[0].mxu0
        %v2285 = vadd.f32 0.0, %v2284
        %v2286 = vpop.f32.mrb[0].mxu0
        %v2287 = vpop.f32.mrb[0].mxu0
        %v2288 = vadd.f32 0.0, %v2287
        %v2289 = vpop.f32.mrb[0].mxu0
        %2290 = vmatprep.mubr.bf16.mxu0 0
        %2291 = vmatmul.mubr.bf16.gmra.mrb[0].mxu0 %v2166
        %v2292 = vpop.f32.mrb[0].mxu0
        %v2293 = vadd.f32 0.0, %v2292
        %v2294 = vpop.f32.mrb[0].mxu0
        %v2295 = vpop.f32.mrb[0].mxu0
        %v2296 = vadd.f32 0.0, %v2295
        %v2297 = vpop.f32.mrb[0].mxu0
        %2298 = vmatprep.mubr.bf16.mxu0 0
        %2299 = vmatmul.mubr.bf16.gmra.mrb[0].mxu0 %v2169
        %v2300 = vpop.f32.mrb[0].mxu0
        %v2301 = vadd.f32 0.0, %v2300
        %v2302 = vpop.f32.mrb[0].mxu0
        %v2303 = vpop.f32.mrb[0].mxu0
        %v2304 = vadd.f32 0.0, %v2303
        %v2305 = vpop.f32.mrb[0].mxu0
        %2306 = vmatprep.mubr.bf16.mxu0 0
        %2307 = vmatmul.mubr.bf16.gmra.mrb[0].mxu0 %v2172
        %v2308 = vpop.f32.mrb[0].mxu0
        %v2309 = vadd.f32 0.0, %v2308
        %v2310 = vpop.f32.mrb[0].mxu0
        %v2311 = vpop.f32.mrb[0].mxu0
        %v2312 = vadd.f32 0.0, %v2311
        %v2313 = vpop.f32.mrb[0].mxu0
        %2314 = vmatprep.mubr.bf16.mxu0 0
        %2315 = vmatmul.mubr.bf16.gmra.mrb[0].mxu0 %v2175
        %v2316 = vpop.f32.mrb[0].mxu0
        %v2317 = vadd.f32 0.0, %v2316
        %v2318 = vpop.f32.mrb[0].mxu0
        %v2319 = vpop.f32.mrb[0].mxu0
        %v2320 = vadd.f32 0.0, %v2319
        %v2321 = vpop.f32.mrb[0].mxu0
        %2322 = vmatprep.mubr.bf16.mxu0 0
        %2323 = vmatmul.mubr.bf16.gmra.mrb[0].mxu0 %v2178
        %v2324 = vpop.f32.mrb[0].mxu0
        %v2325 = vadd.f32 0.0, %v2324
        %v2326 = vpop.f32.mrb[0].mxu0
        %v2327 = vpop.f32.mrb[0].mxu0
        %v2328 = vadd.f32 0.0, %v2327
        %v2329 = vpop.f32.mrb[0].mxu0
        %2330 = vmatprep.mubr.bf16.mxu0 0
        %2331 = vmatmul.mubr.bf16.gmra.mrb[0].mxu0 %v2181
        %v2332 = vpop.f32.mrb[0].mxu0
        %v2333 = vadd.f32 0.0, %v2332
        %v2334 = vpop.f32.mrb[0].mxu0
        %v2335 = vpop.f32.mrb[0].mxu0
        %v2336 = vadd.f32 0.0, %v2335
        %v2337 = vpop.f32.mrb[0].mxu0
        %2338 = vmatprep.mubr.bf16.mxu0 0
        %2339 = vmatmul.mubr.bf16.gmra.mrb[0].mxu0 %v2184
        %v2340 = vpop.f32.mrb[0].mxu0
        %v2341 = vadd.f32 0.0, %v2340
        %v2342 = vpop.f32.mrb[0].mxu0
        %v2343 = vpop.f32.mrb[0].mxu0
        %v2344 = vadd.f32 0.0, %v2343
        %v2345 = vpop.f32.mrb[0].mxu0
        %2346 = vdwg.mxu0
        %v2347 = vld [vmem:[%s271] sm:$0xff]
        %v2348 = vld [vmem:[%s271 + $0x8] sm:$0xff]
        %v2349 = vld [vmem:[%s271 + $0x10] sm:$0xff]
        %v2350 = vld [vmem:[%s271 + $0x18] sm:$0xff]
        %v2351 = vld [vmem:[%s271 + $0x20] sm:$0xff]
        %v2352 = vld [vmem:[%s271 + $0x28] sm:$0xff]
        %v2353 = vld [vmem:[%s271 + $0x30] sm:$0xff]
        %v2354 = vld [vmem:[%s271 + $0x38] sm:$0xff]
        %v2355 = vld [vmem:[%s271 + $0x40] sm:$0xff]
        %v2356 = vld [vmem:[%s271 + $0x48] sm:$0xff]
        %v2357 = vld [vmem:[%s271 + $0x50] sm:$0xff]
        %v2358 = vld [vmem:[%s271 + $0x58] sm:$0xff]
        %v2359 = vld [vmem:[%s271 + $0x60] sm:$0xff]
        %v2360 = vld [vmem:[%s271 + $0x68] sm:$0xff]
        %v2361 = vld [vmem:[%s271 + $0x70] sm:$0xff]
        %v2362 = vld [vmem:[%s271 + $0x78] sm:$0xff]
        %v2363 = vld [vmem:[%s271 + $0x80] sm:$0xff]
        %v2364 = vld [vmem:[%s271 + $0x88] sm:$0xff]
        %v2365 = vld [vmem:[%s271 + $0x90] sm:$0xff]
        %v2366 = vld [vmem:[%s271 + $0x98] sm:$0xff]
        %v2367 = vld [vmem:[%s271 + $0xa0] sm:$0xff]
        %v2368 = vld [vmem:[%s271 + $0xa8] sm:$0xff]
        %v2369 = vld [vmem:[%s271 + $0xb0] sm:$0xff]
        %v2370 = vld [vmem:[%s271 + $0xb8] sm:$0xff]
        %v2371 = vld [vmem:[%s271 + $0xc0] sm:$0xff]
        %v2372 = vld [vmem:[%s271 + $0xc8] sm:$0xff]
        %v2373 = vld [vmem:[%s271 + $0xd0] sm:$0xff]
        %v2374 = vld [vmem:[%s271 + $0xd8] sm:$0xff]
        %v2375 = vld [vmem:[%s271 + $0xe0] sm:$0xff]
        %v2376 = vld [vmem:[%s271 + $0xe8] sm:$0xff]
        %v2377 = vld [vmem:[%s271 + $0xf0] sm:$0xff]
        %v2378 = vld [vmem:[%s271 + $0xf8] sm:$0xff]
        %v2379 = vadd.f32 %v2347, %v2221
        %v2380 = vadd.f32 %v2348, %v2224
        %v2381 = vadd.f32 %v2349, %v2229
        %v2382 = vadd.f32 %v2350, %v2232
        %v2383 = vadd.f32 %v2351, %v2237
        %v2384 = vadd.f32 %v2352, %v2240
        %v2385 = vadd.f32 %v2353, %v2245
        %v2386 = vadd.f32 %v2354, %v2248
        %v2387 = vadd.f32 %v2355, %v2253
        %v2388 = vadd.f32 %v2356, %v2256
        %v2389 = vadd.f32 %v2357, %v2261
        %v2390 = vadd.f32 %v2358, %v2264
        %v2391 = vadd.f32 %v2359, %v2269
        %v2392 = vadd.f32 %v2360, %v2272
        %v2393 = vadd.f32 %v2361, %v2277
        %v2394 = vadd.f32 %v2362, %v2280
        %v2395 = vadd.f32 %v2363, %v2285
        %v2396 = vadd.f32 %v2364, %v2288
        %v2397 = vadd.f32 %v2365, %v2293
        %v2398 = vadd.f32 %v2366, %v2296
        %v2399 = vadd.f32 %v2367, %v2301
        %v2400 = vadd.f32 %v2368, %v2304
        %v2401 = vadd.f32 %v2369, %v2309
        %v2402 = vadd.f32 %v2370, %v2312
        %v2403 = vadd.f32 %v2371, %v2317
        %v2404 = vadd.f32 %v2372, %v2320
        %v2405 = vadd.f32 %v2373, %v2325
        %v2406 = vadd.f32 %v2374, %v2328
        %v2407 = vadd.f32 %v2375, %v2333
        %v2408 = vadd.f32 %v2376, %v2336
        %v2409 = vadd.f32 %v2377, %v2341
        %v2410 = vadd.f32 %v2378, %v2344
        %2411 = vst [vmem:[%s271] sm:$0xff] %v2379
        %2412 = vst [vmem:[%s271 + $0x8] sm:$0xff] %v2380
        %2413 = vst [vmem:[%s271 + $0x10] sm:$0xff] %v2381
        %2414 = vst [vmem:[%s271 + $0x18] sm:$0xff] %v2382
        %2415 = vst [vmem:[%s271 + $0x20] sm:$0xff] %v2383
        %2416 = vst [vmem:[%s271 + $0x28] sm:$0xff] %v2384
        %2417 = vst [vmem:[%s271 + $0x30] sm:$0xff] %v2385
        %2418 = vst [vmem:[%s271 + $0x38] sm:$0xff] %v2386
        %2419 = vst [vmem:[%s271 + $0x40] sm:$0xff] %v2387
        %2420 = vst [vmem:[%s271 + $0x48] sm:$0xff] %v2388
        %2421 = vst [vmem:[%s271 + $0x50] sm:$0xff] %v2389
        %2422 = vst [vmem:[%s271 + $0x58] sm:$0xff] %v2390
        %2423 = vst [vmem:[%s271 + $0x60] sm:$0xff] %v2391
        %2424 = vst [vmem:[%s271 + $0x68] sm:$0xff] %v2392
        %2425 = vst [vmem:[%s271 + $0x70] sm:$0xff] %v2393
        %2426 = vst [vmem:[%s271 + $0x78] sm:$0xff] %v2394
        %2427 = vst [vmem:[%s271 + $0x80] sm:$0xff] %v2395
        %2428 = vst [vmem:[%s271 + $0x88] sm:$0xff] %v2396
        %2429 = vst [vmem:[%s271 + $0x90] sm:$0xff] %v2397
        %2430 = vst [vmem:[%s271 + $0x98] sm:$0xff] %v2398
        %2431 = vst [vmem:[%s271 + $0xa0] sm:$0xff] %v2399
        %2432 = vst [vmem:[%s271 + $0xa8] sm:$0xff] %v2400
        %2433 = vst [vmem:[%s271 + $0xb0] sm:$0xff] %v2401
        %2434 = vst [vmem:[%s271 + $0xb8] sm:$0xff] %v2402
        %2435 = vst [vmem:[%s271 + $0xc0] sm:$0xff] %v2403
        %2436 = vst [vmem:[%s271 + $0xc8] sm:$0xff] %v2404
        %2437 = vst [vmem:[%s271 + $0xd0] sm:$0xff] %v2405
        %2438 = vst [vmem:[%s271 + $0xd8] sm:$0xff] %v2406
        %2439 = vst [vmem:[%s271 + $0xe0] sm:$0xff] %v2407
        %2440 = vst [vmem:[%s271 + $0xe8] sm:$0xff] %v2408
        %2441 = vst [vmem:[%s271 + $0xf0] sm:$0xff] %v2409
        %2442 = vst [vmem:[%s271 + $0xf8] sm:$0xff] %v2410
        %v2443 = vld [vmem:[%s442 + $0x1] sm:$0xff]
        %v2444 = vld [vmem:[%s442 + $0x9] sm:$0xff]
        %v2445 = vld [vmem:[%s442 + $0x19] sm:$0xff]
        %v2446 = vld [vmem:[%s442 + $0x21] sm:$0xff]
        %v2447 = vld [vmem:[%s442 + $0x31] sm:$0xff]
        %v2448 = vld [vmem:[%s442 + $0x39] sm:$0xff]
        %v2449 = vld [vmem:[%s442 + $0x49] sm:$0xff]
        %v2450 = vld [vmem:[%s442 + $0x51] sm:$0xff]
        %v2451 = vld [vmem:[%s442 + $0x61] sm:$0xff]
        %v2452 = vld [vmem:[%s442 + $0x69] sm:$0xff]
        %v2453 = vld [vmem:[%s442 + $0x79] sm:$0xff]
        %v2454 = vld [vmem:[%s442 + $0x81] sm:$0xff]
        %v2455 = vld [vmem:[%s442 + $0x91] sm:$0xff]
        %v2456 = vld [vmem:[%s442 + $0x99] sm:$0xff]
        %v2457 = vld [vmem:[%s442 + $0xa9] sm:$0xff]
        %v2458 = vld [vmem:[%s442 + $0xb1] sm:$0xff]
        %v2459 = vld [vmem:[%s442 + $0xc1] sm:$0xff]
        %v2460 = vld [vmem:[%s442 + $0xc9] sm:$0xff]
        %v2461 = vld [vmem:[%s442 + $0xd9] sm:$0xff]
        %v2462 = vld [vmem:[%s442 + $0xe1] sm:$0xff]
        %v2463 = vld [vmem:[%s442 + $0xf1] sm:$0xff]
        %v2464 = vld [vmem:[%s442 + $0xf9] sm:$0xff]
        %v2465 = vld [vmem:[%s442 + $0x109] sm:$0xff]
        %v2466 = vld [vmem:[%s442 + $0x111] sm:$0xff]
        %v2467 = vld [vmem:[%s442 + $0x121] sm:$0xff]
        %v2468 = vld [vmem:[%s442 + $0x129] sm:$0xff]
        %v2469 = vld [vmem:[%s442 + $0x139] sm:$0xff]
        %v2470 = vld [vmem:[%s442 + $0x141] sm:$0xff]
        %v2471 = vld [vmem:[%s442 + $0x151] sm:$0xff]
        %v2472 = vld [vmem:[%s442 + $0x159] sm:$0xff]
        %v2473 = vld [vmem:[%s442 + $0x169] sm:$0xff]
        %v2474 = vld [vmem:[%s442 + $0x171] sm:$0xff]
        %v2475 = vpack.c.bf16 %v2444, %v2443
        %v2476 = vpack.c.bf16 %v2446, %v2445
        %v2477 = vpack.c.bf16 %v2448, %v2447
        %v2478 = vpack.c.bf16 %v2450, %v2449
        %v2479 = vpack.c.bf16 %v2452, %v2451
        %v2480 = vpack.c.bf16 %v2454, %v2453
        %v2481 = vpack.c.bf16 %v2456, %v2455
        %v2482 = vpack.c.bf16 %v2458, %v2457
        %v2483 = vpack.c.bf16 %v2460, %v2459
        %v2484 = vpack.c.bf16 %v2462, %v2461
        %v2485 = vpack.c.bf16 %v2464, %v2463
        %v2486 = vpack.c.bf16 %v2466, %v2465
        %v2487 = vpack.c.bf16 %v2468, %v2467
        %v2488 = vpack.c.bf16 %v2470, %v2469
        %v2489 = vpack.c.bf16 %v2472, %v2471
        %v2490 = vpack.c.bf16 %v2474, %v2473
        %s2491 = scalar_lea.vmem %s5, 128
        %v2492 = vld [vmem:[%s2491] sm:$0xf]
        %v2493 = vld [vmem:[%s2491 + $0x4] sm:$0xf]
        %v2494 = vld [vmem:[%s2491 + $0x8] sm:$0xf]
        %v2495 = vld [vmem:[%s2491 + $0xc] sm:$0xf]
        %v2496 = vld [vmem:[%s2491 + $0x10] sm:$0xf]
        %v2497 = vld [vmem:[%s2491 + $0x14] sm:$0xf]
        %v2498 = vld [vmem:[%s2491 + $0x18] sm:$0xf]
        %v2499 = vld [vmem:[%s2491 + $0x1c] sm:$0xf]
        %v2508 = vunpack.c.l.b16 %v2492
        %v2509 = vunpack.c.l.b16 %v2493
        %v2510 = vunpack.c.l.b16 %v2494
        %v2511 = vunpack.c.l.b16 %v2495
        %v2512 = vunpack.c.l.b16 %v2496
        %v2513 = vunpack.c.l.b16 %v2497
        %v2514 = vunpack.c.l.b16 %v2498
        %v2515 = vunpack.c.l.b16 %v2499
        %v2516 = vpack.c.b16 %v2509, %v2508
        %v2517 = vpack.c.b16 %v2511, %v2510
        %v2518 = vpack.c.b16 %v2513, %v2512
        %v2519 = vpack.c.b16 %v2515, %v2514
        %v2525 = vsel %vm386, %v2475, 0
        %v2528 = vsel %vm386, %v2476, 0
        %v2531 = vsel %vm386, %v2477, 0
        %v2534 = vsel %vm386, %v2478, 0
        %v2537 = vsel %vm386, %v2479, 0
        %v2540 = vsel %vm386, %v2480, 0
        %v2543 = vsel %vm386, %v2481, 0
        %v2546 = vsel %vm386, %v2482, 0
        %v2549 = vsel %vm386, %v2483, 0
        %v2552 = vsel %vm386, %v2484, 0
        %v2555 = vsel %vm386, %v2485, 0
        %v2558 = vsel %vm386, %v2486, 0
        %v2561 = vsel %vm386, %v2487, 0
        %v2564 = vsel %vm386, %v2488, 0
        %v2567 = vsel %vm386, %v2489, 0
        %v2570 = vsel %vm386, %v2490, 0
        %2572 = vmatprep.subr.bf16.mxu0 0
        %2573 = vmatpush1.bf16.msra.mxu0 %v2516
        %2574 = vmatprep.subr.bf16.mxu0 0
        %2575 = vmatpush1.bf16.msra.mxu0 %v2517
        %2576 = vmatprep.subr.bf16.mxu0 0
        %2577 = vmatpush1.bf16.msra.mxu0 %v2518
        %2578 = vmatprep.subr.bf16.mxu0 0
        %2579 = vmatpush1.bf16.msra.mxu0 %v2519
        %2580 = vmatprep.subr.bf16.mxu0 0
        %2581 = vmatpush1.bf16.msra.mxu0 0
        %2582 = vmatprep.subr.bf16.mxu0 0
        %2583 = vmatpush1.bf16.msra.mxu0 0
        %2584 = vmatprep.subr.bf16.mxu0 0
        %2585 = vmatpush1.bf16.msra.mxu0 0
        %2586 = vmatprep.subr.bf16.mxu0 0
        %2587 = vmatpush1.bf16.msra.mxu0 0
        %2588 = vmatprep.subr.bf16.mxu0 0
        %2589 = vmatpush1.bf16.msra.mxu0 0
        %2590 = vmatprep.subr.bf16.mxu0 0
        %2591 = vmatpush1.bf16.msra.mxu0 0
        %2592 = vmatprep.subr.bf16.mxu0 0
        %2593 = vmatpush1.bf16.msra.mxu0 0
        %2594 = vmatprep.subr.bf16.mxu0 0
        %2595 = vmatpush1.bf16.msra.mxu0 0
        %2596 = vmatprep.subr.bf16.mxu0 0
        %2597 = vmatpush1.bf16.msra.mxu0 0
        %2598 = vmatprep.subr.bf16.mxu0 0
        %2599 = vmatpush1.bf16.msra.mxu0 0
        %2600 = vmatprep.subr.bf16.mxu0 0
        %2601 = vmatpush1.bf16.msra.mxu0 0
        %2602 = vmatprep.subr.bf16.mxu0 0
        %2603 = vmatpush1.bf16.msra.mxu0 0
        %2604 = vmatprep.mubr.bf16.mxu0 0
        %2605 = vmatmul.mubr.bf16.gmra.mrb[0].mxu0 %v2525
        %v2606 = vpop.f32.mrb[0].mxu0
        %v2607 = vadd.f32 0.0, %v2606
        %v2608 = vpop.f32.mrb[0].mxu0
        %v2609 = vpop.f32.mrb[0].mxu0
        %v2610 = vadd.f32 0.0, %v2609
        %v2611 = vpop.f32.mrb[0].mxu0
        %2612 = vmatprep.mubr.bf16.mxu0 0
        %2613 = vmatmul.mubr.bf16.gmra.mrb[0].mxu0 %v2528
        %v2614 = vpop.f32.mrb[0].mxu0
        %v2615 = vadd.f32 0.0, %v2614
        %v2616 = vpop.f32.mrb[0].mxu0
        %v2617 = vpop.f32.mrb[0].mxu0
        %v2618 = vadd.f32 0.0, %v2617
        %v2619 = vpop.f32.mrb[0].mxu0
        %2620 = vmatprep.mubr.bf16.mxu0 0
        %2621 = vmatmul.mubr.bf16.gmra.mrb[0].mxu0 %v2531
        %v2622 = vpop.f32.mrb[0].mxu0
        %v2623 = vadd.f32 0.0, %v2622
        %v2624 = vpop.f32.mrb[0].mxu0
        %v2625 = vpop.f32.mrb[0].mxu0
        %v2626 = vadd.f32 0.0, %v2625
        %v2627 = vpop.f32.mrb[0].mxu0
        %2628 = vmatprep.mubr.bf16.mxu0 0
        %2629 = vmatmul.mubr.bf16.gmra.mrb[0].mxu0 %v2534
        %v2630 = vpop.f32.mrb[0].mxu0
        %v2631 = vadd.f32 0.0, %v2630
        %v2632 = vpop.f32.mrb[0].mxu0
        %v2633 = vpop.f32.mrb[0].mxu0
        %v2634 = vadd.f32 0.0, %v2633
        %v2635 = vpop.f32.mrb[0].mxu0
        %2636 = vmatprep.mubr.bf16.mxu0 0
        %2637 = vmatmul.mubr.bf16.gmra.mrb[0].mxu0 %v2537
        %v2638 = vpop.f32.mrb[0].mxu0
        %v2639 = vadd.f32 0.0, %v2638
        %v2640 = vpop.f32.mrb[0].mxu0
        %v2641 = vpop.f32.mrb[0].mxu0
        %v2642 = vadd.f32 0.0, %v2641
        %v2643 = vpop.f32.mrb[0].mxu0
        %2644 = vmatprep.mubr.bf16.mxu0 0
        %2645 = vmatmul.mubr.bf16.gmra.mrb[0].mxu0 %v2540
        %v2646 = vpop.f32.mrb[0].mxu0
        %v2647 = vadd.f32 0.0, %v2646
        %v2648 = vpop.f32.mrb[0].mxu0
        %v2649 = vpop.f32.mrb[0].mxu0
        %v2650 = vadd.f32 0.0, %v2649
        %v2651 = vpop.f32.mrb[0].mxu0
        %2652 = vmatprep.mubr.bf16.mxu0 0
        %2653 = vmatmul.mubr.bf16.gmra.mrb[0].mxu0 %v2543
        %v2654 = vpop.f32.mrb[0].mxu0
        %v2655 = vadd.f32 0.0, %v2654
        %v2656 = vpop.f32.mrb[0].mxu0
        %v2657 = vpop.f32.mrb[0].mxu0
        %v2658 = vadd.f32 0.0, %v2657
        %v2659 = vpop.f32.mrb[0].mxu0
        %2660 = vmatprep.mubr.bf16.mxu0 0
        %2661 = vmatmul.mubr.bf16.gmra.mrb[0].mxu0 %v2546
        %v2662 = vpop.f32.mrb[0].mxu0
        %v2663 = vadd.f32 0.0, %v2662
        %v2664 = vpop.f32.mrb[0].mxu0
        %v2665 = vpop.f32.mrb[0].mxu0
        %v2666 = vadd.f32 0.0, %v2665
        %v2667 = vpop.f32.mrb[0].mxu0
        %2668 = vmatprep.mubr.bf16.mxu0 0
        %2669 = vmatmul.mubr.bf16.gmra.mrb[0].mxu0 %v2549
        %v2670 = vpop.f32.mrb[0].mxu0
        %v2671 = vadd.f32 0.0, %v2670
        %v2672 = vpop.f32.mrb[0].mxu0
        %v2673 = vpop.f32.mrb[0].mxu0
        %v2674 = vadd.f32 0.0, %v2673
        %v2675 = vpop.f32.mrb[0].mxu0
        %2676 = vmatprep.mubr.bf16.mxu0 0
        %2677 = vmatmul.mubr.bf16.gmra.mrb[0].mxu0 %v2552
        %v2678 = vpop.f32.mrb[0].mxu0
        %v2679 = vadd.f32 0.0, %v2678
        %v2680 = vpop.f32.mrb[0].mxu0
        %v2681 = vpop.f32.mrb[0].mxu0
        %v2682 = vadd.f32 0.0, %v2681
        %v2683 = vpop.f32.mrb[0].mxu0
        %2684 = vmatprep.mubr.bf16.mxu0 0
        %2685 = vmatmul.mubr.bf16.gmra.mrb[0].mxu0 %v2555
        %v2686 = vpop.f32.mrb[0].mxu0
        %v2687 = vadd.f32 0.0, %v2686
        %v2688 = vpop.f32.mrb[0].mxu0
        %v2689 = vpop.f32.mrb[0].mxu0
        %v2690 = vadd.f32 0.0, %v2689
        %v2691 = vpop.f32.mrb[0].mxu0
        %2692 = vmatprep.mubr.bf16.mxu0 0
        %2693 = vmatmul.mubr.bf16.gmra.mrb[0].mxu0 %v2558
        %v2694 = vpop.f32.mrb[0].mxu0
        %v2695 = vadd.f32 0.0, %v2694
        %v2696 = vpop.f32.mrb[0].mxu0
        %v2697 = vpop.f32.mrb[0].mxu0
        %v2698 = vadd.f32 0.0, %v2697
        %v2699 = vpop.f32.mrb[0].mxu0
        %2700 = vmatprep.mubr.bf16.mxu0 0
        %2701 = vmatmul.mubr.bf16.gmra.mrb[0].mxu0 %v2561
        %v2702 = vpop.f32.mrb[0].mxu0
        %v2703 = vadd.f32 0.0, %v2702
        %v2704 = vpop.f32.mrb[0].mxu0
        %v2705 = vpop.f32.mrb[0].mxu0
        %v2706 = vadd.f32 0.0, %v2705
        %v2707 = vpop.f32.mrb[0].mxu0
        %2708 = vmatprep.mubr.bf16.mxu0 0
        %2709 = vmatmul.mubr.bf16.gmra.mrb[0].mxu0 %v2564
        %v2710 = vpop.f32.mrb[0].mxu0
        %v2711 = vadd.f32 0.0, %v2710
        %v2712 = vpop.f32.mrb[0].mxu0
        %v2713 = vpop.f32.mrb[0].mxu0
        %v2714 = vadd.f32 0.0, %v2713
        %v2715 = vpop.f32.mrb[0].mxu0
        %2716 = vmatprep.mubr.bf16.mxu0 0
        %2717 = vmatmul.mubr.bf16.gmra.mrb[0].mxu0 %v2567
        %v2718 = vpop.f32.mrb[0].mxu0
        %v2719 = vadd.f32 0.0, %v2718
        %v2720 = vpop.f32.mrb[0].mxu0
        %v2721 = vpop.f32.mrb[0].mxu0
        %v2722 = vadd.f32 0.0, %v2721
        %v2723 = vpop.f32.mrb[0].mxu0
        %2724 = vmatprep.mubr.bf16.mxu0 0
        %2725 = vmatmul.mubr.bf16.gmra.mrb[0].mxu0 %v2570
        %v2726 = vpop.f32.mrb[0].mxu0
        %v2727 = vadd.f32 0.0, %v2726
        %v2728 = vpop.f32.mrb[0].mxu0
        %v2729 = vpop.f32.mrb[0].mxu0
        %v2730 = vadd.f32 0.0, %v2729
        %v2731 = vpop.f32.mrb[0].mxu0
        %2732 = vdwg.mxu0
        %v2733 = vld [vmem:[%s271] sm:$0xff]
        %v2734 = vld [vmem:[%s271 + $0x8] sm:$0xff]
        %v2735 = vld [vmem:[%s271 + $0x10] sm:$0xff]
        %v2736 = vld [vmem:[%s271 + $0x18] sm:$0xff]
        %v2737 = vld [vmem:[%s271 + $0x20] sm:$0xff]
        %v2738 = vld [vmem:[%s271 + $0x28] sm:$0xff]
        %v2739 = vld [vmem:[%s271 + $0x30] sm:$0xff]
        %v2740 = vld [vmem:[%s271 + $0x38] sm:$0xff]
        %v2741 = vld [vmem:[%s271 + $0x40] sm:$0xff]
        %v2742 = vld [vmem:[%s271 + $0x48] sm:$0xff]
        %v2743 = vld [vmem:[%s271 + $0x50] sm:$0xff]
        %v2744 = vld [vmem:[%s271 + $0x58] sm:$0xff]
        %v2745 = vld [vmem:[%s271 + $0x60] sm:$0xff]
        %v2746 = vld [vmem:[%s271 + $0x68] sm:$0xff]
        %v2747 = vld [vmem:[%s271 + $0x70] sm:$0xff]
        %v2748 = vld [vmem:[%s271 + $0x78] sm:$0xff]
        %v2749 = vld [vmem:[%s271 + $0x80] sm:$0xff]
        %v2750 = vld [vmem:[%s271 + $0x88] sm:$0xff]
        %v2751 = vld [vmem:[%s271 + $0x90] sm:$0xff]
        %v2752 = vld [vmem:[%s271 + $0x98] sm:$0xff]
        %v2753 = vld [vmem:[%s271 + $0xa0] sm:$0xff]
        %v2754 = vld [vmem:[%s271 + $0xa8] sm:$0xff]
        %v2755 = vld [vmem:[%s271 + $0xb0] sm:$0xff]
        %v2756 = vld [vmem:[%s271 + $0xb8] sm:$0xff]
        %v2757 = vld [vmem:[%s271 + $0xc0] sm:$0xff]
        %v2758 = vld [vmem:[%s271 + $0xc8] sm:$0xff]
        %v2759 = vld [vmem:[%s271 + $0xd0] sm:$0xff]
        %v2760 = vld [vmem:[%s271 + $0xd8] sm:$0xff]
        %v2761 = vld [vmem:[%s271 + $0xe0] sm:$0xff]
        %v2762 = vld [vmem:[%s271 + $0xe8] sm:$0xff]
        %v2763 = vld [vmem:[%s271 + $0xf0] sm:$0xff]
        %v2764 = vld [vmem:[%s271 + $0xf8] sm:$0xff]
        %v2765 = vadd.f32 %v2733, %v2607
        %v2766 = vadd.f32 %v2734, %v2610
        %v2767 = vadd.f32 %v2735, %v2615
        %v2768 = vadd.f32 %v2736, %v2618
        %v2769 = vadd.f32 %v2737, %v2623
        %v2770 = vadd.f32 %v2738, %v2626
        %v2771 = vadd.f32 %v2739, %v2631
        %v2772 = vadd.f32 %v2740, %v2634
        %v2773 = vadd.f32 %v2741, %v2639
        %v2774 = vadd.f32 %v2742, %v2642
        %v2775 = vadd.f32 %v2743, %v2647
        %v2776 = vadd.f32 %v2744, %v2650
        %v2777 = vadd.f32 %v2745, %v2655
        %v2778 = vadd.f32 %v2746, %v2658
        %v2779 = vadd.f32 %v2747, %v2663
        %v2780 = vadd.f32 %v2748, %v2666
        %v2781 = vadd.f32 %v2749, %v2671
        %v2782 = vadd.f32 %v2750, %v2674
        %v2783 = vadd.f32 %v2751, %v2679
        %v2784 = vadd.f32 %v2752, %v2682
        %v2785 = vadd.f32 %v2753, %v2687
        %v2786 = vadd.f32 %v2754, %v2690
        %v2787 = vadd.f32 %v2755, %v2695
        %v2788 = vadd.f32 %v2756, %v2698
        %v2789 = vadd.f32 %v2757, %v2703
        %v2790 = vadd.f32 %v2758, %v2706
        %v2791 = vadd.f32 %v2759, %v2711
        %v2792 = vadd.f32 %v2760, %v2714
        %v2793 = vadd.f32 %v2761, %v2719
        %v2794 = vadd.f32 %v2762, %v2722
        %v2795 = vadd.f32 %v2763, %v2727
        %v2796 = vadd.f32 %v2764, %v2730
        %2797 = vst [vmem:[%s271] sm:$0xff] %v2765
        %2798 = vst [vmem:[%s271 + $0x8] sm:$0xff] %v2766
        %2799 = vst [vmem:[%s271 + $0x10] sm:$0xff] %v2767
        %2800 = vst [vmem:[%s271 + $0x18] sm:$0xff] %v2768
        %2801 = vst [vmem:[%s271 + $0x20] sm:$0xff] %v2769
        %2802 = vst [vmem:[%s271 + $0x28] sm:$0xff] %v2770
        %2803 = vst [vmem:[%s271 + $0x30] sm:$0xff] %v2771
        %2804 = vst [vmem:[%s271 + $0x38] sm:$0xff] %v2772
        %2805 = vst [vmem:[%s271 + $0x40] sm:$0xff] %v2773
        %2806 = vst [vmem:[%s271 + $0x48] sm:$0xff] %v2774
        %2807 = vst [vmem:[%s271 + $0x50] sm:$0xff] %v2775
        %2808 = vst [vmem:[%s271 + $0x58] sm:$0xff] %v2776
        %2809 = vst [vmem:[%s271 + $0x60] sm:$0xff] %v2777
        %2810 = vst [vmem:[%s271 + $0x68] sm:$0xff] %v2778
        %2811 = vst [vmem:[%s271 + $0x70] sm:$0xff] %v2779
        %2812 = vst [vmem:[%s271 + $0x78] sm:$0xff] %v2780
        %2813 = vst [vmem:[%s271 + $0x80] sm:$0xff] %v2781
        %2814 = vst [vmem:[%s271 + $0x88] sm:$0xff] %v2782
        %2815 = vst [vmem:[%s271 + $0x90] sm:$0xff] %v2783
        %2816 = vst [vmem:[%s271 + $0x98] sm:$0xff] %v2784
        %2817 = vst [vmem:[%s271 + $0xa0] sm:$0xff] %v2785
        %2818 = vst [vmem:[%s271 + $0xa8] sm:$0xff] %v2786
        %2819 = vst [vmem:[%s271 + $0xb0] sm:$0xff] %v2787
        %2820 = vst [vmem:[%s271 + $0xb8] sm:$0xff] %v2788
        %2821 = vst [vmem:[%s271 + $0xc0] sm:$0xff] %v2789
        %2822 = vst [vmem:[%s271 + $0xc8] sm:$0xff] %v2790
        %2823 = vst [vmem:[%s271 + $0xd0] sm:$0xff] %v2791
        %2824 = vst [vmem:[%s271 + $0xd8] sm:$0xff] %v2792
        %2825 = vst [vmem:[%s271 + $0xe0] sm:$0xff] %v2793
        %2826 = vst [vmem:[%s271 + $0xe8] sm:$0xff] %v2794
        %2827 = vst [vmem:[%s271 + $0xf0] sm:$0xff] %v2795
        %2828 = vst [vmem:[%s271 + $0xf8] sm:$0xff] %v2796
        %v2829 = vld [vmem:[%s442 + $0x2] sm:$0xff]
        %v2830 = vld [vmem:[%s442 + $0xa] sm:$0xff]
        %v2831 = vld [vmem:[%s442 + $0x1a] sm:$0xff]
        %v2832 = vld [vmem:[%s442 + $0x22] sm:$0xff]
        %v2833 = vld [vmem:[%s442 + $0x32] sm:$0xff]
        %v2834 = vld [vmem:[%s442 + $0x3a] sm:$0xff]
        %v2835 = vld [vmem:[%s442 + $0x4a] sm:$0xff]
        %v2836 = vld [vmem:[%s442 + $0x52] sm:$0xff]
        %v2837 = vld [vmem:[%s442 + $0x62] sm:$0xff]
        %v2838 = vld [vmem:[%s442 + $0x6a] sm:$0xff]
        %v2839 = vld [vmem:[%s442 + $0x7a] sm:$0xff]
        %v2840 = vld [vmem:[%s442 + $0x82] sm:$0xff]
        %v2841 = vld [vmem:[%s442 + $0x92] sm:$0xff]
        %v2842 = vld [vmem:[%s442 + $0x9a] sm:$0xff]
        %v2843 = vld [vmem:[%s442 + $0xaa] sm:$0xff]
        %v2844 = vld [vmem:[%s442 + $0xb2] sm:$0xff]
        %v2845 = vld [vmem:[%s442 + $0xc2] sm:$0xff]
        %v2846 = vld [vmem:[%s442 + $0xca] sm:$0xff]
        %v2847 = vld [vmem:[%s442 + $0xda] sm:$0xff]
        %v2848 = vld [vmem:[%s442 + $0xe2] sm:$0xff]
        %v2849 = vld [vmem:[%s442 + $0xf2] sm:$0xff]
        %v2850 = vld [vmem:[%s442 + $0xfa] sm:$0xff]
        %v2851 = vld [vmem:[%s442 + $0x10a] sm:$0xff]
        %v2852 = vld [vmem:[%s442 + $0x112] sm:$0xff]
        %v2853 = vld [vmem:[%s442 + $0x122] sm:$0xff]
        %v2854 = vld [vmem:[%s442 + $0x12a] sm:$0xff]
        %v2855 = vld [vmem:[%s442 + $0x13a] sm:$0xff]
        %v2856 = vld [vmem:[%s442 + $0x142] sm:$0xff]
        %v2857 = vld [vmem:[%s442 + $0x152] sm:$0xff]
        %v2858 = vld [vmem:[%s442 + $0x15a] sm:$0xff]
        %v2859 = vld [vmem:[%s442 + $0x16a] sm:$0xff]
        %v2860 = vld [vmem:[%s442 + $0x172] sm:$0xff]
        %v2861 = vpack.c.bf16 %v2830, %v2829
        %v2862 = vpack.c.bf16 %v2832, %v2831
        %v2863 = vpack.c.bf16 %v2834, %v2833
        %v2864 = vpack.c.bf16 %v2836, %v2835
        %v2865 = vpack.c.bf16 %v2838, %v2837
        %v2866 = vpack.c.bf16 %v2840, %v2839
        %v2867 = vpack.c.bf16 %v2842, %v2841
        %v2868 = vpack.c.bf16 %v2844, %v2843
        %v2869 = vpack.c.bf16 %v2846, %v2845
        %v2870 = vpack.c.bf16 %v2848, %v2847
        %v2871 = vpack.c.bf16 %v2850, %v2849
        %v2872 = vpack.c.bf16 %v2852, %v2851
        %v2873 = vpack.c.bf16 %v2854, %v2853
        %v2874 = vpack.c.bf16 %v2856, %v2855
        %v2875 = vpack.c.bf16 %v2858, %v2857
        %v2876 = vpack.c.bf16 %v2860, %v2859
        %s2877 = scalar_lea.vmem %s5, 160
        %v2878 = vld [vmem:[%s2877] sm:$0xf]
        %v2879 = vld [vmem:[%s2877 + $0x4] sm:$0xf]
        %v2880 = vld [vmem:[%s2877 + $0x8] sm:$0xf]
        %v2881 = vld [vmem:[%s2877 + $0xc] sm:$0xf]
        %v2882 = vld [vmem:[%s2877 + $0x10] sm:$0xf]
        %v2883 = vld [vmem:[%s2877 + $0x14] sm:$0xf]
        %v2884 = vld [vmem:[%s2877 + $0x18] sm:$0xf]
        %v2885 = vld [vmem:[%s2877 + $0x1c] sm:$0xf]
        %v2894 = vunpack.c.l.b16 %v2878
        %v2895 = vunpack.c.l.b16 %v2879
        %v2896 = vunpack.c.l.b16 %v2880
        %v2897 = vunpack.c.l.b16 %v2881
        %v2898 = vunpack.c.l.b16 %v2882
        %v2899 = vunpack.c.l.b16 %v2883
        %v2900 = vunpack.c.l.b16 %v2884
        %v2901 = vunpack.c.l.b16 %v2885
        %v2902 = vpack.c.b16 %v2895, %v2894
        %v2903 = vpack.c.b16 %v2897, %v2896
        %v2904 = vpack.c.b16 %v2899, %v2898
        %v2905 = vpack.c.b16 %v2901, %v2900
        %v2911 = vsel %vm386, %v2861, 0
        %v2914 = vsel %vm386, %v2862, 0
        %v2917 = vsel %vm386, %v2863, 0
        %v2920 = vsel %vm386, %v2864, 0
        %v2923 = vsel %vm386, %v2865, 0
        %v2926 = vsel %vm386, %v2866, 0
        %v2929 = vsel %vm386, %v2867, 0
        %v2932 = vsel %vm386, %v2868, 0
        %v2935 = vsel %vm386, %v2869, 0
        %v2938 = vsel %vm386, %v2870, 0
        %v2941 = vsel %vm386, %v2871, 0
        %v2944 = vsel %vm386, %v2872, 0
        %v2947 = vsel %vm386, %v2873, 0
        %v2950 = vsel %vm386, %v2874, 0
        %v2953 = vsel %vm386, %v2875, 0
        %v2956 = vsel %vm386, %v2876, 0
        %2958 = vmatprep.subr.bf16.mxu0 0
        %2959 = vmatpush1.bf16.msra.mxu0 %v2902
        %2960 = vmatprep.subr.bf16.mxu0 0
        %2961 = vmatpush1.bf16.msra.mxu0 %v2903
        %2962 = vmatprep.subr.bf16.mxu0 0
        %2963 = vmatpush1.bf16.msra.mxu0 %v2904
        %2964 = vmatprep.subr.bf16.mxu0 0
        %2965 = vmatpush1.bf16.msra.mxu0 %v2905
        %2966 = vmatprep.subr.bf16.mxu0 0
        %2967 = vmatpush1.bf16.msra.mxu0 0
        %2968 = vmatprep.subr.bf16.mxu0 0
        %2969 = vmatpush1.bf16.msra.mxu0 0
        %2970 = vmatprep.subr.bf16.mxu0 0
        %2971 = vmatpush1.bf16.msra.mxu0 0
        %2972 = vmatprep.subr.bf16.mxu0 0
        %2973 = vmatpush1.bf16.msra.mxu0 0
        %2974 = vmatprep.subr.bf16.mxu0 0
        %2975 = vmatpush1.bf16.msra.mxu0 0
        %2976 = vmatprep.subr.bf16.mxu0 0
        %2977 = vmatpush1.bf16.msra.mxu0 0
        %2978 = vmatprep.subr.bf16.mxu0 0
        %2979 = vmatpush1.bf16.msra.mxu0 0
        %2980 = vmatprep.subr.bf16.mxu0 0
        %2981 = vmatpush1.bf16.msra.mxu0 0
        %2982 = vmatprep.subr.bf16.mxu0 0
        %2983 = vmatpush1.bf16.msra.mxu0 0
        %2984 = vmatprep.subr.bf16.mxu0 0
        %2985 = vmatpush1.bf16.msra.mxu0 0
        %2986 = vmatprep.subr.bf16.mxu0 0
        %2987 = vmatpush1.bf16.msra.mxu0 0
        %2988 = vmatprep.subr.bf16.mxu0 0
        %2989 = vmatpush1.bf16.msra.mxu0 0
        %2990 = vmatprep.mubr.bf16.mxu0 0
        %2991 = vmatmul.mubr.bf16.gmra.mrb[0].mxu0 %v2911
        %v2992 = vpop.f32.mrb[0].mxu0
        %v2993 = vadd.f32 0.0, %v2992
        %v2994 = vpop.f32.mrb[0].mxu0
        %v2995 = vpop.f32.mrb[0].mxu0
        %v2996 = vadd.f32 0.0, %v2995
        %v2997 = vpop.f32.mrb[0].mxu0
        %2998 = vmatprep.mubr.bf16.mxu0 0
        %2999 = vmatmul.mubr.bf16.gmra.mrb[0].mxu0 %v2914
        %v3000 = vpop.f32.mrb[0].mxu0
        %v3001 = vadd.f32 0.0, %v3000
        %v3002 = vpop.f32.mrb[0].mxu0
        %v3003 = vpop.f32.mrb[0].mxu0
        %v3004 = vadd.f32 0.0, %v3003
        %v3005 = vpop.f32.mrb[0].mxu0
        %3006 = vmatprep.mubr.bf16.mxu0 0
        %3007 = vmatmul.mubr.bf16.gmra.mrb[0].mxu0 %v2917
        %v3008 = vpop.f32.mrb[0].mxu0
        %v3009 = vadd.f32 0.0, %v3008
        %v3010 = vpop.f32.mrb[0].mxu0
        %v3011 = vpop.f32.mrb[0].mxu0
        %v3012 = vadd.f32 0.0, %v3011
        %v3013 = vpop.f32.mrb[0].mxu0
        %3014 = vmatprep.mubr.bf16.mxu0 0
        %3015 = vmatmul.mubr.bf16.gmra.mrb[0].mxu0 %v2920
        %v3016 = vpop.f32.mrb[0].mxu0
        %v3017 = vadd.f32 0.0, %v3016
        %v3018 = vpop.f32.mrb[0].mxu0
        %v3019 = vpop.f32.mrb[0].mxu0
        %v3020 = vadd.f32 0.0, %v3019
        %v3021 = vpop.f32.mrb[0].mxu0
        %3022 = vmatprep.mubr.bf16.mxu0 0
        %3023 = vmatmul.mubr.bf16.gmra.mrb[0].mxu0 %v2923
        %v3024 = vpop.f32.mrb[0].mxu0
        %v3025 = vadd.f32 0.0, %v3024
        %v3026 = vpop.f32.mrb[0].mxu0
        %v3027 = vpop.f32.mrb[0].mxu0
        %v3028 = vadd.f32 0.0, %v3027
        %v3029 = vpop.f32.mrb[0].mxu0
        %3030 = vmatprep.mubr.bf16.mxu0 0
        %3031 = vmatmul.mubr.bf16.gmra.mrb[0].mxu0 %v2926
        %v3032 = vpop.f32.mrb[0].mxu0
        %v3033 = vadd.f32 0.0, %v3032
        %v3034 = vpop.f32.mrb[0].mxu0
        %v3035 = vpop.f32.mrb[0].mxu0
        %v3036 = vadd.f32 0.0, %v3035
        %v3037 = vpop.f32.mrb[0].mxu0
        %3038 = vmatprep.mubr.bf16.mxu0 0
        %3039 = vmatmul.mubr.bf16.gmra.mrb[0].mxu0 %v2929
        %v3040 = vpop.f32.mrb[0].mxu0
        %v3041 = vadd.f32 0.0, %v3040
        %v3042 = vpop.f32.mrb[0].mxu0
        %v3043 = vpop.f32.mrb[0].mxu0
        %v3044 = vadd.f32 0.0, %v3043
        %v3045 = vpop.f32.mrb[0].mxu0
        %3046 = vmatprep.mubr.bf16.mxu0 0
        %3047 = vmatmul.mubr.bf16.gmra.mrb[0].mxu0 %v2932
        %v3048 = vpop.f32.mrb[0].mxu0
        %v3049 = vadd.f32 0.0, %v3048
        %v3050 = vpop.f32.mrb[0].mxu0
        %v3051 = vpop.f32.mrb[0].mxu0
        %v3052 = vadd.f32 0.0, %v3051
        %v3053 = vpop.f32.mrb[0].mxu0
        %3054 = vmatprep.mubr.bf16.mxu0 0
        %3055 = vmatmul.mubr.bf16.gmra.mrb[0].mxu0 %v2935
        %v3056 = vpop.f32.mrb[0].mxu0
        %v3057 = vadd.f32 0.0, %v3056
        %v3058 = vpop.f32.mrb[0].mxu0
        %v3059 = vpop.f32.mrb[0].mxu0
        %v3060 = vadd.f32 0.0, %v3059
        %v3061 = vpop.f32.mrb[0].mxu0
        %3062 = vmatprep.mubr.bf16.mxu0 0
        %3063 = vmatmul.mubr.bf16.gmra.mrb[0].mxu0 %v2938
        %v3064 = vpop.f32.mrb[0].mxu0
        %v3065 = vadd.f32 0.0, %v3064
        %v3066 = vpop.f32.mrb[0].mxu0
        %v3067 = vpop.f32.mrb[0].mxu0
        %v3068 = vadd.f32 0.0, %v3067
        %v3069 = vpop.f32.mrb[0].mxu0
        %3070 = vmatprep.mubr.bf16.mxu0 0
        %3071 = vmatmul.mubr.bf16.gmra.mrb[0].mxu0 %v2941
        %v3072 = vpop.f32.mrb[0].mxu0
        %v3073 = vadd.f32 0.0, %v3072
        %v3074 = vpop.f32.mrb[0].mxu0
        %v3075 = vpop.f32.mrb[0].mxu0
        %v3076 = vadd.f32 0.0, %v3075
        %v3077 = vpop.f32.mrb[0].mxu0
        %3078 = vmatprep.mubr.bf16.mxu0 0
        %3079 = vmatmul.mubr.bf16.gmra.mrb[0].mxu0 %v2944
        %v3080 = vpop.f32.mrb[0].mxu0
        %v3081 = vadd.f32 0.0, %v3080
        %v3082 = vpop.f32.mrb[0].mxu0
        %v3083 = vpop.f32.mrb[0].mxu0
        %v3084 = vadd.f32 0.0, %v3083
        %v3085 = vpop.f32.mrb[0].mxu0
        %3086 = vmatprep.mubr.bf16.mxu0 0
        %3087 = vmatmul.mubr.bf16.gmra.mrb[0].mxu0 %v2947
        %v3088 = vpop.f32.mrb[0].mxu0
        %v3089 = vadd.f32 0.0, %v3088
        %v3090 = vpop.f32.mrb[0].mxu0
        %v3091 = vpop.f32.mrb[0].mxu0
        %v3092 = vadd.f32 0.0, %v3091
        %v3093 = vpop.f32.mrb[0].mxu0
        %3094 = vmatprep.mubr.bf16.mxu0 0
        %3095 = vmatmul.mubr.bf16.gmra.mrb[0].mxu0 %v2950
        %v3096 = vpop.f32.mrb[0].mxu0
        %v3097 = vadd.f32 0.0, %v3096
        %v3098 = vpop.f32.mrb[0].mxu0
        %v3099 = vpop.f32.mrb[0].mxu0
        %v3100 = vadd.f32 0.0, %v3099
        %v3101 = vpop.f32.mrb[0].mxu0
        %3102 = vmatprep.mubr.bf16.mxu0 0
        %3103 = vmatmul.mubr.bf16.gmra.mrb[0].mxu0 %v2953
        %v3104 = vpop.f32.mrb[0].mxu0
        %v3105 = vadd.f32 0.0, %v3104
        %v3106 = vpop.f32.mrb[0].mxu0
        %v3107 = vpop.f32.mrb[0].mxu0
        %v3108 = vadd.f32 0.0, %v3107
        %v3109 = vpop.f32.mrb[0].mxu0
        %3110 = vmatprep.mubr.bf16.mxu0 0
        %3111 = vmatmul.mubr.bf16.gmra.mrb[0].mxu0 %v2956
        %v3112 = vpop.f32.mrb[0].mxu0
        %v3113 = vadd.f32 0.0, %v3112
        %v3114 = vpop.f32.mrb[0].mxu0
        %v3115 = vpop.f32.mrb[0].mxu0
        %v3116 = vadd.f32 0.0, %v3115
        %v3117 = vpop.f32.mrb[0].mxu0
        %3118 = vdwg.mxu0
        %v3119 = vld [vmem:[%s271] sm:$0xff]
        %v3120 = vld [vmem:[%s271 + $0x8] sm:$0xff]
        %v3121 = vld [vmem:[%s271 + $0x10] sm:$0xff]
        %v3122 = vld [vmem:[%s271 + $0x18] sm:$0xff]
        %v3123 = vld [vmem:[%s271 + $0x20] sm:$0xff]
        %v3124 = vld [vmem:[%s271 + $0x28] sm:$0xff]
        %v3125 = vld [vmem:[%s271 + $0x30] sm:$0xff]
        %v3126 = vld [vmem:[%s271 + $0x38] sm:$0xff]
        %v3127 = vld [vmem:[%s271 + $0x40] sm:$0xff]
        %v3128 = vld [vmem:[%s271 + $0x48] sm:$0xff]
        %v3129 = vld [vmem:[%s271 + $0x50] sm:$0xff]
        %v3130 = vld [vmem:[%s271 + $0x58] sm:$0xff]
        %v3131 = vld [vmem:[%s271 + $0x60] sm:$0xff]
        %v3132 = vld [vmem:[%s271 + $0x68] sm:$0xff]
        %v3133 = vld [vmem:[%s271 + $0x70] sm:$0xff]
        %v3134 = vld [vmem:[%s271 + $0x78] sm:$0xff]
        %v3135 = vld [vmem:[%s271 + $0x80] sm:$0xff]
        %v3136 = vld [vmem:[%s271 + $0x88] sm:$0xff]
        %v3137 = vld [vmem:[%s271 + $0x90] sm:$0xff]
        %v3138 = vld [vmem:[%s271 + $0x98] sm:$0xff]
        %v3139 = vld [vmem:[%s271 + $0xa0] sm:$0xff]
        %v3140 = vld [vmem:[%s271 + $0xa8] sm:$0xff]
        %v3141 = vld [vmem:[%s271 + $0xb0] sm:$0xff]
        %v3142 = vld [vmem:[%s271 + $0xb8] sm:$0xff]
        %v3143 = vld [vmem:[%s271 + $0xc0] sm:$0xff]
        %v3144 = vld [vmem:[%s271 + $0xc8] sm:$0xff]
        %v3145 = vld [vmem:[%s271 + $0xd0] sm:$0xff]
        %v3146 = vld [vmem:[%s271 + $0xd8] sm:$0xff]
        %v3147 = vld [vmem:[%s271 + $0xe0] sm:$0xff]
        %v3148 = vld [vmem:[%s271 + $0xe8] sm:$0xff]
        %v3149 = vld [vmem:[%s271 + $0xf0] sm:$0xff]
        %v3150 = vld [vmem:[%s271 + $0xf8] sm:$0xff]
        %v3151 = vadd.f32 %v3119, %v2993
        %v3152 = vadd.f32 %v3120, %v2996
        %v3153 = vadd.f32 %v3121, %v3001
        %v3154 = vadd.f32 %v3122, %v3004
        %v3155 = vadd.f32 %v3123, %v3009
        %v3156 = vadd.f32 %v3124, %v3012
        %v3157 = vadd.f32 %v3125, %v3017
        %v3158 = vadd.f32 %v3126, %v3020
        %v3159 = vadd.f32 %v3127, %v3025
        %v3160 = vadd.f32 %v3128, %v3028
        %v3161 = vadd.f32 %v3129, %v3033
        %v3162 = vadd.f32 %v3130, %v3036
        %v3163 = vadd.f32 %v3131, %v3041
        %v3164 = vadd.f32 %v3132, %v3044
        %v3165 = vadd.f32 %v3133, %v3049
        %v3166 = vadd.f32 %v3134, %v3052
        %v3167 = vadd.f32 %v3135, %v3057
        %v3168 = vadd.f32 %v3136, %v3060
        %v3169 = vadd.f32 %v3137, %v3065
        %v3170 = vadd.f32 %v3138, %v3068
        %v3171 = vadd.f32 %v3139, %v3073
        %v3172 = vadd.f32 %v3140, %v3076
        %v3173 = vadd.f32 %v3141, %v3081
        %v3174 = vadd.f32 %v3142, %v3084
        %v3175 = vadd.f32 %v3143, %v3089
        %v3176 = vadd.f32 %v3144, %v3092
        %v3177 = vadd.f32 %v3145, %v3097
        %v3178 = vadd.f32 %v3146, %v3100
        %v3179 = vadd.f32 %v3147, %v3105
        %v3180 = vadd.f32 %v3148, %v3108
        %v3181 = vadd.f32 %v3149, %v3113
        %v3182 = vadd.f32 %v3150, %v3116
        %3183 = vst [vmem:[%s271] sm:$0xff] %v3151
        %3184 = vst [vmem:[%s271 + $0x8] sm:$0xff] %v3152
        %3185 = vst [vmem:[%s271 + $0x10] sm:$0xff] %v3153
        %3186 = vst [vmem:[%s271 + $0x18] sm:$0xff] %v3154
        %3187 = vst [vmem:[%s271 + $0x20] sm:$0xff] %v3155
        %3188 = vst [vmem:[%s271 + $0x28] sm:$0xff] %v3156
        %3189 = vst [vmem:[%s271 + $0x30] sm:$0xff] %v3157
        %3190 = vst [vmem:[%s271 + $0x38] sm:$0xff] %v3158
        %3191 = vst [vmem:[%s271 + $0x40] sm:$0xff] %v3159
        %3192 = vst [vmem:[%s271 + $0x48] sm:$0xff] %v3160
        %3193 = vst [vmem:[%s271 + $0x50] sm:$0xff] %v3161
        %3194 = vst [vmem:[%s271 + $0x58] sm:$0xff] %v3162
        %3195 = vst [vmem:[%s271 + $0x60] sm:$0xff] %v3163
        %3196 = vst [vmem:[%s271 + $0x68] sm:$0xff] %v3164
        %3197 = vst [vmem:[%s271 + $0x70] sm:$0xff] %v3165
        %3198 = vst [vmem:[%s271 + $0x78] sm:$0xff] %v3166
        %3199 = vst [vmem:[%s271 + $0x80] sm:$0xff] %v3167
        %3200 = vst [vmem:[%s271 + $0x88] sm:$0xff] %v3168
        %3201 = vst [vmem:[%s271 + $0x90] sm:$0xff] %v3169
        %3202 = vst [vmem:[%s271 + $0x98] sm:$0xff] %v3170
        %3203 = vst [vmem:[%s271 + $0xa0] sm:$0xff] %v3171
        %3204 = vst [vmem:[%s271 + $0xa8] sm:$0xff] %v3172
        %3205 = vst [vmem:[%s271 + $0xb0] sm:$0xff] %v3173
        %3206 = vst [vmem:[%s271 + $0xb8] sm:$0xff] %v3174
        %3207 = vst [vmem:[%s271 + $0xc0] sm:$0xff] %v3175
        %3208 = vst [vmem:[%s271 + $0xc8] sm:$0xff] %v3176
        %3209 = vst [vmem:[%s271 + $0xd0] sm:$0xff] %v3177
        %3210 = vst [vmem:[%s271 + $0xd8] sm:$0xff] %v3178
        %3211 = vst [vmem:[%s271 + $0xe0] sm:$0xff] %v3179
        %3212 = vst [vmem:[%s271 + $0xe8] sm:$0xff] %v3180
        %3213 = vst [vmem:[%s271 + $0xf0] sm:$0xff] %v3181
        %3214 = vst [vmem:[%s271 + $0xf8] sm:$0xff] %v3182
        %s3215 = scalar_lea.vmem [#allocation2], 48
        %v3216 = vld [vmem:[%s3215] sm:$0xff]
        %v3217 = vld [vmem:[%s3215 + $0x8] sm:$0xff]
        %v3218 = vld [vmem:[%s3215 + $0x18] sm:$0xff]
        %v3219 = vld [vmem:[%s3215 + $0x20] sm:$0xff]
        %v3220 = vld [vmem:[%s3215 + $0x30] sm:$0xff]
        %v3221 = vld [vmem:[%s3215 + $0x38] sm:$0xff]
        %v3222 = vld [vmem:[%s3215 + $0x48] sm:$0xff]
        %v3223 = vld [vmem:[%s3215 + $0x50] sm:$0xff]
        %v3224 = vld [vmem:[%s3215 + $0x60] sm:$0xff]
        %v3225 = vld [vmem:[%s3215 + $0x68] sm:$0xff]
        %v3226 = vld [vmem:[%s3215 + $0x78] sm:$0xff]
        %v3227 = vld [vmem:[%s3215 + $0x80] sm:$0xff]
        %v3228 = vld [vmem:[%s3215 + $0x90] sm:$0xff]
        %v3229 = vld [vmem:[%s3215 + $0x98] sm:$0xff]
        %v3230 = vld [vmem:[%s3215 + $0xa8] sm:$0xff]
        %v3231 = vld [vmem:[%s3215 + $0xb0] sm:$0xff]
        %v3232 = vld [vmem:[%s3215 + $0xc0] sm:$0xff]
        %v3233 = vld [vmem:[%s3215 + $0xc8] sm:$0xff]
        %v3234 = vld [vmem:[%s3215 + $0xd8] sm:$0xff]
        %v3235 = vld [vmem:[%s3215 + $0xe0] sm:$0xff]
        %v3236 = vld [vmem:[%s3215 + $0xf0] sm:$0xff]
        %v3237 = vld [vmem:[%s3215 + $0xf8] sm:$0xff]
        %v3238 = vld [vmem:[%s3215 + $0x108] sm:$0xff]
        %v3239 = vld [vmem:[%s3215 + $0x110] sm:$0xff]
        %v3240 = vld [vmem:[%s3215 + $0x120] sm:$0xff]
        %v3241 = vld [vmem:[%s3215 + $0x128] sm:$0xff]
        %v3242 = vld [vmem:[%s3215 + $0x138] sm:$0xff]
        %v3243 = vld [vmem:[%s3215 + $0x140] sm:$0xff]
        %v3244 = vld [vmem:[%s3215 + $0x150] sm:$0xff]
        %v3245 = vld [vmem:[%s3215 + $0x158] sm:$0xff]
        %v3246 = vld [vmem:[%s3215 + $0x168] sm:$0xff]
        %v3247 = vld [vmem:[%s3215 + $0x170] sm:$0xff]
        %v3248 = vpack.c.bf16 %v3217, %v3216
        %v3249 = vpack.c.bf16 %v3219, %v3218
        %v3250 = vpack.c.bf16 %v3221, %v3220
        %v3251 = vpack.c.bf16 %v3223, %v3222
        %v3252 = vpack.c.bf16 %v3225, %v3224
        %v3253 = vpack.c.bf16 %v3227, %v3226
        %v3254 = vpack.c.bf16 %v3229, %v3228
        %v3255 = vpack.c.bf16 %v3231, %v3230
        %v3256 = vpack.c.bf16 %v3233, %v3232
        %v3257 = vpack.c.bf16 %v3235, %v3234
        %v3258 = vpack.c.bf16 %v3237, %v3236
        %v3259 = vpack.c.bf16 %v3239, %v3238
        %v3260 = vpack.c.bf16 %v3241, %v3240
        %v3261 = vpack.c.bf16 %v3243, %v3242
        %v3262 = vpack.c.bf16 %v3245, %v3244
        %v3263 = vpack.c.bf16 %v3247, %v3246
        %s3264 = scalar_lea.vmem %s5, 192
        %v3265 = vld [vmem:[%s3264] sm:$0xf]
        %v3266 = vld [vmem:[%s3264 + $0x4] sm:$0xf]
        %v3267 = vld [vmem:[%s3264 + $0x8] sm:$0xf]
        %v3268 = vld [vmem:[%s3264 + $0xc] sm:$0xf]
        %v3269 = vld [vmem:[%s3264 + $0x10] sm:$0xf]
        %v3270 = vld [vmem:[%s3264 + $0x14] sm:$0xf]
        %v3271 = vld [vmem:[%s3264 + $0x18] sm:$0xf]
        %v3272 = vld [vmem:[%s3264 + $0x1c] sm:$0xf]
        %v3281 = vunpack.c.l.b16 %v3265
        %v3282 = vunpack.c.l.b16 %v3266
        %v3283 = vunpack.c.l.b16 %v3267
        %v3284 = vunpack.c.l.b16 %v3268
        %v3285 = vunpack.c.l.b16 %v3269
        %v3286 = vunpack.c.l.b16 %v3270
        %v3287 = vunpack.c.l.b16 %v3271
        %v3288 = vunpack.c.l.b16 %v3272
        %v3289 = vpack.c.b16 %v3282, %v3281
        %v3290 = vpack.c.b16 %v3284, %v3283
        %v3291 = vpack.c.b16 %v3286, %v3285
        %v3292 = vpack.c.b16 %v3288, %v3287
        %v3298 = vsel %vm386, %v3248, 0
        %v3301 = vsel %vm386, %v3249, 0
        %v3304 = vsel %vm386, %v3250, 0
        %v3307 = vsel %vm386, %v3251, 0
        %v3310 = vsel %vm386, %v3252, 0
        %v3313 = vsel %vm386, %v3253, 0
        %v3316 = vsel %vm386, %v3254, 0
        %v3319 = vsel %vm386, %v3255, 0
        %v3322 = vsel %vm386, %v3256, 0
        %v3325 = vsel %vm386, %v3257, 0
        %v3328 = vsel %vm386, %v3258, 0
        %v3331 = vsel %vm386, %v3259, 0
        %v3334 = vsel %vm386, %v3260, 0
        %v3337 = vsel %vm386, %v3261, 0
        %v3340 = vsel %vm386, %v3262, 0
        %v3343 = vsel %vm386, %v3263, 0
        %3345 = vmatprep.subr.bf16.mxu0 0
        %3346 = vmatpush1.bf16.msra.mxu0 %v3289
        %3347 = vmatprep.subr.bf16.mxu0 0
        %3348 = vmatpush1.bf16.msra.mxu0 %v3290
        %3349 = vmatprep.subr.bf16.mxu0 0
        %3350 = vmatpush1.bf16.msra.mxu0 %v3291
        %3351 = vmatprep.subr.bf16.mxu0 0
        %3352 = vmatpush1.bf16.msra.mxu0 %v3292
        %3353 = vmatprep.subr.bf16.mxu0 0
        %3354 = vmatpush1.bf16.msra.mxu0 0
        %3355 = vmatprep.subr.bf16.mxu0 0
        %3356 = vmatpush1.bf16.msra.mxu0 0
        %3357 = vmatprep.subr.bf16.mxu0 0
        %3358 = vmatpush1.bf16.msra.mxu0 0
        %3359 = vmatprep.subr.bf16.mxu0 0
        %3360 = vmatpush1.bf16.msra.mxu0 0
        %3361 = vmatprep.subr.bf16.mxu0 0
        %3362 = vmatpush1.bf16.msra.mxu0 0
        %3363 = vmatprep.subr.bf16.mxu0 0
        %3364 = vmatpush1.bf16.msra.mxu0 0
        %3365 = vmatprep.subr.bf16.mxu0 0
        %3366 = vmatpush1.bf16.msra.mxu0 0
        %3367 = vmatprep.subr.bf16.mxu0 0
        %3368 = vmatpush1.bf16.msra.mxu0 0
        %3369 = vmatprep.subr.bf16.mxu0 0
        %3370 = vmatpush1.bf16.msra.mxu0 0
        %3371 = vmatprep.subr.bf16.mxu0 0
        %3372 = vmatpush1.bf16.msra.mxu0 0
        %3373 = vmatprep.subr.bf16.mxu0 0
        %3374 = vmatpush1.bf16.msra.mxu0 0
        %3375 = vmatprep.subr.bf16.mxu0 0
        %3376 = vmatpush1.bf16.msra.mxu0 0
        %3377 = vmatprep.mubr.bf16.mxu0 0
        %3378 = vmatmul.mubr.bf16.gmra.mrb[0].mxu0 %v3298
        %v3379 = vpop.f32.mrb[0].mxu0
        %v3380 = vadd.f32 0.0, %v3379
        %v3381 = vpop.f32.mrb[0].mxu0
        %v3382 = vpop.f32.mrb[0].mxu0
        %v3383 = vadd.f32 0.0, %v3382
        %v3384 = vpop.f32.mrb[0].mxu0
        %3385 = vmatprep.mubr.bf16.mxu0 0
        %3386 = vmatmul.mubr.bf16.gmra.mrb[0].mxu0 %v3301
        %v3387 = vpop.f32.mrb[0].mxu0
        %v3388 = vadd.f32 0.0, %v3387
        %v3389 = vpop.f32.mrb[0].mxu0
        %v3390 = vpop.f32.mrb[0].mxu0
        %v3391 = vadd.f32 0.0, %v3390
        %v3392 = vpop.f32.mrb[0].mxu0
        %3393 = vmatprep.mubr.bf16.mxu0 0
        %3394 = vmatmul.mubr.bf16.gmra.mrb[0].mxu0 %v3304
        %v3395 = vpop.f32.mrb[0].mxu0
        %v3396 = vadd.f32 0.0, %v3395
        %v3397 = vpop.f32.mrb[0].mxu0
        %v3398 = vpop.f32.mrb[0].mxu0
        %v3399 = vadd.f32 0.0, %v3398
        %v3400 = vpop.f32.mrb[0].mxu0
        %3401 = vmatprep.mubr.bf16.mxu0 0
        %3402 = vmatmul.mubr.bf16.gmra.mrb[0].mxu0 %v3307
        %v3403 = vpop.f32.mrb[0].mxu0
        %v3404 = vadd.f32 0.0, %v3403
        %v3405 = vpop.f32.mrb[0].mxu0
        %v3406 = vpop.f32.mrb[0].mxu0
        %v3407 = vadd.f32 0.0, %v3406
        %v3408 = vpop.f32.mrb[0].mxu0
        %3409 = vmatprep.mubr.bf16.mxu0 0
        %3410 = vmatmul.mubr.bf16.gmra.mrb[0].mxu0 %v3310
        %v3411 = vpop.f32.mrb[0].mxu0
        %v3412 = vadd.f32 0.0, %v3411
        %v3413 = vpop.f32.mrb[0].mxu0
        %v3414 = vpop.f32.mrb[0].mxu0
        %v3415 = vadd.f32 0.0, %v3414
        %v3416 = vpop.f32.mrb[0].mxu0
        %3417 = vmatprep.mubr.bf16.mxu0 0
        %3418 = vmatmul.mubr.bf16.gmra.mrb[0].mxu0 %v3313
        %v3419 = vpop.f32.mrb[0].mxu0
        %v3420 = vadd.f32 0.0, %v3419
        %v3421 = vpop.f32.mrb[0].mxu0
        %v3422 = vpop.f32.mrb[0].mxu0
        %v3423 = vadd.f32 0.0, %v3422
        %v3424 = vpop.f32.mrb[0].mxu0
        %3425 = vmatprep.mubr.bf16.mxu0 0
        %3426 = vmatmul.mubr.bf16.gmra.mrb[0].mxu0 %v3316
        %v3427 = vpop.f32.mrb[0].mxu0
        %v3428 = vadd.f32 0.0, %v3427
        %v3429 = vpop.f32.mrb[0].mxu0
        %v3430 = vpop.f32.mrb[0].mxu0
        %v3431 = vadd.f32 0.0, %v3430
        %v3432 = vpop.f32.mrb[0].mxu0
        %3433 = vmatprep.mubr.bf16.mxu0 0
        %3434 = vmatmul.mubr.bf16.gmra.mrb[0].mxu0 %v3319
        %v3435 = vpop.f32.mrb[0].mxu0
        %v3436 = vadd.f32 0.0, %v3435
        %v3437 = vpop.f32.mrb[0].mxu0
        %v3438 = vpop.f32.mrb[0].mxu0
        %v3439 = vadd.f32 0.0, %v3438
        %v3440 = vpop.f32.mrb[0].mxu0
        %3441 = vmatprep.mubr.bf16.mxu0 0
        %3442 = vmatmul.mubr.bf16.gmra.mrb[0].mxu0 %v3322
        %v3443 = vpop.f32.mrb[0].mxu0
        %v3444 = vadd.f32 0.0, %v3443
        %v3445 = vpop.f32.mrb[0].mxu0
        %v3446 = vpop.f32.mrb[0].mxu0
        %v3447 = vadd.f32 0.0, %v3446
        %v3448 = vpop.f32.mrb[0].mxu0
        %3449 = vmatprep.mubr.bf16.mxu0 0
        %3450 = vmatmul.mubr.bf16.gmra.mrb[0].mxu0 %v3325
        %v3451 = vpop.f32.mrb[0].mxu0
        %v3452 = vadd.f32 0.0, %v3451
        %v3453 = vpop.f32.mrb[0].mxu0
        %v3454 = vpop.f32.mrb[0].mxu0
        %v3455 = vadd.f32 0.0, %v3454
        %v3456 = vpop.f32.mrb[0].mxu0
        %3457 = vmatprep.mubr.bf16.mxu0 0
        %3458 = vmatmul.mubr.bf16.gmra.mrb[0].mxu0 %v3328
        %v3459 = vpop.f32.mrb[0].mxu0
        %v3460 = vadd.f32 0.0, %v3459
        %v3461 = vpop.f32.mrb[0].mxu0
        %v3462 = vpop.f32.mrb[0].mxu0
        %v3463 = vadd.f32 0.0, %v3462
        %v3464 = vpop.f32.mrb[0].mxu0
        %3465 = vmatprep.mubr.bf16.mxu0 0
        %3466 = vmatmul.mubr.bf16.gmra.mrb[0].mxu0 %v3331
        %v3467 = vpop.f32.mrb[0].mxu0
        %v3468 = vadd.f32 0.0, %v3467
        %v3469 = vpop.f32.mrb[0].mxu0
        %v3470 = vpop.f32.mrb[0].mxu0
        %v3471 = vadd.f32 0.0, %v3470
        %v3472 = vpop.f32.mrb[0].mxu0
        %3473 = vmatprep.mubr.bf16.mxu0 0
        %3474 = vmatmul.mubr.bf16.gmra.mrb[0].mxu0 %v3334
        %v3475 = vpop.f32.mrb[0].mxu0
        %v3476 = vadd.f32 0.0, %v3475
        %v3477 = vpop.f32.mrb[0].mxu0
        %v3478 = vpop.f32.mrb[0].mxu0
        %v3479 = vadd.f32 0.0, %v3478
        %v3480 = vpop.f32.mrb[0].mxu0
        %3481 = vmatprep.mubr.bf16.mxu0 0
        %3482 = vmatmul.mubr.bf16.gmra.mrb[0].mxu0 %v3337
        %v3483 = vpop.f32.mrb[0].mxu0
        %v3484 = vadd.f32 0.0, %v3483
        %v3485 = vpop.f32.mrb[0].mxu0
        %v3486 = vpop.f32.mrb[0].mxu0
        %v3487 = vadd.f32 0.0, %v3486
        %v3488 = vpop.f32.mrb[0].mxu0
        %3489 = vmatprep.mubr.bf16.mxu0 0
        %3490 = vmatmul.mubr.bf16.gmra.mrb[0].mxu0 %v3340
        %v3491 = vpop.f32.mrb[0].mxu0
        %v3492 = vadd.f32 0.0, %v3491
        %v3493 = vpop.f32.mrb[0].mxu0
        %v3494 = vpop.f32.mrb[0].mxu0
        %v3495 = vadd.f32 0.0, %v3494
        %v3496 = vpop.f32.mrb[0].mxu0
        %3497 = vmatprep.mubr.bf16.mxu0 0
        %3498 = vmatmul.mubr.bf16.gmra.mrb[0].mxu0 %v3343
        %v3499 = vpop.f32.mrb[0].mxu0
        %v3500 = vadd.f32 0.0, %v3499
        %v3501 = vpop.f32.mrb[0].mxu0
        %v3502 = vpop.f32.mrb[0].mxu0
        %v3503 = vadd.f32 0.0, %v3502
        %v3504 = vpop.f32.mrb[0].mxu0
        %3505 = vdwg.mxu0
        %v3506 = vld [vmem:[%s271] sm:$0xff]
        %v3507 = vld [vmem:[%s271 + $0x8] sm:$0xff]
        %v3508 = vld [vmem:[%s271 + $0x10] sm:$0xff]
        %v3509 = vld [vmem:[%s271 + $0x18] sm:$0xff]
        %v3510 = vld [vmem:[%s271 + $0x20] sm:$0xff]
        %v3511 = vld [vmem:[%s271 + $0x28] sm:$0xff]
        %v3512 = vld [vmem:[%s271 + $0x30] sm:$0xff]
        %v3513 = vld [vmem:[%s271 + $0x38] sm:$0xff]
        %v3514 = vld [vmem:[%s271 + $0x40] sm:$0xff]
        %v3515 = vld [vmem:[%s271 + $0x48] sm:$0xff]
        %v3516 = vld [vmem:[%s271 + $0x50] sm:$0xff]
        %v3517 = vld [vmem:[%s271 + $0x58] sm:$0xff]
        %v3518 = vld [vmem:[%s271 + $0x60] sm:$0xff]
        %v3519 = vld [vmem:[%s271 + $0x68] sm:$0xff]
        %v3520 = vld [vmem:[%s271 + $0x70] sm:$0xff]
        %v3521 = vld [vmem:[%s271 + $0x78] sm:$0xff]
        %v3522 = vld [vmem:[%s271 + $0x80] sm:$0xff]
        %v3523 = vld [vmem:[%s271 + $0x88] sm:$0xff]
        %v3524 = vld [vmem:[%s271 + $0x90] sm:$0xff]
        %v3525 = vld [vmem:[%s271 + $0x98] sm:$0xff]
        %v3526 = vld [vmem:[%s271 + $0xa0] sm:$0xff]
        %v3527 = vld [vmem:[%s271 + $0xa8] sm:$0xff]
        %v3528 = vld [vmem:[%s271 + $0xb0] sm:$0xff]
        %v3529 = vld [vmem:[%s271 + $0xb8] sm:$0xff]
        %v3530 = vld [vmem:[%s271 + $0xc0] sm:$0xff]
        %v3531 = vld [vmem:[%s271 + $0xc8] sm:$0xff]
        %v3532 = vld [vmem:[%s271 + $0xd0] sm:$0xff]
        %v3533 = vld [vmem:[%s271 + $0xd8] sm:$0xff]
        %v3534 = vld [vmem:[%s271 + $0xe0] sm:$0xff]
        %v3535 = vld [vmem:[%s271 + $0xe8] sm:$0xff]
        %v3536 = vld [vmem:[%s271 + $0xf0] sm:$0xff]
        %v3537 = vld [vmem:[%s271 + $0xf8] sm:$0xff]
        %v3538 = vadd.f32 %v3506, %v3380
        %v3539 = vadd.f32 %v3507, %v3383
        %v3540 = vadd.f32 %v3508, %v3388
        %v3541 = vadd.f32 %v3509, %v3391
        %v3542 = vadd.f32 %v3510, %v3396
        %v3543 = vadd.f32 %v3511, %v3399
        %v3544 = vadd.f32 %v3512, %v3404
        %v3545 = vadd.f32 %v3513, %v3407
        %v3546 = vadd.f32 %v3514, %v3412
        %v3547 = vadd.f32 %v3515, %v3415
        %v3548 = vadd.f32 %v3516, %v3420
        %v3549 = vadd.f32 %v3517, %v3423
        %v3550 = vadd.f32 %v3518, %v3428
        %v3551 = vadd.f32 %v3519, %v3431
        %v3552 = vadd.f32 %v3520, %v3436
        %v3553 = vadd.f32 %v3521, %v3439
        %v3554 = vadd.f32 %v3522, %v3444
        %v3555 = vadd.f32 %v3523, %v3447
        %v3556 = vadd.f32 %v3524, %v3452
        %v3557 = vadd.f32 %v3525, %v3455
        %v3558 = vadd.f32 %v3526, %v3460
        %v3559 = vadd.f32 %v3527, %v3463
        %v3560 = vadd.f32 %v3528, %v3468
        %v3561 = vadd.f32 %v3529, %v3471
        %v3562 = vadd.f32 %v3530, %v3476
        %v3563 = vadd.f32 %v3531, %v3479
        %v3564 = vadd.f32 %v3532, %v3484
        %v3565 = vadd.f32 %v3533, %v3487
        %v3566 = vadd.f32 %v3534, %v3492
        %v3567 = vadd.f32 %v3535, %v3495
        %v3568 = vadd.f32 %v3536, %v3500
        %v3569 = vadd.f32 %v3537, %v3503
        %3570 = vst [vmem:[%s271] sm:$0xff] %v3538
        %3571 = vst [vmem:[%s271 + $0x8] sm:$0xff] %v3539
        %3572 = vst [vmem:[%s271 + $0x10] sm:$0xff] %v3540
        %3573 = vst [vmem:[%s271 + $0x18] sm:$0xff] %v3541
        %3574 = vst [vmem:[%s271 + $0x20] sm:$0xff] %v3542
        %3575 = vst [vmem:[%s271 + $0x28] sm:$0xff] %v3543
        %3576 = vst [vmem:[%s271 + $0x30] sm:$0xff] %v3544
        %3577 = vst [vmem:[%s271 + $0x38] sm:$0xff] %v3545
        %3578 = vst [vmem:[%s271 + $0x40] sm:$0xff] %v3546
        %3579 = vst [vmem:[%s271 + $0x48] sm:$0xff] %v3547
        %3580 = vst [vmem:[%s271 + $0x50] sm:$0xff] %v3548
        %3581 = vst [vmem:[%s271 + $0x58] sm:$0xff] %v3549
        %3582 = vst [vmem:[%s271 + $0x60] sm:$0xff] %v3550
        %3583 = vst [vmem:[%s271 + $0x68] sm:$0xff] %v3551
        %3584 = vst [vmem:[%s271 + $0x70] sm:$0xff] %v3552
        %3585 = vst [vmem:[%s271 + $0x78] sm:$0xff] %v3553
        %3586 = vst [vmem:[%s271 + $0x80] sm:$0xff] %v3554
        %3587 = vst [vmem:[%s271 + $0x88] sm:$0xff] %v3555
        %3588 = vst [vmem:[%s271 + $0x90] sm:$0xff] %v3556
        %3589 = vst [vmem:[%s271 + $0x98] sm:$0xff] %v3557
        %3590 = vst [vmem:[%s271 + $0xa0] sm:$0xff] %v3558
        %3591 = vst [vmem:[%s271 + $0xa8] sm:$0xff] %v3559
        %3592 = vst [vmem:[%s271 + $0xb0] sm:$0xff] %v3560
        %3593 = vst [vmem:[%s271 + $0xb8] sm:$0xff] %v3561
        %3594 = vst [vmem:[%s271 + $0xc0] sm:$0xff] %v3562
        %3595 = vst [vmem:[%s271 + $0xc8] sm:$0xff] %v3563
        %3596 = vst [vmem:[%s271 + $0xd0] sm:$0xff] %v3564
        %3597 = vst [vmem:[%s271 + $0xd8] sm:$0xff] %v3565
        %3598 = vst [vmem:[%s271 + $0xe0] sm:$0xff] %v3566
        %3599 = vst [vmem:[%s271 + $0xe8] sm:$0xff] %v3567
        %3600 = vst [vmem:[%s271 + $0xf0] sm:$0xff] %v3568
        %3601 = vst [vmem:[%s271 + $0xf8] sm:$0xff] %v3569
        %v3602 = vld [vmem:[%s3215 + $0x1] sm:$0xff]
        %v3603 = vld [vmem:[%s3215 + $0x9] sm:$0xff]
        %v3604 = vld [vmem:[%s3215 + $0x19] sm:$0xff]
        %v3605 = vld [vmem:[%s3215 + $0x21] sm:$0xff]
        %v3606 = vld [vmem:[%s3215 + $0x31] sm:$0xff]
        %v3607 = vld [vmem:[%s3215 + $0x39] sm:$0xff]
        %v3608 = vld [vmem:[%s3215 + $0x49] sm:$0xff]
        %v3609 = vld [vmem:[%s3215 + $0x51] sm:$0xff]
        %v3610 = vld [vmem:[%s3215 + $0x61] sm:$0xff]
        %v3611 = vld [vmem:[%s3215 + $0x69] sm:$0xff]
        %v3612 = vld [vmem:[%s3215 + $0x79] sm:$0xff]
        %v3613 = vld [vmem:[%s3215 + $0x81] sm:$0xff]
        %v3614 = vld [vmem:[%s3215 + $0x91] sm:$0xff]
        %v3615 = vld [vmem:[%s3215 + $0x99] sm:$0xff]
        %v3616 = vld [vmem:[%s3215 + $0xa9] sm:$0xff]
        %v3617 = vld [vmem:[%s3215 + $0xb1] sm:$0xff]
        %v3618 = vld [vmem:[%s3215 + $0xc1] sm:$0xff]
        %v3619 = vld [vmem:[%s3215 + $0xc9] sm:$0xff]
        %v3620 = vld [vmem:[%s3215 + $0xd9] sm:$0xff]
        %v3621 = vld [vmem:[%s3215 + $0xe1] sm:$0xff]
        %v3622 = vld [vmem:[%s3215 + $0xf1] sm:$0xff]
        %v3623 = vld [vmem:[%s3215 + $0xf9] sm:$0xff]
        %v3624 = vld [vmem:[%s3215 + $0x109] sm:$0xff]
        %v3625 = vld [vmem:[%s3215 + $0x111] sm:$0xff]
        %v3626 = vld [vmem:[%s3215 + $0x121] sm:$0xff]
        %v3627 = vld [vmem:[%s3215 + $0x129] sm:$0xff]
        %v3628 = vld [vmem:[%s3215 + $0x139] sm:$0xff]
        %v3629 = vld [vmem:[%s3215 + $0x141] sm:$0xff]
        %v3630 = vld [vmem:[%s3215 + $0x151] sm:$0xff]
        %v3631 = vld [vmem:[%s3215 + $0x159] sm:$0xff]
        %v3632 = vld [vmem:[%s3215 + $0x169] sm:$0xff]
        %v3633 = vld [vmem:[%s3215 + $0x171] sm:$0xff]
        %v3634 = vpack.c.bf16 %v3603, %v3602
        %v3635 = vpack.c.bf16 %v3605, %v3604
        %v3636 = vpack.c.bf16 %v3607, %v3606
        %v3637 = vpack.c.bf16 %v3609, %v3608
        %v3638 = vpack.c.bf16 %v3611, %v3610
        %v3639 = vpack.c.bf16 %v3613, %v3612
        %v3640 = vpack.c.bf16 %v3615, %v3614
        %v3641 = vpack.c.bf16 %v3617, %v3616
        %v3642 = vpack.c.bf16 %v3619, %v3618
        %v3643 = vpack.c.bf16 %v3621, %v3620
        %v3644 = vpack.c.bf16 %v3623, %v3622
        %v3645 = vpack.c.bf16 %v3625, %v3624
        %v3646 = vpack.c.bf16 %v3627, %v3626
        %v3647 = vpack.c.bf16 %v3629, %v3628
        %v3648 = vpack.c.bf16 %v3631, %v3630
        %v3649 = vpack.c.bf16 %v3633, %v3632
        %s3650 = scalar_lea.vmem %s5, 224
        %v3651 = vld [vmem:[%s3650] sm:$0xf]
        %v3652 = vld [vmem:[%s3650 + $0x4] sm:$0xf]
        %v3653 = vld [vmem:[%s3650 + $0x8] sm:$0xf]
        %v3654 = vld [vmem:[%s3650 + $0xc] sm:$0xf]
        %v3655 = vld [vmem:[%s3650 + $0x10] sm:$0xf]
        %v3656 = vld [vmem:[%s3650 + $0x14] sm:$0xf]
        %v3657 = vld [vmem:[%s3650 + $0x18] sm:$0xf]
        %v3658 = vld [vmem:[%s3650 + $0x1c] sm:$0xf]
        %v3667 = vunpack.c.l.b16 %v3651
        %v3668 = vunpack.c.l.b16 %v3652
        %v3669 = vunpack.c.l.b16 %v3653
        %v3670 = vunpack.c.l.b16 %v3654
        %v3671 = vunpack.c.l.b16 %v3655
        %v3672 = vunpack.c.l.b16 %v3656
        %v3673 = vunpack.c.l.b16 %v3657
        %v3674 = vunpack.c.l.b16 %v3658
        %v3675 = vpack.c.b16 %v3668, %v3667
        %v3676 = vpack.c.b16 %v3670, %v3669
        %v3677 = vpack.c.b16 %v3672, %v3671
        %v3678 = vpack.c.b16 %v3674, %v3673
        %v3684 = vsel %vm386, %v3634, 0
        %v3687 = vsel %vm386, %v3635, 0
        %v3690 = vsel %vm386, %v3636, 0
        %v3693 = vsel %vm386, %v3637, 0
        %v3696 = vsel %vm386, %v3638, 0
        %v3699 = vsel %vm386, %v3639, 0
        %v3702 = vsel %vm386, %v3640, 0
        %v3705 = vsel %vm386, %v3641, 0
        %v3708 = vsel %vm386, %v3642, 0
        %v3711 = vsel %vm386, %v3643, 0
        %v3714 = vsel %vm386, %v3644, 0
        %v3717 = vsel %vm386, %v3645, 0
        %v3720 = vsel %vm386, %v3646, 0
        %v3723 = vsel %vm386, %v3647, 0
        %v3726 = vsel %vm386, %v3648, 0
        %v3729 = vsel %vm386, %v3649, 0
        %3731 = vmatprep.subr.bf16.mxu0 0
        %3732 = vmatpush1.bf16.msra.mxu0 %v3675
        %3733 = vmatprep.subr.bf16.mxu0 0
        %3734 = vmatpush1.bf16.msra.mxu0 %v3676
        %3735 = vmatprep.subr.bf16.mxu0 0
        %3736 = vmatpush1.bf16.msra.mxu0 %v3677
        %3737 = vmatprep.subr.bf16.mxu0 0
        %3738 = vmatpush1.bf16.msra.mxu0 %v3678
        %3739 = vmatprep.subr.bf16.mxu0 0
        %3740 = vmatpush1.bf16.msra.mxu0 0
        %3741 = vmatprep.subr.bf16.mxu0 0
        %3742 = vmatpush1.bf16.msra.mxu0 0
        %3743 = vmatprep.subr.bf16.mxu0 0
        %3744 = vmatpush1.bf16.msra.mxu0 0
        %3745 = vmatprep.subr.bf16.mxu0 0
        %3746 = vmatpush1.bf16.msra.mxu0 0
        %3747 = vmatprep.subr.bf16.mxu0 0
        %3748 = vmatpush1.bf16.msra.mxu0 0
        %3749 = vmatprep.subr.bf16.mxu0 0
        %3750 = vmatpush1.bf16.msra.mxu0 0
        %3751 = vmatprep.subr.bf16.mxu0 0
        %3752 = vmatpush1.bf16.msra.mxu0 0
        %3753 = vmatprep.subr.bf16.mxu0 0
        %3754 = vmatpush1.bf16.msra.mxu0 0
        %3755 = vmatprep.subr.bf16.mxu0 0
        %3756 = vmatpush1.bf16.msra.mxu0 0
        %3757 = vmatprep.subr.bf16.mxu0 0
        %3758 = vmatpush1.bf16.msra.mxu0 0
        %3759 = vmatprep.subr.bf16.mxu0 0
        %3760 = vmatpush1.bf16.msra.mxu0 0
        %3761 = vmatprep.subr.bf16.mxu0 0
        %3762 = vmatpush1.bf16.msra.mxu0 0
        %3763 = vmatprep.mubr.bf16.mxu0 0
        %3764 = vmatmul.mubr.bf16.gmra.mrb[0].mxu0 %v3684
        %v3765 = vpop.f32.mrb[0].mxu0
        %v3766 = vadd.f32 0.0, %v3765
        %v3767 = vpop.f32.mrb[0].mxu0
        %v3768 = vpop.f32.mrb[0].mxu0
        %v3769 = vadd.f32 0.0, %v3768
        %v3770 = vpop.f32.mrb[0].mxu0
        %3771 = vmatprep.mubr.bf16.mxu0 0
        %3772 = vmatmul.mubr.bf16.gmra.mrb[0].mxu0 %v3687
        %v3773 = vpop.f32.mrb[0].mxu0
        %v3774 = vadd.f32 0.0, %v3773
        %v3775 = vpop.f32.mrb[0].mxu0
        %v3776 = vpop.f32.mrb[0].mxu0
        %v3777 = vadd.f32 0.0, %v3776
        %v3778 = vpop.f32.mrb[0].mxu0
        %3779 = vmatprep.mubr.bf16.mxu0 0
        %3780 = vmatmul.mubr.bf16.gmra.mrb[0].mxu0 %v3690
        %v3781 = vpop.f32.mrb[0].mxu0
        %v3782 = vadd.f32 0.0, %v3781
        %v3783 = vpop.f32.mrb[0].mxu0
        %v3784 = vpop.f32.mrb[0].mxu0
        %v3785 = vadd.f32 0.0, %v3784
        %v3786 = vpop.f32.mrb[0].mxu0
        %3787 = vmatprep.mubr.bf16.mxu0 0
        %3788 = vmatmul.mubr.bf16.gmra.mrb[0].mxu0 %v3693
        %v3789 = vpop.f32.mrb[0].mxu0
        %v3790 = vadd.f32 0.0, %v3789
        %v3791 = vpop.f32.mrb[0].mxu0
        %v3792 = vpop.f32.mrb[0].mxu0
        %v3793 = vadd.f32 0.0, %v3792
        %v3794 = vpop.f32.mrb[0].mxu0
        %3795 = vmatprep.mubr.bf16.mxu0 0
        %3796 = vmatmul.mubr.bf16.gmra.mrb[0].mxu0 %v3696
        %v3797 = vpop.f32.mrb[0].mxu0
        %v3798 = vadd.f32 0.0, %v3797
        %v3799 = vpop.f32.mrb[0].mxu0
        %v3800 = vpop.f32.mrb[0].mxu0
        %v3801 = vadd.f32 0.0, %v3800
        %v3802 = vpop.f32.mrb[0].mxu0
        %3803 = vmatprep.mubr.bf16.mxu0 0
        %3804 = vmatmul.mubr.bf16.gmra.mrb[0].mxu0 %v3699
        %v3805 = vpop.f32.mrb[0].mxu0
        %v3806 = vadd.f32 0.0, %v3805
        %v3807 = vpop.f32.mrb[0].mxu0
        %v3808 = vpop.f32.mrb[0].mxu0
        %v3809 = vadd.f32 0.0, %v3808
        %v3810 = vpop.f32.mrb[0].mxu0
        %3811 = vmatprep.mubr.bf16.mxu0 0
        %3812 = vmatmul.mubr.bf16.gmra.mrb[0].mxu0 %v3702
        %v3813 = vpop.f32.mrb[0].mxu0
        %v3814 = vadd.f32 0.0, %v3813
        %v3815 = vpop.f32.mrb[0].mxu0
        %v3816 = vpop.f32.mrb[0].mxu0
        %v3817 = vadd.f32 0.0, %v3816
        %v3818 = vpop.f32.mrb[0].mxu0
        %3819 = vmatprep.mubr.bf16.mxu0 0
        %3820 = vmatmul.mubr.bf16.gmra.mrb[0].mxu0 %v3705
        %v3821 = vpop.f32.mrb[0].mxu0
        %v3822 = vadd.f32 0.0, %v3821
        %v3823 = vpop.f32.mrb[0].mxu0
        %v3824 = vpop.f32.mrb[0].mxu0
        %v3825 = vadd.f32 0.0, %v3824
        %v3826 = vpop.f32.mrb[0].mxu0
        %3827 = vmatprep.mubr.bf16.mxu0 0
        %3828 = vmatmul.mubr.bf16.gmra.mrb[0].mxu0 %v3708
        %v3829 = vpop.f32.mrb[0].mxu0
        %v3830 = vadd.f32 0.0, %v3829
        %v3831 = vpop.f32.mrb[0].mxu0
        %v3832 = vpop.f32.mrb[0].mxu0
        %v3833 = vadd.f32 0.0, %v3832
        %v3834 = vpop.f32.mrb[0].mxu0
        %3835 = vmatprep.mubr.bf16.mxu0 0
        %3836 = vmatmul.mubr.bf16.gmra.mrb[0].mxu0 %v3711
        %v3837 = vpop.f32.mrb[0].mxu0
        %v3838 = vadd.f32 0.0, %v3837
        %v3839 = vpop.f32.mrb[0].mxu0
        %v3840 = vpop.f32.mrb[0].mxu0
        %v3841 = vadd.f32 0.0, %v3840
        %v3842 = vpop.f32.mrb[0].mxu0
        %3843 = vmatprep.mubr.bf16.mxu0 0
        %3844 = vmatmul.mubr.bf16.gmra.mrb[0].mxu0 %v3714
        %v3845 = vpop.f32.mrb[0].mxu0
        %v3846 = vadd.f32 0.0, %v3845
        %v3847 = vpop.f32.mrb[0].mxu0
        %v3848 = vpop.f32.mrb[0].mxu0
        %v3849 = vadd.f32 0.0, %v3848
        %v3850 = vpop.f32.mrb[0].mxu0
        %3851 = vmatprep.mubr.bf16.mxu0 0
        %3852 = vmatmul.mubr.bf16.gmra.mrb[0].mxu0 %v3717
        %v3853 = vpop.f32.mrb[0].mxu0
        %v3854 = vadd.f32 0.0, %v3853
        %v3855 = vpop.f32.mrb[0].mxu0
        %v3856 = vpop.f32.mrb[0].mxu0
        %v3857 = vadd.f32 0.0, %v3856
        %v3858 = vpop.f32.mrb[0].mxu0
        %3859 = vmatprep.mubr.bf16.mxu0 0
        %3860 = vmatmul.mubr.bf16.gmra.mrb[0].mxu0 %v3720
        %v3861 = vpop.f32.mrb[0].mxu0
        %v3862 = vadd.f32 0.0, %v3861
        %v3863 = vpop.f32.mrb[0].mxu0
        %v3864 = vpop.f32.mrb[0].mxu0
        %v3865 = vadd.f32 0.0, %v3864
        %v3866 = vpop.f32.mrb[0].mxu0
        %3867 = vmatprep.mubr.bf16.mxu0 0
        %3868 = vmatmul.mubr.bf16.gmra.mrb[0].mxu0 %v3723
        %v3869 = vpop.f32.mrb[0].mxu0
        %v3870 = vadd.f32 0.0, %v3869
        %v3871 = vpop.f32.mrb[0].mxu0
        %v3872 = vpop.f32.mrb[0].mxu0
        %v3873 = vadd.f32 0.0, %v3872
        %v3874 = vpop.f32.mrb[0].mxu0
        %3875 = vmatprep.mubr.bf16.mxu0 0
        %3876 = vmatmul.mubr.bf16.gmra.mrb[0].mxu0 %v3726
        %v3877 = vpop.f32.mrb[0].mxu0
        %v3878 = vadd.f32 0.0, %v3877
        %v3879 = vpop.f32.mrb[0].mxu0
        %v3880 = vpop.f32.mrb[0].mxu0
        %v3881 = vadd.f32 0.0, %v3880
        %v3882 = vpop.f32.mrb[0].mxu0
        %3883 = vmatprep.mubr.bf16.mxu0 0
        %3884 = vmatmul.mubr.bf16.gmra.mrb[0].mxu0 %v3729
        %v3885 = vpop.f32.mrb[0].mxu0
        %v3886 = vadd.f32 0.0, %v3885
        %v3887 = vpop.f32.mrb[0].mxu0
        %v3888 = vpop.f32.mrb[0].mxu0
        %v3889 = vadd.f32 0.0, %v3888
        %v3890 = vpop.f32.mrb[0].mxu0
        %3891 = vdwg.mxu0
        %v3892 = vld [vmem:[%s271] sm:$0xff]
        %v3893 = vld [vmem:[%s271 + $0x8] sm:$0xff]
        %v3894 = vld [vmem:[%s271 + $0x10] sm:$0xff]
        %v3895 = vld [vmem:[%s271 + $0x18] sm:$0xff]
        %v3896 = vld [vmem:[%s271 + $0x20] sm:$0xff]
        %v3897 = vld [vmem:[%s271 + $0x28] sm:$0xff]
        %v3898 = vld [vmem:[%s271 + $0x30] sm:$0xff]
        %v3899 = vld [vmem:[%s271 + $0x38] sm:$0xff]
        %v3900 = vld [vmem:[%s271 + $0x40] sm:$0xff]
        %v3901 = vld [vmem:[%s271 + $0x48] sm:$0xff]
        %v3902 = vld [vmem:[%s271 + $0x50] sm:$0xff]
        %v3903 = vld [vmem:[%s271 + $0x58] sm:$0xff]
        %v3904 = vld [vmem:[%s271 + $0x60] sm:$0xff]
        %v3905 = vld [vmem:[%s271 + $0x68] sm:$0xff]
        %v3906 = vld [vmem:[%s271 + $0x70] sm:$0xff]
        %v3907 = vld [vmem:[%s271 + $0x78] sm:$0xff]
        %v3908 = vld [vmem:[%s271 + $0x80] sm:$0xff]
        %v3909 = vld [vmem:[%s271 + $0x88] sm:$0xff]
        %v3910 = vld [vmem:[%s271 + $0x90] sm:$0xff]
        %v3911 = vld [vmem:[%s271 + $0x98] sm:$0xff]
        %v3912 = vld [vmem:[%s271 + $0xa0] sm:$0xff]
        %v3913 = vld [vmem:[%s271 + $0xa8] sm:$0xff]
        %v3914 = vld [vmem:[%s271 + $0xb0] sm:$0xff]
        %v3915 = vld [vmem:[%s271 + $0xb8] sm:$0xff]
        %v3916 = vld [vmem:[%s271 + $0xc0] sm:$0xff]
        %v3917 = vld [vmem:[%s271 + $0xc8] sm:$0xff]
        %v3918 = vld [vmem:[%s271 + $0xd0] sm:$0xff]
        %v3919 = vld [vmem:[%s271 + $0xd8] sm:$0xff]
        %v3920 = vld [vmem:[%s271 + $0xe0] sm:$0xff]
        %v3921 = vld [vmem:[%s271 + $0xe8] sm:$0xff]
        %v3922 = vld [vmem:[%s271 + $0xf0] sm:$0xff]
        %v3923 = vld [vmem:[%s271 + $0xf8] sm:$0xff]
        %v3924 = vadd.f32 %v3892, %v3766
        %v3925 = vadd.f32 %v3893, %v3769
        %v3926 = vadd.f32 %v3894, %v3774
        %v3927 = vadd.f32 %v3895, %v3777
        %v3928 = vadd.f32 %v3896, %v3782
        %v3929 = vadd.f32 %v3897, %v3785
        %v3930 = vadd.f32 %v3898, %v3790
        %v3931 = vadd.f32 %v3899, %v3793
        %v3932 = vadd.f32 %v3900, %v3798
        %v3933 = vadd.f32 %v3901, %v3801
        %v3934 = vadd.f32 %v3902, %v3806
        %v3935 = vadd.f32 %v3903, %v3809
        %v3936 = vadd.f32 %v3904, %v3814
        %v3937 = vadd.f32 %v3905, %v3817
        %v3938 = vadd.f32 %v3906, %v3822
        %v3939 = vadd.f32 %v3907, %v3825
        %v3940 = vadd.f32 %v3908, %v3830
        %v3941 = vadd.f32 %v3909, %v3833
        %v3942 = vadd.f32 %v3910, %v3838
        %v3943 = vadd.f32 %v3911, %v3841
        %v3944 = vadd.f32 %v3912, %v3846
        %v3945 = vadd.f32 %v3913, %v3849
        %v3946 = vadd.f32 %v3914, %v3854
        %v3947 = vadd.f32 %v3915, %v3857
        %v3948 = vadd.f32 %v3916, %v3862
        %v3949 = vadd.f32 %v3917, %v3865
        %v3950 = vadd.f32 %v3918, %v3870
        %v3951 = vadd.f32 %v3919, %v3873
        %v3952 = vadd.f32 %v3920, %v3878
        %v3953 = vadd.f32 %v3921, %v3881
        %v3954 = vadd.f32 %v3922, %v3886
        %v3955 = vadd.f32 %v3923, %v3889
        %3956 = vst [vmem:[%s271] sm:$0xff] %v3924
        %3957 = vst [vmem:[%s271 + $0x8] sm:$0xff] %v3925
        %3958 = vst [vmem:[%s271 + $0x10] sm:$0xff] %v3926
        %3959 = vst [vmem:[%s271 + $0x18] sm:$0xff] %v3927
        %3960 = vst [vmem:[%s271 + $0x20] sm:$0xff] %v3928
        %3961 = vst [vmem:[%s271 + $0x28] sm:$0xff] %v3929
        %3962 = vst [vmem:[%s271 + $0x30] sm:$0xff] %v3930
        %3963 = vst [vmem:[%s271 + $0x38] sm:$0xff] %v3931
        %3964 = vst [vmem:[%s271 + $0x40] sm:$0xff] %v3932
        %3965 = vst [vmem:[%s271 + $0x48] sm:$0xff] %v3933
        %3966 = vst [vmem:[%s271 + $0x50] sm:$0xff] %v3934
        %3967 = vst [vmem:[%s271 + $0x58] sm:$0xff] %v3935
        %3968 = vst [vmem:[%s271 + $0x60] sm:$0xff] %v3936
        %3969 = vst [vmem:[%s271 + $0x68] sm:$0xff] %v3937
        %3970 = vst [vmem:[%s271 + $0x70] sm:$0xff] %v3938
        %3971 = vst [vmem:[%s271 + $0x78] sm:$0xff] %v3939
        %3972 = vst [vmem:[%s271 + $0x80] sm:$0xff] %v3940
        %3973 = vst [vmem:[%s271 + $0x88] sm:$0xff] %v3941
        %3974 = vst [vmem:[%s271 + $0x90] sm:$0xff] %v3942
        %3975 = vst [vmem:[%s271 + $0x98] sm:$0xff] %v3943
        %3976 = vst [vmem:[%s271 + $0xa0] sm:$0xff] %v3944
        %3977 = vst [vmem:[%s271 + $0xa8] sm:$0xff] %v3945
        %3978 = vst [vmem:[%s271 + $0xb0] sm:$0xff] %v3946
        %3979 = vst [vmem:[%s271 + $0xb8] sm:$0xff] %v3947
        %3980 = vst [vmem:[%s271 + $0xc0] sm:$0xff] %v3948
        %3981 = vst [vmem:[%s271 + $0xc8] sm:$0xff] %v3949
        %3982 = vst [vmem:[%s271 + $0xd0] sm:$0xff] %v3950
        %3983 = vst [vmem:[%s271 + $0xd8] sm:$0xff] %v3951
        %3984 = vst [vmem:[%s271 + $0xe0] sm:$0xff] %v3952
        %3985 = vst [vmem:[%s271 + $0xe8] sm:$0xff] %v3953
        %3986 = vst [vmem:[%s271 + $0xf0] sm:$0xff] %v3954
        %3987 = vst [vmem:[%s271 + $0xf8] sm:$0xff] %v3955
        %v3988 = vld [vmem:[%s3215 + $0x2] sm:$0xff]
        %v3989 = vld [vmem:[%s3215 + $0xa] sm:$0xff]
        %v3990 = vld [vmem:[%s3215 + $0x1a] sm:$0xff]
        %v3991 = vld [vmem:[%s3215 + $0x22] sm:$0xff]
        %v3992 = vld [vmem:[%s3215 + $0x32] sm:$0xff]
        %v3993 = vld [vmem:[%s3215 + $0x3a] sm:$0xff]
        %v3994 = vld [vmem:[%s3215 + $0x4a] sm:$0xff]
        %v3995 = vld [vmem:[%s3215 + $0x52] sm:$0xff]
        %v3996 = vld [vmem:[%s3215 + $0x62] sm:$0xff]
        %v3997 = vld [vmem:[%s3215 + $0x6a] sm:$0xff]
        %v3998 = vld [vmem:[%s3215 + $0x7a] sm:$0xff]
        %v3999 = vld [vmem:[%s3215 + $0x82] sm:$0xff]
        %v4000 = vld [vmem:[%s3215 + $0x92] sm:$0xff]
        %v4001 = vld [vmem:[%s3215 + $0x9a] sm:$0xff]
        %v4002 = vld [vmem:[%s3215 + $0xaa] sm:$0xff]
        %v4003 = vld [vmem:[%s3215 + $0xb2] sm:$0xff]
        %v4004 = vld [vmem:[%s3215 + $0xc2] sm:$0xff]
        %v4005 = vld [vmem:[%s3215 + $0xca] sm:$0xff]
        %v4006 = vld [vmem:[%s3215 + $0xda] sm:$0xff]
        %v4007 = vld [vmem:[%s3215 + $0xe2] sm:$0xff]
        %v4008 = vld [vmem:[%s3215 + $0xf2] sm:$0xff]
        %v4009 = vld [vmem:[%s3215 + $0xfa] sm:$0xff]
        %v4010 = vld [vmem:[%s3215 + $0x10a] sm:$0xff]
        %v4011 = vld [vmem:[%s3215 + $0x112] sm:$0xff]
        %v4012 = vld [vmem:[%s3215 + $0x122] sm:$0xff]
        %v4013 = vld [vmem:[%s3215 + $0x12a] sm:$0xff]
        %v4014 = vld [vmem:[%s3215 + $0x13a] sm:$0xff]
        %v4015 = vld [vmem:[%s3215 + $0x142] sm:$0xff]
        %v4016 = vld [vmem:[%s3215 + $0x152] sm:$0xff]
        %v4017 = vld [vmem:[%s3215 + $0x15a] sm:$0xff]
        %v4018 = vld [vmem:[%s3215 + $0x16a] sm:$0xff]
        %v4019 = vld [vmem:[%s3215 + $0x172] sm:$0xff]
        %v4020 = vpack.c.bf16 %v3989, %v3988
        %v4021 = vpack.c.bf16 %v3991, %v3990
        %v4022 = vpack.c.bf16 %v3993, %v3992
        %v4023 = vpack.c.bf16 %v3995, %v3994
        %v4024 = vpack.c.bf16 %v3997, %v3996
        %v4025 = vpack.c.bf16 %v3999, %v3998
        %v4026 = vpack.c.bf16 %v4001, %v4000
        %v4027 = vpack.c.bf16 %v4003, %v4002
        %v4028 = vpack.c.bf16 %v4005, %v4004
        %v4029 = vpack.c.bf16 %v4007, %v4006
        %v4030 = vpack.c.bf16 %v4009, %v4008
        %v4031 = vpack.c.bf16 %v4011, %v4010
        %v4032 = vpack.c.bf16 %v4013, %v4012
        %v4033 = vpack.c.bf16 %v4015, %v4014
        %v4034 = vpack.c.bf16 %v4017, %v4016
        %v4035 = vpack.c.bf16 %v4019, %v4018
        %s4036 = scalar_lea.vmem %s5, 256
        %v4037 = vld [vmem:[%s4036] sm:$0xf]
        %v4038 = vld [vmem:[%s4036 + $0x4] sm:$0xf]
        %v4039 = vld [vmem:[%s4036 + $0x8] sm:$0xf]
        %v4040 = vld [vmem:[%s4036 + $0xc] sm:$0xf]
        %v4041 = vld [vmem:[%s4036 + $0x10] sm:$0xf]
        %v4042 = vld [vmem:[%s4036 + $0x14] sm:$0xf]
        %v4043 = vld [vmem:[%s4036 + $0x18] sm:$0xf]
        %v4044 = vld [vmem:[%s4036 + $0x1c] sm:$0xf]
        %v4053 = vunpack.c.l.b16 %v4037
        %v4054 = vunpack.c.l.b16 %v4038
        %v4055 = vunpack.c.l.b16 %v4039
        %v4056 = vunpack.c.l.b16 %v4040
        %v4057 = vunpack.c.l.b16 %v4041
        %v4058 = vunpack.c.l.b16 %v4042
        %v4059 = vunpack.c.l.b16 %v4043
        %v4060 = vunpack.c.l.b16 %v4044
        %v4061 = vpack.c.b16 %v4054, %v4053
        %v4062 = vpack.c.b16 %v4056, %v4055
        %v4063 = vpack.c.b16 %v4058, %v4057
        %v4064 = vpack.c.b16 %v4060, %v4059
        %v4070 = vsel %vm386, %v4020, 0
        %v4073 = vsel %vm386, %v4021, 0
        %v4076 = vsel %vm386, %v4022, 0
        %v4079 = vsel %vm386, %v4023, 0
        %v4082 = vsel %vm386, %v4024, 0
        %v4085 = vsel %vm386, %v4025, 0
        %v4088 = vsel %vm386, %v4026, 0
        %v4091 = vsel %vm386, %v4027, 0
        %v4094 = vsel %vm386, %v4028, 0
        %v4097 = vsel %vm386, %v4029, 0
        %v4100 = vsel %vm386, %v4030, 0
        %v4103 = vsel %vm386, %v4031, 0
        %v4106 = vsel %vm386, %v4032, 0
        %v4109 = vsel %vm386, %v4033, 0
        %v4112 = vsel %vm386, %v4034, 0
        %v4115 = vsel %vm386, %v4035, 0
        %4117 = vmatprep.subr.bf16.mxu0 0
        %4118 = vmatpush1.bf16.msra.mxu0 %v4061
        %4119 = vmatprep.subr.bf16.mxu0 0
        %4120 = vmatpush1.bf16.msra.mxu0 %v4062
        %4121 = vmatprep.subr.bf16.mxu0 0
        %4122 = vmatpush1.bf16.msra.mxu0 %v4063
        %4123 = vmatprep.subr.bf16.mxu0 0
        %4124 = vmatpush1.bf16.msra.mxu0 %v4064
        %4125 = vmatprep.subr.bf16.mxu0 0
        %4126 = vmatpush1.bf16.msra.mxu0 0
        %4127 = vmatprep.subr.bf16.mxu0 0
        %4128 = vmatpush1.bf16.msra.mxu0 0
        %4129 = vmatprep.subr.bf16.mxu0 0
        %4130 = vmatpush1.bf16.msra.mxu0 0
        %4131 = vmatprep.subr.bf16.mxu0 0
        %4132 = vmatpush1.bf16.msra.mxu0 0
        %4133 = vmatprep.subr.bf16.mxu0 0
        %4134 = vmatpush1.bf16.msra.mxu0 0
        %4135 = vmatprep.subr.bf16.mxu0 0
        %4136 = vmatpush1.bf16.msra.mxu0 0
        %4137 = vmatprep.subr.bf16.mxu0 0
        %4138 = vmatpush1.bf16.msra.mxu0 0
        %4139 = vmatprep.subr.bf16.mxu0 0
        %4140 = vmatpush1.bf16.msra.mxu0 0
        %4141 = vmatprep.subr.bf16.mxu0 0
        %4142 = vmatpush1.bf16.msra.mxu0 0
        %4143 = vmatprep.subr.bf16.mxu0 0
        %4144 = vmatpush1.bf16.msra.mxu0 0
        %4145 = vmatprep.subr.bf16.mxu0 0
        %4146 = vmatpush1.bf16.msra.mxu0 0
        %4147 = vmatprep.subr.bf16.mxu0 0
        %4148 = vmatpush1.bf16.msra.mxu0 0
        %4149 = vmatprep.mubr.bf16.mxu0 0
        %4150 = vmatmul.mubr.bf16.gmra.mrb[0].mxu0 %v4070
        %v4151 = vpop.f32.mrb[0].mxu0
        %v4152 = vadd.f32 0.0, %v4151
        %v4153 = vpop.f32.mrb[0].mxu0
        %v4154 = vpop.f32.mrb[0].mxu0
        %v4155 = vadd.f32 0.0, %v4154
        %v4156 = vpop.f32.mrb[0].mxu0
        %4157 = vmatprep.mubr.bf16.mxu0 0
        %4158 = vmatmul.mubr.bf16.gmra.mrb[0].mxu0 %v4073
        %v4159 = vpop.f32.mrb[0].mxu0
        %v4160 = vadd.f32 0.0, %v4159
        %v4161 = vpop.f32.mrb[0].mxu0
        %v4162 = vpop.f32.mrb[0].mxu0
        %v4163 = vadd.f32 0.0, %v4162
        %v4164 = vpop.f32.mrb[0].mxu0
        %4165 = vmatprep.mubr.bf16.mxu0 0
        %4166 = vmatmul.mubr.bf16.gmra.mrb[0].mxu0 %v4076
        %v4167 = vpop.f32.mrb[0].mxu0
        %v4168 = vadd.f32 0.0, %v4167
        %v4169 = vpop.f32.mrb[0].mxu0
        %v4170 = vpop.f32.mrb[0].mxu0
        %v4171 = vadd.f32 0.0, %v4170
        %v4172 = vpop.f32.mrb[0].mxu0
        %4173 = vmatprep.mubr.bf16.mxu0 0
        %4174 = vmatmul.mubr.bf16.gmra.mrb[0].mxu0 %v4079
        %v4175 = vpop.f32.mrb[0].mxu0
        %v4176 = vadd.f32 0.0, %v4175
        %v4177 = vpop.f32.mrb[0].mxu0
        %v4178 = vpop.f32.mrb[0].mxu0
        %v4179 = vadd.f32 0.0, %v4178
        %v4180 = vpop.f32.mrb[0].mxu0
        %4181 = vmatprep.mubr.bf16.mxu0 0
        %4182 = vmatmul.mubr.bf16.gmra.mrb[0].mxu0 %v4082
        %v4183 = vpop.f32.mrb[0].mxu0
        %v4184 = vadd.f32 0.0, %v4183
        %v4185 = vpop.f32.mrb[0].mxu0
        %v4186 = vpop.f32.mrb[0].mxu0
        %v4187 = vadd.f32 0.0, %v4186
        %v4188 = vpop.f32.mrb[0].mxu0
        %4189 = vmatprep.mubr.bf16.mxu0 0
        %4190 = vmatmul.mubr.bf16.gmra.mrb[0].mxu0 %v4085
        %v4191 = vpop.f32.mrb[0].mxu0
        %v4192 = vadd.f32 0.0, %v4191
        %v4193 = vpop.f32.mrb[0].mxu0
        %v4194 = vpop.f32.mrb[0].mxu0
        %v4195 = vadd.f32 0.0, %v4194
        %v4196 = vpop.f32.mrb[0].mxu0
        %4197 = vmatprep.mubr.bf16.mxu0 0
        %4198 = vmatmul.mubr.bf16.gmra.mrb[0].mxu0 %v4088
        %v4199 = vpop.f32.mrb[0].mxu0
        %v4200 = vadd.f32 0.0, %v4199
        %v4201 = vpop.f32.mrb[0].mxu0
        %v4202 = vpop.f32.mrb[0].mxu0
        %v4203 = vadd.f32 0.0, %v4202
        %v4204 = vpop.f32.mrb[0].mxu0
        %4205 = vmatprep.mubr.bf16.mxu0 0
        %4206 = vmatmul.mubr.bf16.gmra.mrb[0].mxu0 %v4091
        %v4207 = vpop.f32.mrb[0].mxu0
        %v4208 = vadd.f32 0.0, %v4207
        %v4209 = vpop.f32.mrb[0].mxu0
        %v4210 = vpop.f32.mrb[0].mxu0
        %v4211 = vadd.f32 0.0, %v4210
        %v4212 = vpop.f32.mrb[0].mxu0
        %4213 = vmatprep.mubr.bf16.mxu0 0
        %4214 = vmatmul.mubr.bf16.gmra.mrb[0].mxu0 %v4094
        %v4215 = vpop.f32.mrb[0].mxu0
        %v4216 = vadd.f32 0.0, %v4215
        %v4217 = vpop.f32.mrb[0].mxu0
        %v4218 = vpop.f32.mrb[0].mxu0
        %v4219 = vadd.f32 0.0, %v4218
        %v4220 = vpop.f32.mrb[0].mxu0
        %4221 = vmatprep.mubr.bf16.mxu0 0
        %4222 = vmatmul.mubr.bf16.gmra.mrb[0].mxu0 %v4097
        %v4223 = vpop.f32.mrb[0].mxu0
        %v4224 = vadd.f32 0.0, %v4223
        %v4225 = vpop.f32.mrb[0].mxu0
        %v4226 = vpop.f32.mrb[0].mxu0
        %v4227 = vadd.f32 0.0, %v4226
        %v4228 = vpop.f32.mrb[0].mxu0
        %4229 = vmatprep.mubr.bf16.mxu0 0
        %4230 = vmatmul.mubr.bf16.gmra.mrb[0].mxu0 %v4100
        %v4231 = vpop.f32.mrb[0].mxu0
        %v4232 = vadd.f32 0.0, %v4231
        %v4233 = vpop.f32.mrb[0].mxu0
        %v4234 = vpop.f32.mrb[0].mxu0
        %v4235 = vadd.f32 0.0, %v4234
        %v4236 = vpop.f32.mrb[0].mxu0
        %4237 = vmatprep.mubr.bf16.mxu0 0
        %4238 = vmatmul.mubr.bf16.gmra.mrb[0].mxu0 %v4103
        %v4239 = vpop.f32.mrb[0].mxu0
        %v4240 = vadd.f32 0.0, %v4239
        %v4241 = vpop.f32.mrb[0].mxu0
        %v4242 = vpop.f32.mrb[0].mxu0
        %v4243 = vadd.f32 0.0, %v4242
        %v4244 = vpop.f32.mrb[0].mxu0
        %4245 = vmatprep.mubr.bf16.mxu0 0
        %4246 = vmatmul.mubr.bf16.gmra.mrb[0].mxu0 %v4106
        %v4247 = vpop.f32.mrb[0].mxu0
        %v4248 = vadd.f32 0.0, %v4247
        %v4249 = vpop.f32.mrb[0].mxu0
        %v4250 = vpop.f32.mrb[0].mxu0
        %v4251 = vadd.f32 0.0, %v4250
        %v4252 = vpop.f32.mrb[0].mxu0
        %4253 = vmatprep.mubr.bf16.mxu0 0
        %4254 = vmatmul.mubr.bf16.gmra.mrb[0].mxu0 %v4109
        %v4255 = vpop.f32.mrb[0].mxu0
        %v4256 = vadd.f32 0.0, %v4255
        %v4257 = vpop.f32.mrb[0].mxu0
        %v4258 = vpop.f32.mrb[0].mxu0
        %v4259 = vadd.f32 0.0, %v4258
        %v4260 = vpop.f32.mrb[0].mxu0
        %4261 = vmatprep.mubr.bf16.mxu0 0
        %4262 = vmatmul.mubr.bf16.gmra.mrb[0].mxu0 %v4112
        %v4263 = vpop.f32.mrb[0].mxu0
        %v4264 = vadd.f32 0.0, %v4263
        %v4265 = vpop.f32.mrb[0].mxu0
        %v4266 = vpop.f32.mrb[0].mxu0
        %v4267 = vadd.f32 0.0, %v4266
        %v4268 = vpop.f32.mrb[0].mxu0
        %4269 = vmatprep.mubr.bf16.mxu0 0
        %4270 = vmatmul.mubr.bf16.gmra.mrb[0].mxu0 %v4115
        %v4271 = vpop.f32.mrb[0].mxu0
        %v4272 = vadd.f32 0.0, %v4271
        %v4273 = vpop.f32.mrb[0].mxu0
        %v4274 = vpop.f32.mrb[0].mxu0
        %v4275 = vadd.f32 0.0, %v4274
        %v4276 = vpop.f32.mrb[0].mxu0
        %4277 = vdwg.mxu0
        %v4278 = vld [vmem:[%s271] sm:$0xff]
        %v4279 = vld [vmem:[%s271 + $0x8] sm:$0xff]
        %v4280 = vld [vmem:[%s271 + $0x10] sm:$0xff]
        %v4281 = vld [vmem:[%s271 + $0x18] sm:$0xff]
        %v4282 = vld [vmem:[%s271 + $0x20] sm:$0xff]
        %v4283 = vld [vmem:[%s271 + $0x28] sm:$0xff]
        %v4284 = vld [vmem:[%s271 + $0x30] sm:$0xff]
        %v4285 = vld [vmem:[%s271 + $0x38] sm:$0xff]
        %v4286 = vld [vmem:[%s271 + $0x40] sm:$0xff]
        %v4287 = vld [vmem:[%s271 + $0x48] sm:$0xff]
        %v4288 = vld [vmem:[%s271 + $0x50] sm:$0xff]
        %v4289 = vld [vmem:[%s271 + $0x58] sm:$0xff]
        %v4290 = vld [vmem:[%s271 + $0x60] sm:$0xff]
        %v4291 = vld [vmem:[%s271 + $0x68] sm:$0xff]
        %v4292 = vld [vmem:[%s271 + $0x70] sm:$0xff]
        %v4293 = vld [vmem:[%s271 + $0x78] sm:$0xff]
        %v4294 = vld [vmem:[%s271 + $0x80] sm:$0xff]
        %v4295 = vld [vmem:[%s271 + $0x88] sm:$0xff]
        %v4296 = vld [vmem:[%s271 + $0x90] sm:$0xff]
        %v4297 = vld [vmem:[%s271 + $0x98] sm:$0xff]
        %v4298 = vld [vmem:[%s271 + $0xa0] sm:$0xff]
        %v4299 = vld [vmem:[%s271 + $0xa8] sm:$0xff]
        %v4300 = vld [vmem:[%s271 + $0xb0] sm:$0xff]
        %v4301 = vld [vmem:[%s271 + $0xb8] sm:$0xff]
        %v4302 = vld [vmem:[%s271 + $0xc0] sm:$0xff]
        %v4303 = vld [vmem:[%s271 + $0xc8] sm:$0xff]
        %v4304 = vld [vmem:[%s271 + $0xd0] sm:$0xff]
        %v4305 = vld [vmem:[%s271 + $0xd8] sm:$0xff]
        %v4306 = vld [vmem:[%s271 + $0xe0] sm:$0xff]
        %v4307 = vld [vmem:[%s271 + $0xe8] sm:$0xff]
        %v4308 = vld [vmem:[%s271 + $0xf0] sm:$0xff]
        %v4309 = vld [vmem:[%s271 + $0xf8] sm:$0xff]
        %v4310 = vadd.f32 %v4278, %v4152
        %v4311 = vadd.f32 %v4279, %v4155
        %v4312 = vadd.f32 %v4280, %v4160
        %v4313 = vadd.f32 %v4281, %v4163
        %v4314 = vadd.f32 %v4282, %v4168
        %v4315 = vadd.f32 %v4283, %v4171
        %v4316 = vadd.f32 %v4284, %v4176
        %v4317 = vadd.f32 %v4285, %v4179
        %v4318 = vadd.f32 %v4286, %v4184
        %v4319 = vadd.f32 %v4287, %v4187
        %v4320 = vadd.f32 %v4288, %v4192
        %v4321 = vadd.f32 %v4289, %v4195
        %v4322 = vadd.f32 %v4290, %v4200
        %v4323 = vadd.f32 %v4291, %v4203
        %v4324 = vadd.f32 %v4292, %v4208
        %v4325 = vadd.f32 %v4293, %v4211
        %v4326 = vadd.f32 %v4294, %v4216
        %v4327 = vadd.f32 %v4295, %v4219
        %v4328 = vadd.f32 %v4296, %v4224
        %v4329 = vadd.f32 %v4297, %v4227
        %v4330 = vadd.f32 %v4298, %v4232
        %v4331 = vadd.f32 %v4299, %v4235
        %v4332 = vadd.f32 %v4300, %v4240
        %v4333 = vadd.f32 %v4301, %v4243
        %v4334 = vadd.f32 %v4302, %v4248
        %v4335 = vadd.f32 %v4303, %v4251
        %v4336 = vadd.f32 %v4304, %v4256
        %v4337 = vadd.f32 %v4305, %v4259
        %v4338 = vadd.f32 %v4306, %v4264
        %v4339 = vadd.f32 %v4307, %v4267
        %v4340 = vadd.f32 %v4308, %v4272
        %v4341 = vadd.f32 %v4309, %v4275
        %4342 = vst [vmem:[%s271] sm:$0xff] %v4310
        %4343 = vst [vmem:[%s271 + $0x8] sm:$0xff] %v4311
        %4344 = vst [vmem:[%s271 + $0x10] sm:$0xff] %v4312
        %4345 = vst [vmem:[%s271 + $0x18] sm:$0xff] %v4313
        %4346 = vst [vmem:[%s271 + $0x20] sm:$0xff] %v4314
        %4347 = vst [vmem:[%s271 + $0x28] sm:$0xff] %v4315
        %4348 = vst [vmem:[%s271 + $0x30] sm:$0xff] %v4316
        %4349 = vst [vmem:[%s271 + $0x38] sm:$0xff] %v4317
        %4350 = vst [vmem:[%s271 + $0x40] sm:$0xff] %v4318
        %4351 = vst [vmem:[%s271 + $0x48] sm:$0xff] %v4319
        %4352 = vst [vmem:[%s271 + $0x50] sm:$0xff] %v4320
        %4353 = vst [vmem:[%s271 + $0x58] sm:$0xff] %v4321
        %4354 = vst [vmem:[%s271 + $0x60] sm:$0xff] %v4322
        %4355 = vst [vmem:[%s271 + $0x68] sm:$0xff] %v4323
        %4356 = vst [vmem:[%s271 + $0x70] sm:$0xff] %v4324
        %4357 = vst [vmem:[%s271 + $0x78] sm:$0xff] %v4325
        %4358 = vst [vmem:[%s271 + $0x80] sm:$0xff] %v4326
        %4359 = vst [vmem:[%s271 + $0x88] sm:$0xff] %v4327
        %4360 = vst [vmem:[%s271 + $0x90] sm:$0xff] %v4328
        %4361 = vst [vmem:[%s271 + $0x98] sm:$0xff] %v4329
        %4362 = vst [vmem:[%s271 + $0xa0] sm:$0xff] %v4330
        %4363 = vst [vmem:[%s271 + $0xa8] sm:$0xff] %v4331
        %4364 = vst [vmem:[%s271 + $0xb0] sm:$0xff] %v4332
        %4365 = vst [vmem:[%s271 + $0xb8] sm:$0xff] %v4333
        %4366 = vst [vmem:[%s271 + $0xc0] sm:$0xff] %v4334
        %4367 = vst [vmem:[%s271 + $0xc8] sm:$0xff] %v4335
        %4368 = vst [vmem:[%s271 + $0xd0] sm:$0xff] %v4336
        %4369 = vst [vmem:[%s271 + $0xd8] sm:$0xff] %v4337
        %4370 = vst [vmem:[%s271 + $0xe0] sm:$0xff] %v4338
        %4371 = vst [vmem:[%s271 + $0xe8] sm:$0xff] %v4339
        %4372 = vst [vmem:[%s271 + $0xf0] sm:$0xff] %v4340
        %4373 = vst [vmem:[%s271 + $0xf8] sm:$0xff] %v4341
        %v4374 = vld [vmem:[%s271] sm:$0xff]
        %v4375 = vld [vmem:[%s271 + $0x8] sm:$0xff]
        %v4376 = vld [vmem:[%s271 + $0x10] sm:$0xff]
        %v4377 = vld [vmem:[%s271 + $0x18] sm:$0xff]
        %v4378 = vld [vmem:[%s271 + $0x20] sm:$0xff]
        %v4379 = vld [vmem:[%s271 + $0x28] sm:$0xff]
        %v4380 = vld [vmem:[%s271 + $0x30] sm:$0xff]
        %v4381 = vld [vmem:[%s271 + $0x38] sm:$0xff]
        %v4382 = vld [vmem:[%s271 + $0x40] sm:$0xff]
        %v4383 = vld [vmem:[%s271 + $0x48] sm:$0xff]
        %v4384 = vld [vmem:[%s271 + $0x50] sm:$0xff]
        %v4385 = vld [vmem:[%s271 + $0x58] sm:$0xff]
        %v4386 = vld [vmem:[%s271 + $0x60] sm:$0xff]
        %v4387 = vld [vmem:[%s271 + $0x68] sm:$0xff]
        %v4388 = vld [vmem:[%s271 + $0x70] sm:$0xff]
        %v4389 = vld [vmem:[%s271 + $0x78] sm:$0xff]
        %v4390 = vld [vmem:[%s271 + $0x80] sm:$0xff]
        %v4391 = vld [vmem:[%s271 + $0x88] sm:$0xff]
        %v4392 = vld [vmem:[%s271 + $0x90] sm:$0xff]
        %v4393 = vld [vmem:[%s271 + $0x98] sm:$0xff]
        %v4394 = vld [vmem:[%s271 + $0xa0] sm:$0xff]
        %v4395 = vld [vmem:[%s271 + $0xa8] sm:$0xff]
        %v4396 = vld [vmem:[%s271 + $0xb0] sm:$0xff]
        %v4397 = vld [vmem:[%s271 + $0xb8] sm:$0xff]
        %v4398 = vld [vmem:[%s271 + $0xc0] sm:$0xff]
        %v4399 = vld [vmem:[%s271 + $0xc8] sm:$0xff]
        %v4400 = vld [vmem:[%s271 + $0xd0] sm:$0xff]
        %v4401 = vld [vmem:[%s271 + $0xd8] sm:$0xff]
        %v4402 = vld [vmem:[%s271 + $0xe0] sm:$0xff]
        %v4403 = vld [vmem:[%s271 + $0xe8] sm:$0xff]
        %v4404 = vld [vmem:[%s271 + $0xf0] sm:$0xff]
        %v4405 = vld [vmem:[%s271 + $0xf8] sm:$0xff]
        %v4406 = vld [vmem:[%s6] sm:$0x1]
        %v4408 = vlaneseq
        %v4409 = vshrl.u32 %v4408, 7
        %v4410 = vsub.s32 0, %v4409
        %v4411 = vrot.slane %v4406, %v4410
        %v4413 = vadd.f32 %v4374, %v4411
        %v4414 = vadd.f32 %v4375, %v4411
        %v4415 = vadd.f32 %v4376, %v4411
        %v4416 = vadd.f32 %v4377, %v4411
        %v4417 = vadd.f32 %v4378, %v4411
        %v4418 = vadd.f32 %v4379, %v4411
        %v4419 = vadd.f32 %v4380, %v4411
        %v4420 = vadd.f32 %v4381, %v4411
        %v4421 = vadd.f32 %v4382, %v4411
        %v4422 = vadd.f32 %v4383, %v4411
        %v4423 = vadd.f32 %v4384, %v4411
        %v4424 = vadd.f32 %v4385, %v4411
        %v4425 = vadd.f32 %v4386, %v4411
        %v4426 = vadd.f32 %v4387, %v4411
        %v4427 = vadd.f32 %v4388, %v4411
        %v4428 = vadd.f32 %v4389, %v4411
        %v4429 = vadd.f32 %v4390, %v4411
        %v4430 = vadd.f32 %v4391, %v4411
        %v4431 = vadd.f32 %v4392, %v4411
        %v4432 = vadd.f32 %v4393, %v4411
        %v4433 = vadd.f32 %v4394, %v4411
        %v4434 = vadd.f32 %v4395, %v4411
        %v4435 = vadd.f32 %v4396, %v4411
        %v4436 = vadd.f32 %v4397, %v4411
        %v4437 = vadd.f32 %v4398, %v4411
        %v4438 = vadd.f32 %v4399, %v4411
        %v4439 = vadd.f32 %v4400, %v4411
        %v4440 = vadd.f32 %v4401, %v4411
        %v4441 = vadd.f32 %v4402, %v4411
        %v4442 = vadd.f32 %v4403, %v4411
        %v4443 = vadd.f32 %v4404, %v4411
        %v4444 = vadd.f32 %v4405, %v4411
        %v4445 = vmax.f32 %v4413, 0.0
        %v4446 = vmax.f32 %v4414, 0.0
        %v4447 = vmax.f32 %v4415, 0.0
        %v4448 = vmax.f32 %v4416, 0.0
        %v4449 = vmax.f32 %v4417, 0.0
        %v4450 = vmax.f32 %v4418, 0.0
        %v4451 = vmax.f32 %v4419, 0.0
        %v4452 = vmax.f32 %v4420, 0.0
        %v4453 = vmax.f32 %v4421, 0.0
        %v4454 = vmax.f32 %v4422, 0.0
        %v4455 = vmax.f32 %v4423, 0.0
        %v4456 = vmax.f32 %v4424, 0.0
        %v4457 = vmax.f32 %v4425, 0.0
        %v4458 = vmax.f32 %v4426, 0.0
        %v4459 = vmax.f32 %v4427, 0.0
        %v4460 = vmax.f32 %v4428, 0.0
        %v4461 = vmax.f32 %v4429, 0.0
        %v4462 = vmax.f32 %v4430, 0.0
        %v4463 = vmax.f32 %v4431, 0.0
        %v4464 = vmax.f32 %v4432, 0.0
        %v4465 = vmax.f32 %v4433, 0.0
        %v4466 = vmax.f32 %v4434, 0.0
        %v4467 = vmax.f32 %v4435, 0.0
        %v4468 = vmax.f32 %v4436, 0.0
        %v4469 = vmax.f32 %v4437, 0.0
        %v4470 = vmax.f32 %v4438, 0.0
        %v4471 = vmax.f32 %v4439, 0.0
        %v4472 = vmax.f32 %v4440, 0.0
        %v4473 = vmax.f32 %v4441, 0.0
        %v4474 = vmax.f32 %v4442, 0.0
        %v4475 = vmax.f32 %v4443, 0.0
        %v4476 = vmax.f32 %v4444, 0.0
        %4477 = vst [vmem:[%s271] sm:$0xff] %v4445
        %4478 = vst [vmem:[%s271 + $0x8] sm:$0xff] %v4446
        %4479 = vst [vmem:[%s271 + $0x10] sm:$0xff] %v4447
        %4480 = vst [vmem:[%s271 + $0x18] sm:$0xff] %v4448
        %4481 = vst [vmem:[%s271 + $0x20] sm:$0xff] %v4449
        %4482 = vst [vmem:[%s271 + $0x28] sm:$0xff] %v4450
        %4483 = vst [vmem:[%s271 + $0x30] sm:$0xff] %v4451
        %4484 = vst [vmem:[%s271 + $0x38] sm:$0xff] %v4452
        %4485 = vst [vmem:[%s271 + $0x40] sm:$0xff] %v4453
        %4486 = vst [vmem:[%s271 + $0x48] sm:$0xff] %v4454
        %4487 = vst [vmem:[%s271 + $0x50] sm:$0xff] %v4455
        %4488 = vst [vmem:[%s271 + $0x58] sm:$0xff] %v4456
        %4489 = vst [vmem:[%s271 + $0x60] sm:$0xff] %v4457
        %4490 = vst [vmem:[%s271 + $0x68] sm:$0xff] %v4458
        %4491 = vst [vmem:[%s271 + $0x70] sm:$0xff] %v4459
        %4492 = vst [vmem:[%s271 + $0x78] sm:$0xff] %v4460
        %4493 = vst [vmem:[%s271 + $0x80] sm:$0xff] %v4461
        %4494 = vst [vmem:[%s271 + $0x88] sm:$0xff] %v4462
        %4495 = vst [vmem:[%s271 + $0x90] sm:$0xff] %v4463
        %4496 = vst [vmem:[%s271 + $0x98] sm:$0xff] %v4464
        %4497 = vst [vmem:[%s271 + $0xa0] sm:$0xff] %v4465
        %4498 = vst [vmem:[%s271 + $0xa8] sm:$0xff] %v4466
        %4499 = vst [vmem:[%s271 + $0xb0] sm:$0xff] %v4467
        %4500 = vst [vmem:[%s271 + $0xb8] sm:$0xff] %v4468
        %4501 = vst [vmem:[%s271 + $0xc0] sm:$0xff] %v4469
        %4502 = vst [vmem:[%s271 + $0xc8] sm:$0xff] %v4470
        %4503 = vst [vmem:[%s271 + $0xd0] sm:$0xff] %v4471
        %4504 = vst [vmem:[%s271 + $0xd8] sm:$0xff] %v4472
        %4505 = vst [vmem:[%s271 + $0xe0] sm:$0xff] %v4473
        %4506 = vst [vmem:[%s271 + $0xe8] sm:$0xff] %v4474
        %4507 = vst [vmem:[%s271 + $0xf0] sm:$0xff] %v4475
        %4508 = vst [vmem:[%s271 + $0xf8] sm:$0xff] %v4476
        %s4509 = sand.u32 %s181, 1
        %s4510 = scalar_lea.sflag [#allocation4], %s4509
        %s4511 = sand.u32 %s181, 1
        %s4512 = smul.addr %s4511, 256
        %s4513 = scalar_lea.vmem [#allocation3], %s4512
        // Predicated region
        $region49: #{macblock_forward.1} parent=47 // pred_check
          %p4514 = pneg %p191
        $region50: #{macblock_forward.1} parent=47 // pred_check_branch
          %4516 = sbr.rel (%p4514) target = $region52
        $region51: #{macblock_forward.1} parent=47 // pred_region
          %s4518 = ssub.s32 4096, 4096
          %4519 = vsyncadd %s4510, %s4518
          %s4520 = smul.addr %s21, 32
          %s4521 = smul.addr %s4520, 128
          %s4522 = scalar_lea.hbm %s7, %s4521
          %s4523 = sshll.u32 %s4513, 4
          %s4524 = int_to_ptr.vmem [resolvable:$true] %s4523
          %4529 = dma.vmem_to_hbm [thread:$0]  %s4524, 4096, %s4522, %s4510, 128, 128, 8
        $region52: #{macblock_forward.1} parent=47 // pred_fallthru
          _
      $region48: #{macblock_forward.1} parent=5 // pred_fallthru
        _
      %p4530 = scmp.le.s32.totalorder 2, %s16
      // Predicated region
      $region53: #{macblock_forward.1} parent=5 // pred_check
        %p4531 = pneg %p4530
      $region54: #{macblock_forward.1} parent=5 // pred_check_branch
        %4533 = sbr.rel (%p4531) target = $region56
      $region55: #{macblock_forward.1} parent=5 // pred_region
        %s4534 = ssub.s32 %s16, 2
        // Predicated region
        $region57: #{macblock_forward.1} parent=55 // pred_check
          %p4535 = pneg %p197
        $region58: #{macblock_forward.1} parent=55 // pred_check_branch
          %4537 = sbr.rel (%p4535) target = $region60
        $region59: #{macblock_forward.1} parent=55 // pred_region
          %s4538 = sand.u32 %s182, 1
          %s4539 = scalar_lea.sflag [#allocation4], %s4538
          %s4540 = sand.u32 %s182, 1
          %s4541 = smul.addr %s4540, 256
          %s4542 = scalar_lea.vmem [#allocation3], %s4541
          %4543 = dma.done %s4539, 4096
        $region60: #{macblock_forward.1} parent=55 // pred_fallthru
          _
      $region56: #{macblock_forward.1} parent=5 // pred_fallthru
        _
    $region6: #{macblock_forward.1} parent=1 // loop_footer
      %s20 = sadd.s32 1, %s16
    $region7: #{macblock_forward.1} parent=1 // loop_footer_branch
      %15 = sbr.rel target = $region3
    $region8: #{macblock_forward.1} parent=1 // loop_exit
      _
    %4544 = vsyncpa [#allocation4], 1
    %s4545 = scalar_lea.sflag [#allocation4], 1
    %4546 = vsyncpa %s4545, 1

</llo_original>
